<compile_context>
chip_gen: v5e
topology: v5e:2x2
jax: 0.10.0
libtpu: 0.0.40
codegen_flags: <defaults>
</compile_context>

<pallas_src>
import functools

import jax
import jax.numpy as jnp
from jax.experimental import pallas as pl
from jax.experimental.pallas import tpu as pltpu

VMEM_SPEC = pl.BlockSpec(memory_space=pltpu.MemorySpace.VMEM)


# ----------------------------------------------------------------------------
# Pallas kernels
# ----------------------------------------------------------------------------
def _conv_mm_kernel(wt_ref, pt_ref, b_ref, o_ref):
    """Lane-dense conv-as-matmul: o = relu(wt @ pt + b).

    wt: (Cout, K) bf16, pt: (K, M) bf16, b: (Cout, 1) f32, o: (Cout, M) f32.
    M = B*Ho*Wo >= 128, so the output store is lane-dense (unmasked vst).
    """
    y = jnp.dot(wt_ref[...], pt_ref[...], preferred_element_type=jnp.float32)
    y = y + b_ref[...]
    o_ref[...] = jnp.maximum(y, 0.0)


def conv_mm_pallas(w_t, patches_t, bias_col):
    cout = w_t.shape[0]
    m = patches_t.shape[1]
    return pl.pallas_call(
        _conv_mm_kernel,
        out_shape=jax.ShapeDtypeStruct((cout, m), jnp.float32),
        in_specs=[VMEM_SPEC, VMEM_SPEC, VMEM_SPEC],
        out_specs=VMEM_SPEC,
    )(w_t, patches_t, bias_col)


def _tail_kernel(h2_ref, fcw_ref, fcb_ref, hw_ref, hb_ref, dw_ref, db_ref,
                 eps_ref, xrec_ref, stats_ref, *, hidden):
    """Fused fc -> packed gaussian heads -> reparameterize -> decoder.

    All intermediates (feat, heads, z1, z2, z3) stay in VMEM / vregs.
    Head weights are packed as [mu_s | log_sigma_s | mu_d | log_sigma_d]
    -> one (hidden, 4*hidden) MXU push instead of 4 separate dots.
    """
    h = hidden
    # fc (no activation after fc in CNN_encoder_simple)
    feat = jnp.dot(h2_ref[...], fcw_ref[...],
                   preferred_element_type=jnp.float32) + fcb_ref[...]
    # packed heads: (B, 4*hidden)
    heads = jnp.dot(feat.astype(jnp.bfloat16), hw_ref[...],
                    preferred_element_type=jnp.float32) + hb_ref[...]
    mu_s = heads[:, 0 * h:1 * h]
    sigma_s = jnp.exp(heads[:, 1 * h:2 * h])
    mu_d = heads[:, 2 * h:3 * h]
    sigma_d = jnp.exp(heads[:, 3 * h:4 * h])

    eps = eps_ref[...]
    z1 = mu_s + eps[:, 0:h] * sigma_s
    z2 = mu_d + eps[:, h:2 * h] * sigma_d
    z3 = jnp.concatenate([z1, z2], axis=1)                      # (B, 2*hidden)

    xrec = jnp.dot(z3.astype(jnp.bfloat16), dw_ref[...],
                   preferred_element_type=jnp.float32) + db_ref[...]
    xrec_ref[...] = xrec
    # lane-dense packed stats output: [mu_s | sigma_s | mu_d | sigma_d]
    stats_ref[...] = jnp.concatenate([mu_s, sigma_s, mu_d, sigma_d], axis=1)


def _nbytes(*arrs):
    return sum(int(a.size) * a.dtype.itemsize for a in arrs)


def tail_pallas(h2_bf16, kp, eps, hidden):
    b = h2_bf16.shape[0]
    k_fc = kp["fc_w"].shape[0]
    n_dec = kp["dec_w"].shape[1]
    inputs = (h2_bf16, kp["fc_w"], kp["fc_b"], kp["heads_w"], kp["heads_b"],
              kp["dec_w"], kp["dec_b"], eps)
    cost = pl.CostEstimate(
        flops=2 * b * (k_fc * hidden + hidden * 4 * hidden + 2 * hidden * n_dec),
        transcendentals=b * 2 * hidden,
        bytes_accessed=_nbytes(*inputs) + 4 * b * (n_dec + 4 * hidden),
    )
    out_shape = (jax.ShapeDtypeStruct((b, n_dec), jnp.float32),
                 jax.ShapeDtypeStruct((b, 4 * hidden), jnp.float32))
    return pl.pallas_call(
        functools.partial(_tail_kernel, hidden=hidden),
        out_shape=out_shape,
        in_specs=[VMEM_SPEC] * 8,
        out_specs=(VMEM_SPEC, VMEM_SPEC),
        cost_estimate=cost,
    )(*inputs)


# ----------------------------------------------------------------------------
# JAX glue: nearest interpolation, im2col
# ----------------------------------------------------------------------------
def nearest_resize_nchw(x, out_h, out_w):
    """F.interpolate(..., mode='nearest') semantics on NCHW."""
    b, c, h, w = x.shape
    if out_h % h == 0 and out_w % w == 0:
        # exact integer upscale -> broadcast/reshape repeat (no gather)
        fh, fw = out_h // h, out_w // w
        xr = jnp.broadcast_to(x[:, :, :, None, :, None], (b, c, h, fh, w, fw))
        return xr.reshape(b, c, out_h, out_w)
    rows = (jnp.arange(out_h) * h // out_h).astype(jnp.int32)
    cols = (jnp.arange(out_w) * w // out_w).astype(jnp.int32)
    return x[:, :, rows[:, None], cols[None, :]]


def _im2col_s2(x_nhwc, k=3, stride=2, pad=1):
    b, h, w, c = x_nhwc.shape
    xp = jnp.pad(x_nhwc, ((0, 0), (pad, pad), (pad, pad), (0, 0)))
    ho = (h + 2 * pad - k) // stride + 1
    wo = (w + 2 * pad - k) // stride + 1
    cols = []
    for kh in range(k):
        for kw in range(k):
            cols.append(xp[:, kh:kh + stride * ho:stride,
                           kw:kw + stride * wo:stride, :])
    patches = jnp.stack(cols, axis=3)                 # (B, Ho, Wo, k*k, C)
    return patches.reshape(b * ho * wo, k * k * c), ho, wo


# ----------------------------------------------------------------------------
# Parameters (deterministic, synthetic) + kernel-ready repacking
# ----------------------------------------------------------------------------
def init_params(key, hidden=128):
    def u(k, shape, fan_in):
        bound = 1.0 / (fan_in ** 0.5)
        return jax.random.uniform(k, shape, jnp.float32, -bound, bound)

    ks = jax.random.split(key, 16)
    p = {}
    # CNN_encoder_simple
    p["conv1_w"] = u(ks[0], (16, 3, 3, 3), 3 * 9)          # (Cout, Cin, kh, kw)
    p["conv1_b"] = u(ks[1], (16,), 3 * 9)
    p["conv2_w"] = u(ks[2], (32, 16, 3, 3), 16 * 9)
    p["conv2_b"] = u(ks[3], (32,), 16 * 9)
    p["fc_w"] = u(ks[4], (32 * 8 * 8, hidden), 32 * 8 * 8)  # stored as (K, N)
    p["fc_b"] = u(ks[5], (1, hidden), 32 * 8 * 8)
    # VAE heads
    p["mu_s_w"] = u(ks[6], (hidden, hidden), hidden)
    p["mu_s_b"] = u(ks[7], (1, hidden), hidden)
    p["ls_s_w"] = u(ks[8], (hidden, hidden), hidden)
    p["ls_s_b"] = u(ks[9], (1, hidden), hidden)
    p["mu_d_w"] = u(ks[10], (hidden, hidden), hidden)
    p["mu_d_b"] = u(ks[11], (1, hidden), hidden)
    p["ls_d_w"] = u(ks[12], (hidden, hidden), hidden)
    p["ls_d_b"] = u(ks[13], (1, hidden), hidden)
    p["dec_w"] = u(ks[14], (2 * hidden, 32 * 32 * 3), 2 * hidden)
    p["dec_b"] = u(ks[15], (1, 32 * 32 * 3), 2 * hidden)
    return p


def prepare_kernel_params(p):
    """Repack torch-layout params into kernel-ready (bf16 matmul operands)."""
    kp = {}
    # conv weights: (Cout, Cin, kh, kw) -> (Cout, kh, kw, Cin) -> (Cout, 9*Cin)
    kp["conv1_wt"] = jnp.transpose(p["conv1_w"], (0, 2, 3, 1)).reshape(
        16, 9 * 3).astype(jnp.bfloat16)
    kp["conv1_b"] = p["conv1_b"].reshape(16, 1)
    kp["conv2_wt"] = jnp.transpose(p["conv2_w"], (0, 2, 3, 1)).reshape(
        32, 9 * 16).astype(jnp.bfloat16)
    kp["conv2_b"] = p["conv2_b"].reshape(32, 1)
    # fc
    kp["fc_w"] = p["fc_w"].astype(jnp.bfloat16)
    kp["fc_b"] = p["fc_b"]
    # packed gaussian heads: [mu_s | log_sigma_s | mu_d | log_sigma_d]
    kp["heads_w"] = jnp.concatenate(
        [p["mu_s_w"], p["ls_s_w"], p["mu_d_w"], p["ls_d_w"]],
        axis=1).astype(jnp.bfloat16)
    kp["heads_b"] = jnp.concatenate(
        [p["mu_s_b"], p["ls_s_b"], p["mu_d_b"], p["ls_d_b"]], axis=1)
    # decoder
    kp["dec_w"] = p["dec_w"].astype(jnp.bfloat16)
    kp["dec_b"] = p["dec_b"]
    return kp


# ----------------------------------------------------------------------------
# Forward pass (matches VAE.forward with name='myvae')
# ----------------------------------------------------------------------------
def vae_forward(kp, x_nchw, rng_key, hidden=128):
    b = x_nchw.shape[0]

    # F.interpolate(x, size=(32, 32)) -- nearest (exact 2x repeat here)
    x32 = nearest_resize_nchw(x_nchw, 32, 32)                 # (B, 3, 32, 32)
    x_flat = x32.reshape(b, -1)                               # torch NCHW flatten

    # conv1: im2col (XLA glue) + lane-dense Pallas matmul
    x_nhwc = jnp.transpose(x32, (0, 2, 3, 1))                 # (B, 32, 32, 3)
    p1, ho1, wo1 = _im2col_s2(x_nhwc)                         # (B*16*16, 27)
    h1_t = conv_mm_pallas(kp["conv1_wt"],
                          p1.T.astype(jnp.bfloat16),
                          kp["conv1_b"])                      # (16, B*16*16)

    # conv2
    h1_nhwc = jnp.transpose(h1_t.reshape(16, b, ho1, wo1), (1, 2, 3, 0))
    p2, ho2, wo2 = _im2col_s2(h1_nhwc)                        # (B*8*8, 144)
    h2_t = conv_mm_pallas(kp["conv2_wt"],
                          p2.T.astype(jnp.bfloat16),
                          kp["conv2_b"])                      # (32, B*8*8)

    # torch .view(-1, 32*8*8) on NCHW activations
    h2_flat = jnp.transpose(h2_t.reshape(32, b, ho2, wo2),
                            (1, 0, 2, 3)).reshape(b, 32 * ho2 * wo2)

    # eps ~ N(0, 1) (torch.randn_like equivalents)
    k1, k2 = jax.random.split(rng_key)
    eps = jnp.concatenate([jax.random.normal(k1, (b, hidden), jnp.float32),
                           jax.random.normal(k2, (b, hidden), jnp.float32)],
                          axis=1)

    # fused fc -> packed heads -> reparameterize -> decoder (1 pallas_call)
    x_rec, stats = tail_pallas(h2_flat.astype(jnp.bfloat16), kp, eps, hidden)

    mu_s = stats[:, 0 * hidden:1 * hidden]
    sigma_s = stats[:, 1 * hidden:2 * hidden]
    mu_d = stats[:, 2 * hidden:3 * hidden]
    sigma_d = stats[:, 3 * hidden:4 * hidden]
    return x_flat, x_rec, mu_s, sigma_s, mu_d, sigma_d


if __name__ == "__main__":
    hidden = 128
    key = jax.random.PRNGKey(0)
    pkey, xkey, nkey = jax.random.split(key, 3)

    params = init_params(pkey, hidden=hidden)
    kparams = prepare_kernel_params(params)
    x = jax.random.normal(xkey, (2, 3, 16, 16), jnp.float32)   # NCHW

    fwd = jax.jit(functools.partial(vae_forward, hidden=hidden))
    outs = fwd(kparams, x, nkey)
    jax.block_until_ready(outs)

    x_flat, x_rec, mu_s, sigma_s, mu_d, sigma_d = outs
    assert x_flat.shape == (2, 32 * 32 * 3)
    assert x_rec.shape == (2, 32 * 32 * 3)
    assert mu_s.shape == (2, hidden) and sigma_s.shape == (2, hidden)
    assert mu_d.shape == (2, hidden) and sigma_d.shape == (2, hidden)
    assert bool(jnp.all(sigma_s > 0)) and bool(jnp.all(sigma_d > 0))
    assert bool(jnp.all(jnp.isfinite(x_rec)))

    print("KERNEL_OK")
</pallas_src>

<mosaic_0001>
module attributes {stable_mosaic.version = 11 : i64} {
  func.func @_conv_mm_kernel(%arg0: memref<16x27xbf16, #tpu.memory_space<vmem>>, %arg1: memref<27x512xbf16, #tpu.memory_space<vmem>>, %arg2: memref<16x1xf32, #tpu.memory_space<vmem>>, %arg3: memref<16x512xf32, #tpu.memory_space<vmem>>) attributes {dimension_semantics = [], scalar_prefetch = 0 : i64, scratch_operands = 0 : i64, tpu.core_type = #tpu.core_type<tc>} {
    %c0 = arith.constant 0 : index
    %c0_0 = arith.constant 0 : index
    %0 = vector.load %arg0[%c0, %c0_0] : memref<16x27xbf16, #tpu.memory_space<vmem>>, vector<16x27xbf16>
    %c0_1 = arith.constant 0 : index
    %c0_2 = arith.constant 0 : index
    %1 = vector.load %arg1[%c0_1, %c0_2] : memref<27x512xbf16, #tpu.memory_space<vmem>>, vector<27x512xbf16>
    %cst = arith.constant dense<0.000000e+00> : vector<16x512xf32>
    %2 = tpu.matmul %0, %1, %cst {dimension_numbers = #tpu.dot_dimension_numbers<[1], [0], [0], [1], [0, 0, 1, 1], [], []>} : vector<16x27xbf16>, vector<27x512xbf16>, vector<16x512xf32> -> vector<16x512xf32>
    %c0_3 = arith.constant 0 : index
    %c0_4 = arith.constant 0 : index
    %3 = vector.load %arg2[%c0_3, %c0_4] : memref<16x1xf32, #tpu.memory_space<vmem>>, vector<16x1xf32>
    %4 = vector.broadcast %3 : vector<16x1xf32> to vector<16x512xf32>
    %5 = arith.addf %2, %4 : vector<16x512xf32>
    %cst_5 = arith.constant 0.000000e+00 : f32
    %6 = vector.broadcast %cst_5 : f32 to vector<16x512xf32>
    %7 = arith.maximumf %5, %6 : vector<16x512xf32>
    %c0_6 = arith.constant 0 : index
    %c0_7 = arith.constant 0 : index
    %8 = vector.load %arg3[%c0_6, %c0_7] : memref<16x512xf32, #tpu.memory_space<vmem>>, vector<16x512xf32>
    tpu.vector_store %arg3[%c0_6, %c0_7], %7 {strides = array<i32>} : memref<16x512xf32, #tpu.memory_space<vmem>>, vector<16x512xf32>,
    return
  }
}

module attributes {stable_mosaic.version = 11 : i64} {
  func.func @_conv_mm_kernel(%arg0: memref<32x144xbf16, #tpu.memory_space<vmem>>, %arg1: memref<144x128xbf16, #tpu.memory_space<vmem>>, %arg2: memref<32x1xf32, #tpu.memory_space<vmem>>, %arg3: memref<32x128xf32, #tpu.memory_space<vmem>>) attributes {dimension_semantics = [], scalar_prefetch = 0 : i64, scratch_operands = 0 : i64, tpu.core_type = #tpu.core_type<tc>} {
    %c0 = arith.constant 0 : index
    %c0_0 = arith.constant 0 : index
    %0 = vector.load %arg0[%c0, %c0_0] : memref<32x144xbf16, #tpu.memory_space<vmem>>, vector<32x144xbf16>
    %c0_1 = arith.constant 0 : index
    %c0_2 = arith.constant 0 : index
    %1 = vector.load %arg1[%c0_1, %c0_2] : memref<144x128xbf16, #tpu.memory_space<vmem>>, vector<144x128xbf16>
    %cst = arith.constant dense<0.000000e+00> : vector<32x128xf32>
    %2 = tpu.matmul %0, %1, %cst {dimension_numbers = #tpu.dot_dimension_numbers<[1], [0], [0], [1], [0, 0, 1, 1], [], []>} : vector<32x144xbf16>, vector<144x128xbf16>, vector<32x128xf32> -> vector<32x128xf32>
    %c0_3 = arith.constant 0 : index
    %c0_4 = arith.constant 0 : index
    %3 = vector.load %arg2[%c0_3, %c0_4] : memref<32x1xf32, #tpu.memory_space<vmem>>, vector<32x1xf32>
    %4 = vector.broadcast %3 : vector<32x1xf32> to vector<32x128xf32>
    %5 = arith.addf %2, %4 : vector<32x128xf32>
    %cst_5 = arith.constant 0.000000e+00 : f32
    %6 = vector.broadcast %cst_5 : f32 to vector<32x128xf32>
    %7 = arith.maximumf %5, %6 : vector<32x128xf32>
    %c0_6 = arith.constant 0 : index
    %c0_7 = arith.constant 0 : index
    %8 = vector.load %arg3[%c0_6, %c0_7] : memref<32x128xf32, #tpu.memory_space<vmem>>, vector<32x128xf32>
    tpu.vector_store %arg3[%c0_6, %c0_7], %7 {strides = array<i32>} : memref<32x128xf32, #tpu.memory_space<vmem>>, vector<32x128xf32>,
    return
  }
}

module attributes {stable_mosaic.version = 11 : i64} {
  func.func @_tail_kernel(%arg0: memref<2x2048xbf16, #tpu.memory_space<vmem>>, %arg1: memref<2048x128xbf16, #tpu.memory_space<vmem>>, %arg2: memref<1x128xf32, #tpu.memory_space<vmem>>, %arg3: memref<128x512xbf16, #tpu.memory_space<vmem>>, %arg4: memref<1x512xf32, #tpu.memory_space<vmem>>, %arg5: memref<256x3072xbf16, #tpu.memory_space<vmem>>, %arg6: memref<1x3072xf32, #tpu.memory_space<vmem>>, %arg7: memref<2x256xf32, #tpu.memory_space<vmem>>, %arg8: memref<2x3072xf32, #tpu.memory_space<vmem>>, %arg9: memref<2x512xf32, #tpu.memory_space<vmem>>) attributes {dimension_semantics = [], scalar_prefetch = 0 : i64, scratch_operands = 0 : i64, tpu.core_type = #tpu.core_type<tc>} {
    %c0 = arith.constant 0 : index
    %c0_0 = arith.constant 0 : index
    %0 = vector.load %arg0[%c0, %c0_0] : memref<2x2048xbf16, #tpu.memory_space<vmem>>, vector<2x2048xbf16>
    %c0_1 = arith.constant 0 : index
    %c0_2 = arith.constant 0 : index
    %1 = vector.load %arg1[%c0_1, %c0_2] : memref<2048x128xbf16, #tpu.memory_space<vmem>>, vector<2048x128xbf16>
    %cst = arith.constant dense<0.000000e+00> : vector<2x128xf32>
    %2 = tpu.matmul %0, %1, %cst {dimension_numbers = #tpu.dot_dimension_numbers<[1], [0], [0], [1], [0, 0, 1, 1], [], []>} : vector<2x2048xbf16>, vector<2048x128xbf16>, vector<2x128xf32> -> vector<2x128xf32>
    %c0_3 = arith.constant 0 : index
    %c0_4 = arith.constant 0 : index
    %3 = vector.load %arg2[%c0_3, %c0_4] : memref<1x128xf32, #tpu.memory_space<vmem>>, vector<1x128xf32>
    %4 = vector.broadcast %3 : vector<1x128xf32> to vector<2x128xf32>
    %5 = arith.addf %2, %4 : vector<2x128xf32>
    %6 = arith.truncf %5 : vector<2x128xf32> to vector<2x128xbf16>
    %c0_5 = arith.constant 0 : index
    %c0_6 = arith.constant 0 : index
    %7 = vector.load %arg3[%c0_5, %c0_6] : memref<128x512xbf16, #tpu.memory_space<vmem>>, vector<128x512xbf16>
    %cst_7 = arith.constant dense<0.000000e+00> : vector<2x512xf32>
    %8 = tpu.matmul %6, %7, %cst_7 {dimension_numbers = #tpu.dot_dimension_numbers<[1], [0], [0], [1], [0, 0, 1, 1], [], []>} : vector<2x128xbf16>, vector<128x512xbf16>, vector<2x512xf32> -> vector<2x512xf32>
    %c0_8 = arith.constant 0 : index
    %c0_9 = arith.constant 0 : index
    %9 = vector.load %arg4[%c0_8, %c0_9] : memref<1x512xf32, #tpu.memory_space<vmem>>, vector<1x512xf32>
    %10 = vector.broadcast %9 : vector<1x512xf32> to vector<2x512xf32>
    %11 = arith.addf %8, %10 : vector<2x512xf32>
    %12 = vector.extract_strided_slice %11 {offsets = [0, 0], sizes = [2, 128], strides = [1, 1]} : vector<2x512xf32> to vector<2x128xf32>
    %13 = vector.extract_strided_slice %11 {offsets = [0, 128], sizes = [2, 128], strides = [1, 1]} : vector<2x512xf32> to vector<2x128xf32>
    %14 = math.exp %13 : vector<2x128xf32>
    %15 = vector.extract_strided_slice %11 {offsets = [0, 256], sizes = [2, 128], strides = [1, 1]} : vector<2x512xf32> to vector<2x128xf32>
    %16 = vector.extract_strided_slice %11 {offsets = [0, 384], sizes = [2, 128], strides = [1, 1]} : vector<2x512xf32> to vector<2x128xf32>
    %17 = math.exp %16 : vector<2x128xf32>
    %c0_10 = arith.constant 0 : index
    %c0_11 = arith.constant 0 : index
    %18 = vector.load %arg7[%c0_10, %c0_11] : memref<2x256xf32, #tpu.memory_space<vmem>>, vector<2x256xf32>
    %19 = vector.extract_strided_slice %18 {offsets = [0, 0], sizes = [2, 128], strides = [1, 1]} : vector<2x256xf32> to vector<2x128xf32>
    %20 = arith.mulf %19, %14 : vector<2x128xf32>
    %21 = arith.addf %12, %20 : vector<2x128xf32>
    %22 = vector.extract_strided_slice %18 {offsets = [0, 128], sizes = [2, 128], strides = [1, 1]} : vector<2x256xf32> to vector<2x128xf32>
    %23 = arith.mulf %22, %17 : vector<2x128xf32>
    %24 = arith.addf %15, %23 : vector<2x128xf32>
    %25 = tpu.concatenate %21, %24 in 1 : vector<2x128xf32>, vector<2x128xf32> -> vector<2x256xf32>
    %26 = arith.truncf %25 : vector<2x256xf32> to vector<2x256xbf16>
    %c0_12 = arith.constant 0 : index
    %c0_13 = arith.constant 0 : index
    %27 = vector.load %arg5[%c0_12, %c0_13] : memref<256x3072xbf16, #tpu.memory_space<vmem>>, vector<256x3072xbf16>
    %cst_14 = arith.constant dense<0.000000e+00> : vector<2x3072xf32>
    %28 = tpu.matmul %26, %27, %cst_14 {dimension_numbers = #tpu.dot_dimension_numbers<[1], [0], [0], [1], [0, 0, 1, 1], [], []>} : vector<2x256xbf16>, vector<256x3072xbf16>, vector<2x3072xf32> -> vector<2x3072xf32>
    %c0_15 = arith.constant 0 : index
    %c0_16 = arith.constant 0 : index
    %29 = vector.load %arg6[%c0_15, %c0_16] : memref<1x3072xf32, #tpu.memory_space<vmem>>, vector<1x3072xf32>
    %30 = vector.broadcast %29 : vector<1x3072xf32> to vector<2x3072xf32>
    %31 = arith.addf %28, %30 : vector<2x3072xf32>
    %c0_17 = arith.constant 0 : index
    %c0_18 = arith.constant 0 : index
    %32 = vector.load %arg8[%c0_17, %c0_18] : memref<2x3072xf32, #tpu.memory_space<vmem>>, vector<2x3072xf32>
    tpu.vector_store %arg8[%c0_17, %c0_18], %31 {strides = array<i32>} : memref<2x3072xf32, #tpu.memory_space<vmem>>, vector<2x3072xf32>,
    %33 = tpu.concatenate %12, %14, %15, %17 in 1 : vector<2x128xf32>, vector<2x128xf32>, vector<2x128xf32>, vector<2x128xf32> -> vector<2x512xf32>
    %c0_19 = arith.constant 0 : index
    %c0_20 = arith.constant 0 : index
    %34 = vector.load %arg9[%c0_19, %c0_20] : memref<2x512xf32, #tpu.memory_space<vmem>>, vector<2x512xf32>
    tpu.vector_store %arg9[%c0_19, %c0_20], %33 {strides = array<i32>} : memref<2x512xf32, #tpu.memory_space<vmem>>, vector<2x512xf32>,
    return
  }
}

</mosaic_0001>

<llo_original>
// kernel: vae_forward.5
$region0: #{vae_forward.5}
  #allocation0 [shape = 'u32[]', space=smem, size = 0x4, offset = 0x4, fixed_abs, tag = 'smem constant byte address 0x4 - core index']
  #allocation1 [shape = 'u32[72,128]{1,0:T(1,128)}', space=vmem, size = 0x9000, scoped, tag = 'internal scratch']
  %s0 = inlined_call_operand.vmem [shape: bf16[16,27], index: 0, kind: input, shape index: {}]
  %s1 = inlined_call_operand.vmem [shape: bf16[27,512], index: 1, kind: input, shape index: {}]
  %s2 = inlined_call_operand.vmem [shape: f32[16,1], index: 2, kind: input, shape index: {}]
  %s3 = inlined_call_operand.vmem [shape: f32[16,512], index: 3, kind: output, shape index: {}]
  %s4 = sld [smem:[#allocation0]]
  $region22: #{vae_forward.5} parent=0
    _
  %s6 = ssub.s32 1, %s4
  %s7 = scalar_select 0, %s6, %s4
  // Predicated region
  $region2: #{vae_forward.5} parent=0 // pred_check
    _
  $region3: #{vae_forward.5} parent=0 // pred_check_branch
    %9 = sbr.rel (0) target = $region5
  $region4: #{vae_forward.5} parent=0 // pred_region
    _
  $region5: #{vae_forward.5} parent=0 // pred_fallthru
    _
  // Predicated region
  $region6: #{vae_forward.5} parent=0 // pred_check
    _
  $region7: #{vae_forward.5} parent=0 // pred_check_branch
    %11 = sbr.rel (0) target = $region9
  $region8: #{vae_forward.5} parent=0 // pred_region
    _
  $region9: #{vae_forward.5} parent=0 // pred_fallthru
    _
  // Predicated region
  $region10: #{vae_forward.5} parent=0 // pred_check
    _
  $region11: #{vae_forward.5} parent=0 // pred_check_branch
    %13 = sbr.rel (0) target = $region13
  $region12: #{vae_forward.5} parent=0 // pred_region
    _
  $region13: #{vae_forward.5} parent=0 // pred_fallthru
    _
  %v15 = vld [vmem:[%s0] sm:$0xf]
  %v16 = vld [vmem:[%s0 + $0x4] sm:$0xf]
  %v17 = vld [vmem:[%s1] sm:$0xff]
  %v18 = vld [vmem:[%s1 + $0x8] sm:$0xff]
  %v19 = vld [vmem:[%s1 + $0x10] sm:$0xff]
  %v20 = vld [vmem:[%s1 + $0x18] sm:$0xff]
  %v21 = vld [vmem:[%s1 + $0x20] sm:$0xff]
  %v22 = vld [vmem:[%s1 + $0x28] sm:$0xff]
  %v23 = vld [vmem:[%s1 + $0x30] sm:$0x33]
  %v24 = vld [vmem:[%s1 + $0x38] sm:$0x33]
  %v25 = vld [vmem:[%s2] sm:$0xff]
  %v26 = vld [vmem:[%s2 + $0x8] sm:$0xff]
  %28 = vset.pattern.permute.xlu0 0
  %29 = vperm.xlu0 %28, %v25
  %v30 = vpop.permute.xlu0 %29
  %33 = vset.pattern.permute.xlu0 0
  %34 = vperm.xlu0 %33, %v26
  %v35 = vpop.permute.xlu0 %34
  %v39 = vunpack.c.l.b16 %v15
  %v40 = vunpack.c.l.b16 %v16
  %v41 = vpack.c.b16 %v40, %v39
  %v50 = vunpack.c.l.b16 %v17
  %v51 = vunpack.c.h.b16 %v17
  %v52 = vunpack.c.l.b16 %v18
  %v53 = vunpack.c.h.b16 %v18
  %v54 = vunpack.c.l.b16 %v19
  %v55 = vunpack.c.h.b16 %v19
  %v56 = vunpack.c.l.b16 %v20
  %v57 = vunpack.c.h.b16 %v20
  %v58 = vunpack.c.l.b16 %v21
  %v59 = vunpack.c.h.b16 %v21
  %v60 = vunpack.c.l.b16 %v22
  %v61 = vunpack.c.h.b16 %v22
  %v62 = vunpack.c.l.b16 %v23
  %v63 = vunpack.c.h.b16 %v23
  %v64 = vunpack.c.l.b16 %v24
  %v65 = vunpack.c.h.b16 %v24
  %v66 = vpack.c.b16 %v54, %v50
  %v67 = vpack.c.b16 %v55, %v51
  %v68 = vpack.c.b16 %v56, %v52
  %v69 = vpack.c.b16 %v57, %v53
  %v70 = vpack.c.b16 %v62, %v58
  %v71 = vpack.c.b16 %v63, %v59
  %v72 = vpack.c.b16 %v64, %v60
  %v73 = vpack.c.b16 %v65, %v61
  %vm78 = vcmask 220160
  %v80 = vsel %vm78, %v41, 0
  %vm82 = vcmask 1044480
  %vm83 = vcmask 1045504
  %v84 = vsel %vm82, 4294967295, 65535
  %v85 = vsel %vm83, %v84, 0
  %v87 = vand.u32 %v70, %v85
  %v90 = vand.u32 %v71, %v85
  %v93 = vand.u32 %v72, %v85
  %v96 = vand.u32 %v73, %v85
  %98 = vmatpush.bf16.msra.mxu0 0
  %99 = vmatpush.bf16.msra.mxu0 0
  %100 = vmatpush.bf16.msra.mxu0 0
  %101 = vmatpush.bf16.msra.mxu0 0
  %102 = vmatpush.bf16.msra.mxu0 0
  %103 = vmatpush.bf16.msra.mxu0 0
  %104 = vmatpush.bf16.msra.mxu0 %v87
  %105 = vmatpush.bf16.msra.mxu0 %v66
  %106 = vmatmul.bf16.gmra.mxu0 %v80
  %v107 = vpop.f32.mrf.mxu0
  %v108 = vadd.f32 %v30, %v107
  %v109 = vpop.f32.mrf.mxu0
  %v110 = vadd.f32 %v35, %v109
  %111 = vdwg.mxu0
  %112 = vmatpush.bf16.msra.mxu0 0
  %113 = vmatpush.bf16.msra.mxu0 0
  %114 = vmatpush.bf16.msra.mxu0 0
  %115 = vmatpush.bf16.msra.mxu0 0
  %116 = vmatpush.bf16.msra.mxu0 0
  %117 = vmatpush.bf16.msra.mxu0 0
  %118 = vmatpush.bf16.msra.mxu0 %v90
  %119 = vmatpush.bf16.msra.mxu0 %v67
  %120 = vmatmul.bf16.gmra.mxu0 %v80
  %v121 = vpop.f32.mrf.mxu0
  %v122 = vadd.f32 %v30, %v121
  %v123 = vpop.f32.mrf.mxu0
  %v124 = vadd.f32 %v35, %v123
  %125 = vdwg.mxu0
  %126 = vmatpush.bf16.msra.mxu0 0
  %127 = vmatpush.bf16.msra.mxu0 0
  %128 = vmatpush.bf16.msra.mxu0 0
  %129 = vmatpush.bf16.msra.mxu0 0
  %130 = vmatpush.bf16.msra.mxu0 0
  %131 = vmatpush.bf16.msra.mxu0 0
  %132 = vmatpush.bf16.msra.mxu0 %v93
  %133 = vmatpush.bf16.msra.mxu0 %v68
  %134 = vmatmul.bf16.gmra.mxu0 %v80
  %v135 = vpop.f32.mrf.mxu0
  %v136 = vadd.f32 %v30, %v135
  %v137 = vpop.f32.mrf.mxu0
  %v138 = vadd.f32 %v35, %v137
  %139 = vdwg.mxu0
  %140 = vmatpush.bf16.msra.mxu0 0
  %141 = vmatpush.bf16.msra.mxu0 0
  %142 = vmatpush.bf16.msra.mxu0 0
  %143 = vmatpush.bf16.msra.mxu0 0
  %144 = vmatpush.bf16.msra.mxu0 0
  %145 = vmatpush.bf16.msra.mxu0 0
  %146 = vmatpush.bf16.msra.mxu0 %v96
  %147 = vmatpush.bf16.msra.mxu0 %v69
  %148 = vmatmul.bf16.gmra.mxu0 %v80
  %v149 = vpop.f32.mrf.mxu0
  %v150 = vadd.f32 %v30, %v149
  %v151 = vpop.f32.mrf.mxu0
  %v152 = vadd.f32 %v35, %v151
  %153 = vdwg.mxu0
  %v154 = vmax.f32 %v108, 0.0
  %v155 = vmax.f32 %v122, 0.0
  %v156 = vmax.f32 %v136, 0.0
  %v157 = vmax.f32 %v150, 0.0
  %v158 = vmax.f32 %v110, 0.0
  %v159 = vmax.f32 %v124, 0.0
  %v160 = vmax.f32 %v138, 0.0
  %v161 = vmax.f32 %v152, 0.0
  %162 = vst [vmem:[%s3] sm:$0xff] %v154
  %163 = vst [vmem:[%s3 + $0x8] sm:$0xff] %v155
  %164 = vst [vmem:[%s3 + $0x10] sm:$0xff] %v156
  %165 = vst [vmem:[%s3 + $0x18] sm:$0xff] %v157
  %166 = vst [vmem:[%s3 + $0x20] sm:$0xff] %v158
  %167 = vst [vmem:[%s3 + $0x28] sm:$0xff] %v159
  %168 = vst [vmem:[%s3 + $0x30] sm:$0xff] %v160
  %169 = vst [vmem:[%s3 + $0x38] sm:$0xff] %v161
  // Predicated region
  $region14: #{vae_forward.5} parent=0 // pred_check
    _
  $region15: #{vae_forward.5} parent=0 // pred_check_branch
    %171 = sbr.rel (0) target = $region17
  $region16: #{vae_forward.5} parent=0 // pred_region
    _
  $region17: #{vae_forward.5} parent=0 // pred_fallthru
    _
  // Predicated region
  $region18: #{vae_forward.5} parent=0 // pred_check
    _
  $region19: #{vae_forward.5} parent=0 // pred_check_branch
    %173 = sbr.rel (0) target = $region21
  $region20: #{vae_forward.5} parent=0 // pred_region
    _
  $region21: #{vae_forward.5} parent=0 // pred_fallthru
    _

// kernel: vae_forward.6
$region0: #{vae_forward.6}
  #allocation0 [shape = 'u32[]', space=smem, size = 0x4, offset = 0x4, fixed_abs, tag = 'smem constant byte address 0x4 - core index']
  #allocation1 [shape = 'u32[72,128]{1,0:T(1,128)}', space=vmem, size = 0x9000, scoped, tag = 'internal scratch']
  %s0 = inlined_call_operand.vmem [shape: bf16[32,144], index: 0, kind: input, shape index: {}]
  %s1 = inlined_call_operand.vmem [shape: bf16[144,128], index: 1, kind: input, shape index: {}]
  %s2 = inlined_call_operand.vmem [shape: f32[32,1], index: 2, kind: input, shape index: {}]
  %s3 = inlined_call_operand.vmem [shape: f32[32,128], index: 3, kind: output, shape index: {}]
  %s4 = sld [smem:[#allocation0]]
  $region22: #{vae_forward.6} parent=0
    _
  %s6 = ssub.s32 1, %s4
  %s7 = scalar_select 0, %s6, %s4
  // Predicated region
  $region2: #{vae_forward.6} parent=0 // pred_check
    _
  $region3: #{vae_forward.6} parent=0 // pred_check_branch
    %9 = sbr.rel (0) target = $region5
  $region4: #{vae_forward.6} parent=0 // pred_region
    _
  $region5: #{vae_forward.6} parent=0 // pred_fallthru
    _
  // Predicated region
  $region6: #{vae_forward.6} parent=0 // pred_check
    _
  $region7: #{vae_forward.6} parent=0 // pred_check_branch
    %11 = sbr.rel (0) target = $region9
  $region8: #{vae_forward.6} parent=0 // pred_region
    _
  $region9: #{vae_forward.6} parent=0 // pred_fallthru
    _
  // Predicated region
  $region10: #{vae_forward.6} parent=0 // pred_check
    _
  $region11: #{vae_forward.6} parent=0 // pred_check_branch
    %13 = sbr.rel (0) target = $region13
  $region12: #{vae_forward.6} parent=0 // pred_region
    _
  $region13: #{vae_forward.6} parent=0 // pred_fallthru
    _
  %v15 = vld [vmem:[%s0] sm:$0xff]
  %v16 = vld [vmem:[%s0 + $0x8] sm:$0xff]
  %v17 = vld [vmem:[%s0 + $0x10] sm:$0xff]
  %v18 = vld [vmem:[%s0 + $0x18] sm:$0xff]
  %v19 = vld [vmem:[%s1] sm:$0xf]
  %v20 = vld [vmem:[%s1 + $0x4] sm:$0xf]
  %v21 = vld [vmem:[%s1 + $0x8] sm:$0xf]
  %v22 = vld [vmem:[%s1 + $0xc] sm:$0xf]
  %v23 = vld [vmem:[%s1 + $0x10] sm:$0xf]
  %v24 = vld [vmem:[%s1 + $0x14] sm:$0xf]
  %v25 = vld [vmem:[%s1 + $0x18] sm:$0xf]
  %v26 = vld [vmem:[%s1 + $0x1c] sm:$0xf]
  %v27 = vld [vmem:[%s1 + $0x20] sm:$0xf]
  %v28 = vld [vmem:[%s1 + $0x24] sm:$0xf]
  %v29 = vld [vmem:[%s1 + $0x28] sm:$0xf]
  %v30 = vld [vmem:[%s1 + $0x2c] sm:$0xf]
  %v31 = vld [vmem:[%s1 + $0x30] sm:$0xf]
  %v32 = vld [vmem:[%s1 + $0x34] sm:$0xf]
  %v33 = vld [vmem:[%s1 + $0x38] sm:$0xf]
  %v34 = vld [vmem:[%s1 + $0x3c] sm:$0xf]
  %v35 = vld [vmem:[%s1 + $0x40] sm:$0xf]
  %v36 = vld [vmem:[%s1 + $0x44] sm:$0xf]
  %v37 = vld [vmem:[%s2] sm:$0xff]
  %v38 = vld [vmem:[%s2 + $0x8] sm:$0xff]
  %v39 = vld [vmem:[%s2 + $0x10] sm:$0xff]
  %v40 = vld [vmem:[%s2 + $0x18] sm:$0xff]
  %42 = vset.pattern.permute.xlu0 0
  %43 = vperm.xlu0 %42, %v37
  %v44 = vpop.permute.xlu0 %43
  %47 = vset.pattern.permute.xlu0 0
  %48 = vperm.xlu0 %47, %v38
  %v49 = vpop.permute.xlu0 %48
  %52 = vset.pattern.permute.xlu0 0
  %53 = vperm.xlu0 %52, %v39
  %v54 = vpop.permute.xlu0 %53
  %57 = vset.pattern.permute.xlu0 0
  %58 = vperm.xlu0 %57, %v40
  %v59 = vpop.permute.xlu0 %58
  %v65 = vunpack.c.l.b16 %v15
  %v66 = vunpack.c.h.b16 %v15
  %v67 = vunpack.c.l.b16 %v16
  %v68 = vunpack.c.h.b16 %v16
  %v69 = vunpack.c.l.b16 %v17
  %v70 = vunpack.c.h.b16 %v17
  %v71 = vunpack.c.l.b16 %v18
  %v72 = vunpack.c.h.b16 %v18
  %v73 = vpack.c.b16 %v67, %v65
  %v74 = vpack.c.b16 %v68, %v66
  %v75 = vpack.c.b16 %v71, %v69
  %v76 = vpack.c.b16 %v72, %v70
  %v97 = vunpack.c.l.b16 %v19
  %v98 = vunpack.c.l.b16 %v20
  %v99 = vunpack.c.l.b16 %v21
  %v100 = vunpack.c.l.b16 %v22
  %v101 = vunpack.c.l.b16 %v23
  %v102 = vunpack.c.l.b16 %v24
  %v103 = vunpack.c.l.b16 %v25
  %v104 = vunpack.c.l.b16 %v26
  %v105 = vunpack.c.l.b16 %v27
  %v106 = vunpack.c.l.b16 %v28
  %v107 = vunpack.c.l.b16 %v29
  %v108 = vunpack.c.l.b16 %v30
  %v109 = vunpack.c.l.b16 %v31
  %v110 = vunpack.c.l.b16 %v32
  %v111 = vunpack.c.l.b16 %v33
  %v112 = vunpack.c.l.b16 %v34
  %v113 = vunpack.c.l.b16 %v35
  %v114 = vunpack.c.l.b16 %v36
  %v115 = vpack.c.b16 %v98, %v97
  %v116 = vpack.c.b16 %v100, %v99
  %v117 = vpack.c.b16 %v102, %v101
  %v118 = vpack.c.b16 %v104, %v103
  %v119 = vpack.c.b16 %v106, %v105
  %v120 = vpack.c.b16 %v108, %v107
  %v121 = vpack.c.b16 %v110, %v109
  %v122 = vpack.c.b16 %v112, %v111
  %v123 = vpack.c.b16 %v114, %v113
  %vm133 = vcmask 130048
  %v135 = vsel %vm133, %v74, 0
  %v138 = vsel %vm133, %v76, 0
  %140 = vmatpush.bf16.msra.mxu0 %v122
  %141 = vmatpush.bf16.msra.mxu0 %v121
  %142 = vmatpush.bf16.msra.mxu0 %v120
  %143 = vmatpush.bf16.msra.mxu0 %v119
  %144 = vmatpush.bf16.msra.mxu0 %v118
  %145 = vmatpush.bf16.msra.mxu0 %v117
  %146 = vmatpush.bf16.msra.mxu0 %v116
  %147 = vmatpush.bf16.msra.mxu0 %v115
  %148 = vmatmul.bf16.gmra.mxu0 %v73
  %v149 = vpop.f32.mrf.mxu0
  %v150 = vadd.f32 %v44, %v149
  %v151 = vpop.f32.mrf.mxu0
  %v152 = vadd.f32 %v49, %v151
  %153 = vmatmul.bf16.gmra.mxu0 %v75
  %v154 = vpop.f32.mrf.mxu0
  %v155 = vadd.f32 %v54, %v154
  %v156 = vpop.f32.mrf.mxu0
  %v157 = vadd.f32 %v59, %v156
  %158 = vdwg.mxu0
  %159 = vmatpush.bf16.msra.mxu0 0
  %160 = vmatpush.bf16.msra.mxu0 0
  %161 = vmatpush.bf16.msra.mxu0 0
  %162 = vmatpush.bf16.msra.mxu0 0
  %163 = vmatpush.bf16.msra.mxu0 0
  %164 = vmatpush.bf16.msra.mxu0 0
  %165 = vmatpush.bf16.msra.mxu0 0
  %166 = vmatpush.bf16.msra.mxu0 %v123
  %167 = vmatmul.bf16.gmra.mxu0 %v135
  %v168 = vpop.f32.mrf.mxu0
  %v169 = vadd.f32 %v150, %v168
  %v170 = vpop.f32.mrf.mxu0
  %v171 = vadd.f32 %v152, %v170
  %172 = vmatmul.bf16.gmra.mxu0 %v138
  %v173 = vpop.f32.mrf.mxu0
  %v174 = vadd.f32 %v155, %v173
  %v175 = vpop.f32.mrf.mxu0
  %v176 = vadd.f32 %v157, %v175
  %177 = vdwg.mxu0
  %v178 = vmax.f32 %v169, 0.0
  %v179 = vmax.f32 %v171, 0.0
  %v180 = vmax.f32 %v174, 0.0
  %v181 = vmax.f32 %v176, 0.0
  %182 = vst [vmem:[%s3] sm:$0xff] %v178
  %183 = vst [vmem:[%s3 + $0x8] sm:$0xff] %v179
  %184 = vst [vmem:[%s3 + $0x10] sm:$0xff] %v180
  %185 = vst [vmem:[%s3 + $0x18] sm:$0xff] %v181
  // Predicated region
  $region14: #{vae_forward.6} parent=0 // pred_check
    _
  $region15: #{vae_forward.6} parent=0 // pred_check_branch
    %187 = sbr.rel (0) target = $region17
  $region16: #{vae_forward.6} parent=0 // pred_region
    _
  $region17: #{vae_forward.6} parent=0 // pred_fallthru
    _
  // Predicated region
  $region18: #{vae_forward.6} parent=0 // pred_check
    _
  $region19: #{vae_forward.6} parent=0 // pred_check_branch
    %189 = sbr.rel (0) target = $region21
  $region20: #{vae_forward.6} parent=0 // pred_region
    _
  $region21: #{vae_forward.6} parent=0 // pred_fallthru
    _

// kernel: vae_forward.7
$region0: #{vae_forward.7}
  #allocation0 [shape = 'u32[]', space=smem, size = 0x4, offset = 0x4, fixed_abs, tag = 'smem constant byte address 0x4 - core index']
  #allocation1 [shape = 'u32[72,128]{1,0:T(1,128)}', space=vmem, size = 0x9000, scoped, tag = 'internal scratch']
  %s0 = inlined_call_operand.vmem [shape: bf16[2,2048], index: 0, kind: input, shape index: {}]
  %s1 = inlined_call_operand.vmem [shape: bf16[2048,128], index: 1, kind: input, shape index: {}]
  %s2 = inlined_call_operand.vmem [shape: f32[1,128], index: 2, kind: input, shape index: {}]
  %s3 = inlined_call_operand.vmem [shape: bf16[128,512], index: 3, kind: input, shape index: {}]
  %s4 = inlined_call_operand.vmem [shape: f32[1,512], index: 4, kind: input, shape index: {}]
  %s5 = inlined_call_operand.vmem [shape: bf16[256,3072], index: 5, kind: input, shape index: {}]
  %s6 = inlined_call_operand.vmem [shape: f32[1,3072], index: 6, kind: input, shape index: {}]
  %s7 = inlined_call_operand.vmem [shape: f32[2,256], index: 7, kind: input, shape index: {}]
  %s8 = inlined_call_operand.hbm [shape: f32[2,3072], index: 8, kind: output, shape index: {0}]
  %s9 = inlined_call_operand.vmem [shape: f32[2,512], index: 9, kind: output, shape index: {1}]
  %10 = xla_tuple %s8, %s9
  %s11 = sld [smem:[#allocation0]]
  $region50: #{vae_forward.7} parent=0
    _
  %s13 = ssub.s32 1, %s11
  %s14 = scalar_select 0, %s13, %s11
  $region1: #{vae_forward.7} parent=0
    #allocation2 [shape = 'u8[24576]{0}', space=vmem, size = 0x6000, scoped, tag = 'output window, operand 0, single buffered']
    #allocation3 [shape = 's32[1]{0}', space=sflag, size = 0x4, scoped, tag = 'scoped memory for vae_forward.7']
    %15 = vsyncpa [#allocation3], 0
    // Predicated region
    $region2: #{vae_forward.7} parent=1 // pred_check
      _
    $region3: #{vae_forward.7} parent=1 // pred_check_branch
      %17 = sbr.rel (0) target = $region5
    $region4: #{vae_forward.7} parent=1 // pred_region
      _
    $region5: #{vae_forward.7} parent=1 // pred_fallthru
      _
    // Predicated region
    $region6: #{vae_forward.7} parent=1 // pred_check
      _
    $region7: #{vae_forward.7} parent=1 // pred_check_branch
      %19 = sbr.rel (0) target = $region9
    $region8: #{vae_forward.7} parent=1 // pred_region
      _
    $region9: #{vae_forward.7} parent=1 // pred_fallthru
      _
    // Predicated region
    $region10: #{vae_forward.7} parent=1 // pred_check
      _
    $region11: #{vae_forward.7} parent=1 // pred_check_branch
      %21 = sbr.rel (0) target = $region13
    $region12: #{vae_forward.7} parent=1 // pred_region
      _
    $region13: #{vae_forward.7} parent=1 // pred_fallthru
      _
    // Predicated region
    $region14: #{vae_forward.7} parent=1 // pred_check
      _
    $region15: #{vae_forward.7} parent=1 // pred_check_branch
      %23 = sbr.rel (0) target = $region17
    $region16: #{vae_forward.7} parent=1 // pred_region
      _
    $region17: #{vae_forward.7} parent=1 // pred_fallthru
      _
    // Predicated region
    $region18: #{vae_forward.7} parent=1 // pred_check
      _
    $region19: #{vae_forward.7} parent=1 // pred_check_branch
      %25 = sbr.rel (0) target = $region21
    $region20: #{vae_forward.7} parent=1 // pred_region
      _
    $region21: #{vae_forward.7} parent=1 // pred_fallthru
      _
    // Predicated region
    $region22: #{vae_forward.7} parent=1 // pred_check
      _
    $region23: #{vae_forward.7} parent=1 // pred_check_branch
      %27 = sbr.rel (0) target = $region25
    $region24: #{vae_forward.7} parent=1 // pred_region
      _
    $region25: #{vae_forward.7} parent=1 // pred_fallthru
      _
    // Predicated region
    $region26: #{vae_forward.7} parent=1 // pred_check
      _
    $region27: #{vae_forward.7} parent=1 // pred_check_branch
      %29 = sbr.rel (0) target = $region29
    $region28: #{vae_forward.7} parent=1 // pred_region
      _
    $region29: #{vae_forward.7} parent=1 // pred_fallthru
      _
    // Predicated region
    $region30: #{vae_forward.7} parent=1 // pred_check
      _
    $region31: #{vae_forward.7} parent=1 // pred_check_branch
      %31 = sbr.rel (0) target = $region33
    $region32: #{vae_forward.7} parent=1 // pred_region
      _
    $region33: #{vae_forward.7} parent=1 // pred_fallthru
      _
    %v32 = vld [vmem:[%s0] sm:$0xff]
    %v33 = vld [vmem:[%s0 + $0x8] sm:$0xff]
    %v34 = vld [vmem:[%s1] sm:$0xf]
    %v35 = vld [vmem:[%s1 + $0x4] sm:$0xf]
    %v36 = vld [vmem:[%s1 + $0x8] sm:$0xf]
    %v37 = vld [vmem:[%s1 + $0xc] sm:$0xf]
    %v38 = vld [vmem:[%s1 + $0x10] sm:$0xf]
    %v39 = vld [vmem:[%s1 + $0x14] sm:$0xf]
    %v40 = vld [vmem:[%s1 + $0x18] sm:$0xf]
    %v41 = vld [vmem:[%s1 + $0x1c] sm:$0xf]
    %v42 = vld [vmem:[%s1 + $0x20] sm:$0xf]
    %v43 = vld [vmem:[%s1 + $0x24] sm:$0xf]
    %v44 = vld [vmem:[%s1 + $0x28] sm:$0xf]
    %v45 = vld [vmem:[%s1 + $0x2c] sm:$0xf]
    %v46 = vld [vmem:[%s1 + $0x30] sm:$0xf]
    %v47 = vld [vmem:[%s1 + $0x34] sm:$0xf]
    %v48 = vld [vmem:[%s1 + $0x38] sm:$0xf]
    %v49 = vld [vmem:[%s1 + $0x3c] sm:$0xf]
    %v50 = vld [vmem:[%s1 + $0x40] sm:$0xf]
    %v51 = vld [vmem:[%s1 + $0x44] sm:$0xf]
    %v52 = vld [vmem:[%s1 + $0x48] sm:$0xf]
    %v53 = vld [vmem:[%s1 + $0x4c] sm:$0xf]
    %v54 = vld [vmem:[%s1 + $0x50] sm:$0xf]
    %v55 = vld [vmem:[%s1 + $0x54] sm:$0xf]
    %v56 = vld [vmem:[%s1 + $0x58] sm:$0xf]
    %v57 = vld [vmem:[%s1 + $0x5c] sm:$0xf]
    %v58 = vld [vmem:[%s1 + $0x60] sm:$0xf]
    %v59 = vld [vmem:[%s1 + $0x64] sm:$0xf]
    %v60 = vld [vmem:[%s1 + $0x68] sm:$0xf]
    %v61 = vld [vmem:[%s1 + $0x6c] sm:$0xf]
    %v62 = vld [vmem:[%s1 + $0x70] sm:$0xf]
    %v63 = vld [vmem:[%s1 + $0x74] sm:$0xf]
    %v64 = vld [vmem:[%s1 + $0x78] sm:$0xf]
    %v65 = vld [vmem:[%s1 + $0x7c] sm:$0xf]
    %v66 = vld [vmem:[%s1 + $0x80] sm:$0xf]
    %v67 = vld [vmem:[%s1 + $0x84] sm:$0xf]
    %v68 = vld [vmem:[%s1 + $0x88] sm:$0xf]
    %v69 = vld [vmem:[%s1 + $0x8c] sm:$0xf]
    %v70 = vld [vmem:[%s1 + $0x90] sm:$0xf]
    %v71 = vld [vmem:[%s1 + $0x94] sm:$0xf]
    %v72 = vld [vmem:[%s1 + $0x98] sm:$0xf]
    %v73 = vld [vmem:[%s1 + $0x9c] sm:$0xf]
    %v74 = vld [vmem:[%s1 + $0xa0] sm:$0xf]
    %v75 = vld [vmem:[%s1 + $0xa4] sm:$0xf]
    %v76 = vld [vmem:[%s1 + $0xa8] sm:$0xf]
    %v77 = vld [vmem:[%s1 + $0xac] sm:$0xf]
    %v78 = vld [vmem:[%s1 + $0xb0] sm:$0xf]
    %v79 = vld [vmem:[%s1 + $0xb4] sm:$0xf]
    %v80 = vld [vmem:[%s1 + $0xb8] sm:$0xf]
    %v81 = vld [vmem:[%s1 + $0xbc] sm:$0xf]
    %v82 = vld [vmem:[%s1 + $0xc0] sm:$0xf]
    %v83 = vld [vmem:[%s1 + $0xc4] sm:$0xf]
    %v84 = vld [vmem:[%s1 + $0xc8] sm:$0xf]
    %v85 = vld [vmem:[%s1 + $0xcc] sm:$0xf]
    %v86 = vld [vmem:[%s1 + $0xd0] sm:$0xf]
    %v87 = vld [vmem:[%s1 + $0xd4] sm:$0xf]
    %v88 = vld [vmem:[%s1 + $0xd8] sm:$0xf]
    %v89 = vld [vmem:[%s1 + $0xdc] sm:$0xf]
    %v90 = vld [vmem:[%s1 + $0xe0] sm:$0xf]
    %v91 = vld [vmem:[%s1 + $0xe4] sm:$0xf]
    %v92 = vld [vmem:[%s1 + $0xe8] sm:$0xf]
    %v93 = vld [vmem:[%s1 + $0xec] sm:$0xf]
    %v94 = vld [vmem:[%s1 + $0xf0] sm:$0xf]
    %v95 = vld [vmem:[%s1 + $0xf4] sm:$0xf]
    %v96 = vld [vmem:[%s1 + $0xf8] sm:$0xf]
    %v97 = vld [vmem:[%s1 + $0xfc] sm:$0xf]
    %v98 = vld [vmem:[%s1 + $0x100] sm:$0xf]
    %v99 = vld [vmem:[%s1 + $0x104] sm:$0xf]
    %v100 = vld [vmem:[%s1 + $0x108] sm:$0xf]
    %v101 = vld [vmem:[%s1 + $0x10c] sm:$0xf]
    %v102 = vld [vmem:[%s1 + $0x110] sm:$0xf]
    %v103 = vld [vmem:[%s1 + $0x114] sm:$0xf]
    %v104 = vld [vmem:[%s1 + $0x118] sm:$0xf]
    %v105 = vld [vmem:[%s1 + $0x11c] sm:$0xf]
    %v106 = vld [vmem:[%s1 + $0x120] sm:$0xf]
    %v107 = vld [vmem:[%s1 + $0x124] sm:$0xf]
    %v108 = vld [vmem:[%s1 + $0x128] sm:$0xf]
    %v109 = vld [vmem:[%s1 + $0x12c] sm:$0xf]
    %v110 = vld [vmem:[%s1 + $0x130] sm:$0xf]
    %v111 = vld [vmem:[%s1 + $0x134] sm:$0xf]
    %v112 = vld [vmem:[%s1 + $0x138] sm:$0xf]
    %v113 = vld [vmem:[%s1 + $0x13c] sm:$0xf]
    %v114 = vld [vmem:[%s1 + $0x140] sm:$0xf]
    %v115 = vld [vmem:[%s1 + $0x144] sm:$0xf]
    %v116 = vld [vmem:[%s1 + $0x148] sm:$0xf]
    %v117 = vld [vmem:[%s1 + $0x14c] sm:$0xf]
    %v118 = vld [vmem:[%s1 + $0x150] sm:$0xf]
    %v119 = vld [vmem:[%s1 + $0x154] sm:$0xf]
    %v120 = vld [vmem:[%s1 + $0x158] sm:$0xf]
    %v121 = vld [vmem:[%s1 + $0x15c] sm:$0xf]
    %v122 = vld [vmem:[%s1 + $0x160] sm:$0xf]
    %v123 = vld [vmem:[%s1 + $0x164] sm:$0xf]
    %v124 = vld [vmem:[%s1 + $0x168] sm:$0xf]
    %v125 = vld [vmem:[%s1 + $0x16c] sm:$0xf]
    %v126 = vld [vmem:[%s1 + $0x170] sm:$0xf]
    %v127 = vld [vmem:[%s1 + $0x174] sm:$0xf]
    %v128 = vld [vmem:[%s1 + $0x178] sm:$0xf]
    %v129 = vld [vmem:[%s1 + $0x17c] sm:$0xf]
    %v130 = vld [vmem:[%s1 + $0x180] sm:$0xf]
    %v131 = vld [vmem:[%s1 + $0x184] sm:$0xf]
    %v132 = vld [vmem:[%s1 + $0x188] sm:$0xf]
    %v133 = vld [vmem:[%s1 + $0x18c] sm:$0xf]
    %v134 = vld [vmem:[%s1 + $0x190] sm:$0xf]
    %v135 = vld [vmem:[%s1 + $0x194] sm:$0xf]
    %v136 = vld [vmem:[%s1 + $0x198] sm:$0xf]
    %v137 = vld [vmem:[%s1 + $0x19c] sm:$0xf]
    %v138 = vld [vmem:[%s1 + $0x1a0] sm:$0xf]
    %v139 = vld [vmem:[%s1 + $0x1a4] sm:$0xf]
    %v140 = vld [vmem:[%s1 + $0x1a8] sm:$0xf]
    %v141 = vld [vmem:[%s1 + $0x1ac] sm:$0xf]
    %v142 = vld [vmem:[%s1 + $0x1b0] sm:$0xf]
    %v143 = vld [vmem:[%s1 + $0x1b4] sm:$0xf]
    %v144 = vld [vmem:[%s1 + $0x1b8] sm:$0xf]
    %v145 = vld [vmem:[%s1 + $0x1bc] sm:$0xf]
    %v146 = vld [vmem:[%s1 + $0x1c0] sm:$0xf]
    %v147 = vld [vmem:[%s1 + $0x1c4] sm:$0xf]
    %v148 = vld [vmem:[%s1 + $0x1c8] sm:$0xf]
    %v149 = vld [vmem:[%s1 + $0x1cc] sm:$0xf]
    %v150 = vld [vmem:[%s1 + $0x1d0] sm:$0xf]
    %v151 = vld [vmem:[%s1 + $0x1d4] sm:$0xf]
    %v152 = vld [vmem:[%s1 + $0x1d8] sm:$0xf]
    %v153 = vld [vmem:[%s1 + $0x1dc] sm:$0xf]
    %v154 = vld [vmem:[%s1 + $0x1e0] sm:$0xf]
    %v155 = vld [vmem:[%s1 + $0x1e4] sm:$0xf]
    %v156 = vld [vmem:[%s1 + $0x1e8] sm:$0xf]
    %v157 = vld [vmem:[%s1 + $0x1ec] sm:$0xf]
    %v158 = vld [vmem:[%s1 + $0x1f0] sm:$0xf]
    %v159 = vld [vmem:[%s1 + $0x1f4] sm:$0xf]
    %v160 = vld [vmem:[%s1 + $0x1f8] sm:$0xf]
    %v161 = vld [vmem:[%s1 + $0x1fc] sm:$0xf]
    %v162 = vld [vmem:[%s1 + $0x200] sm:$0xf]
    %v163 = vld [vmem:[%s1 + $0x204] sm:$0xf]
    %v164 = vld [vmem:[%s1 + $0x208] sm:$0xf]
    %v165 = vld [vmem:[%s1 + $0x20c] sm:$0xf]
    %v166 = vld [vmem:[%s1 + $0x210] sm:$0xf]
    %v167 = vld [vmem:[%s1 + $0x214] sm:$0xf]
    %v168 = vld [vmem:[%s1 + $0x218] sm:$0xf]
    %v169 = vld [vmem:[%s1 + $0x21c] sm:$0xf]
    %v170 = vld [vmem:[%s1 + $0x220] sm:$0xf]
    %v171 = vld [vmem:[%s1 + $0x224] sm:$0xf]
    %v172 = vld [vmem:[%s1 + $0x228] sm:$0xf]
    %v173 = vld [vmem:[%s1 + $0x22c] sm:$0xf]
    %v174 = vld [vmem:[%s1 + $0x230] sm:$0xf]
    %v175 = vld [vmem:[%s1 + $0x234] sm:$0xf]
    %v176 = vld [vmem:[%s1 + $0x238] sm:$0xf]
    %v177 = vld [vmem:[%s1 + $0x23c] sm:$0xf]
    %v178 = vld [vmem:[%s1 + $0x240] sm:$0xf]
    %v179 = vld [vmem:[%s1 + $0x244] sm:$0xf]
    %v180 = vld [vmem:[%s1 + $0x248] sm:$0xf]
    %v181 = vld [vmem:[%s1 + $0x24c] sm:$0xf]
    %v182 = vld [vmem:[%s1 + $0x250] sm:$0xf]
    %v183 = vld [vmem:[%s1 + $0x254] sm:$0xf]
    %v184 = vld [vmem:[%s1 + $0x258] sm:$0xf]
    %v185 = vld [vmem:[%s1 + $0x25c] sm:$0xf]
    %v186 = vld [vmem:[%s1 + $0x260] sm:$0xf]
    %v187 = vld [vmem:[%s1 + $0x264] sm:$0xf]
    %v188 = vld [vmem:[%s1 + $0x268] sm:$0xf]
    %v189 = vld [vmem:[%s1 + $0x26c] sm:$0xf]
    %v190 = vld [vmem:[%s1 + $0x270] sm:$0xf]
    %v191 = vld [vmem:[%s1 + $0x274] sm:$0xf]
    %v192 = vld [vmem:[%s1 + $0x278] sm:$0xf]
    %v193 = vld [vmem:[%s1 + $0x27c] sm:$0xf]
    %v194 = vld [vmem:[%s1 + $0x280] sm:$0xf]
    %v195 = vld [vmem:[%s1 + $0x284] sm:$0xf]
    %v196 = vld [vmem:[%s1 + $0x288] sm:$0xf]
    %v197 = vld [vmem:[%s1 + $0x28c] sm:$0xf]
    %v198 = vld [vmem:[%s1 + $0x290] sm:$0xf]
    %v199 = vld [vmem:[%s1 + $0x294] sm:$0xf]
    %v200 = vld [vmem:[%s1 + $0x298] sm:$0xf]
    %v201 = vld [vmem:[%s1 + $0x29c] sm:$0xf]
    %v202 = vld [vmem:[%s1 + $0x2a0] sm:$0xf]
    %v203 = vld [vmem:[%s1 + $0x2a4] sm:$0xf]
    %v204 = vld [vmem:[%s1 + $0x2a8] sm:$0xf]
    %v205 = vld [vmem:[%s1 + $0x2ac] sm:$0xf]
    %v206 = vld [vmem:[%s1 + $0x2b0] sm:$0xf]
    %v207 = vld [vmem:[%s1 + $0x2b4] sm:$0xf]
    %v208 = vld [vmem:[%s1 + $0x2b8] sm:$0xf]
    %v209 = vld [vmem:[%s1 + $0x2bc] sm:$0xf]
    %v210 = vld [vmem:[%s1 + $0x2c0] sm:$0xf]
    %v211 = vld [vmem:[%s1 + $0x2c4] sm:$0xf]
    %v212 = vld [vmem:[%s1 + $0x2c8] sm:$0xf]
    %v213 = vld [vmem:[%s1 + $0x2cc] sm:$0xf]
    %v214 = vld [vmem:[%s1 + $0x2d0] sm:$0xf]
    %v215 = vld [vmem:[%s1 + $0x2d4] sm:$0xf]
    %v216 = vld [vmem:[%s1 + $0x2d8] sm:$0xf]
    %v217 = vld [vmem:[%s1 + $0x2dc] sm:$0xf]
    %v218 = vld [vmem:[%s1 + $0x2e0] sm:$0xf]
    %v219 = vld [vmem:[%s1 + $0x2e4] sm:$0xf]
    %v220 = vld [vmem:[%s1 + $0x2e8] sm:$0xf]
    %v221 = vld [vmem:[%s1 + $0x2ec] sm:$0xf]
    %v222 = vld [vmem:[%s1 + $0x2f0] sm:$0xf]
    %v223 = vld [vmem:[%s1 + $0x2f4] sm:$0xf]
    %v224 = vld [vmem:[%s1 + $0x2f8] sm:$0xf]
    %v225 = vld [vmem:[%s1 + $0x2fc] sm:$0xf]
    %v226 = vld [vmem:[%s1 + $0x300] sm:$0xf]
    %v227 = vld [vmem:[%s1 + $0x304] sm:$0xf]
    %v228 = vld [vmem:[%s1 + $0x308] sm:$0xf]
    %v229 = vld [vmem:[%s1 + $0x30c] sm:$0xf]
    %v230 = vld [vmem:[%s1 + $0x310] sm:$0xf]
    %v231 = vld [vmem:[%s1 + $0x314] sm:$0xf]
    %v232 = vld [vmem:[%s1 + $0x318] sm:$0xf]
    %v233 = vld [vmem:[%s1 + $0x31c] sm:$0xf]
    %v234 = vld [vmem:[%s1 + $0x320] sm:$0xf]
    %v235 = vld [vmem:[%s1 + $0x324] sm:$0xf]
    %v236 = vld [vmem:[%s1 + $0x328] sm:$0xf]
    %v237 = vld [vmem:[%s1 + $0x32c] sm:$0xf]
    %v238 = vld [vmem:[%s1 + $0x330] sm:$0xf]
    %v239 = vld [vmem:[%s1 + $0x334] sm:$0xf]
    %v240 = vld [vmem:[%s1 + $0x338] sm:$0xf]
    %v241 = vld [vmem:[%s1 + $0x33c] sm:$0xf]
    %v242 = vld [vmem:[%s1 + $0x340] sm:$0xf]
    %v243 = vld [vmem:[%s1 + $0x344] sm:$0xf]
    %v244 = vld [vmem:[%s1 + $0x348] sm:$0xf]
    %v245 = vld [vmem:[%s1 + $0x34c] sm:$0xf]
    %v246 = vld [vmem:[%s1 + $0x350] sm:$0xf]
    %v247 = vld [vmem:[%s1 + $0x354] sm:$0xf]
    %v248 = vld [vmem:[%s1 + $0x358] sm:$0xf]
    %v249 = vld [vmem:[%s1 + $0x35c] sm:$0xf]
    %v250 = vld [vmem:[%s1 + $0x360] sm:$0xf]
    %v251 = vld [vmem:[%s1 + $0x364] sm:$0xf]
    %v252 = vld [vmem:[%s1 + $0x368] sm:$0xf]
    %v253 = vld [vmem:[%s1 + $0x36c] sm:$0xf]
    %v254 = vld [vmem:[%s1 + $0x370] sm:$0xf]
    %v255 = vld [vmem:[%s1 + $0x374] sm:$0xf]
    %v256 = vld [vmem:[%s1 + $0x378] sm:$0xf]
    %v257 = vld [vmem:[%s1 + $0x37c] sm:$0xf]
    %v258 = vld [vmem:[%s1 + $0x380] sm:$0xf]
    %v259 = vld [vmem:[%s1 + $0x384] sm:$0xf]
    %v260 = vld [vmem:[%s1 + $0x388] sm:$0xf]
    %v261 = vld [vmem:[%s1 + $0x38c] sm:$0xf]
    %v262 = vld [vmem:[%s1 + $0x390] sm:$0xf]
    %v263 = vld [vmem:[%s1 + $0x394] sm:$0xf]
    %v264 = vld [vmem:[%s1 + $0x398] sm:$0xf]
    %v265 = vld [vmem:[%s1 + $0x39c] sm:$0xf]
    %v266 = vld [vmem:[%s1 + $0x3a0] sm:$0xf]
    %v267 = vld [vmem:[%s1 + $0x3a4] sm:$0xf]
    %v268 = vld [vmem:[%s1 + $0x3a8] sm:$0xf]
    %v269 = vld [vmem:[%s1 + $0x3ac] sm:$0xf]
    %v270 = vld [vmem:[%s1 + $0x3b0] sm:$0xf]
    %v271 = vld [vmem:[%s1 + $0x3b4] sm:$0xf]
    %v272 = vld [vmem:[%s1 + $0x3b8] sm:$0xf]
    %v273 = vld [vmem:[%s1 + $0x3bc] sm:$0xf]
    %v274 = vld [vmem:[%s1 + $0x3c0] sm:$0xf]
    %v275 = vld [vmem:[%s1 + $0x3c4] sm:$0xf]
    %v276 = vld [vmem:[%s1 + $0x3c8] sm:$0xf]
    %v277 = vld [vmem:[%s1 + $0x3cc] sm:$0xf]
    %v278 = vld [vmem:[%s1 + $0x3d0] sm:$0xf]
    %v279 = vld [vmem:[%s1 + $0x3d4] sm:$0xf]
    %v280 = vld [vmem:[%s1 + $0x3d8] sm:$0xf]
    %v281 = vld [vmem:[%s1 + $0x3dc] sm:$0xf]
    %v282 = vld [vmem:[%s1 + $0x3e0] sm:$0xf]
    %v283 = vld [vmem:[%s1 + $0x3e4] sm:$0xf]
    %v284 = vld [vmem:[%s1 + $0x3e8] sm:$0xf]
    %v285 = vld [vmem:[%s1 + $0x3ec] sm:$0xf]
    %v286 = vld [vmem:[%s1 + $0x3f0] sm:$0xf]
    %v287 = vld [vmem:[%s1 + $0x3f4] sm:$0xf]
    %v288 = vld [vmem:[%s1 + $0x3f8] sm:$0xf]
    %v289 = vld [vmem:[%s1 + $0x3fc] sm:$0xf]
    %v290 = vld [vmem:[%s2] sm:$0x1]
    %v292 = vperm.slane %v290, 0
    %295 = vst [vmem:[#allocation1] ss:$9 sm:$0xff] %v32
    %v296 = vld [vmem:[#allocation1] sm:$0xff]
    %v297 = vld [vmem:[#allocation1 + $0x9] sm:$0xff]
    %v298 = vld [vmem:[#allocation1 + $0x12] sm:$0xff]
    %v299 = vld [vmem:[#allocation1 + $0x1b] sm:$0xff]
    %v300 = vld [vmem:[#allocation1 + $0x24] sm:$0xff]
    %v301 = vld [vmem:[#allocation1 + $0x2d] sm:$0xff]
    %v302 = vld [vmem:[#allocation1 + $0x36] sm:$0xff]
    %v303 = vld [vmem:[#allocation1 + $0x3f] sm:$0xff]
    %305 = vst [vmem:[#allocation1] ss:$9 sm:$0xff] %v33
    %v306 = vld [vmem:[#allocation1] sm:$0xff]
    %v307 = vld [vmem:[#allocation1 + $0x9] sm:$0xff]
    %v308 = vld [vmem:[#allocation1 + $0x12] sm:$0xff]
    %v309 = vld [vmem:[#allocation1 + $0x1b] sm:$0xff]
    %v310 = vld [vmem:[#allocation1 + $0x24] sm:$0xff]
    %v311 = vld [vmem:[#allocation1 + $0x2d] sm:$0xff]
    %v312 = vld [vmem:[#allocation1 + $0x36] sm:$0xff]
    %v313 = vld [vmem:[#allocation1 + $0x3f] sm:$0xff]
    %v586 = vunpack.c.l.b16 %v34
    %v587 = vunpack.c.l.b16 %v35
    %v588 = vunpack.c.l.b16 %v36
    %v589 = vunpack.c.l.b16 %v37
    %v590 = vunpack.c.l.b16 %v38
    %v591 = vunpack.c.l.b16 %v39
    %v592 = vunpack.c.l.b16 %v40
    %v593 = vunpack.c.l.b16 %v41
    %v594 = vunpack.c.l.b16 %v42
    %v595 = vunpack.c.l.b16 %v43
    %v596 = vunpack.c.l.b16 %v44
    %v597 = vunpack.c.l.b16 %v45
    %v598 = vunpack.c.l.b16 %v46
    %v599 = vunpack.c.l.b16 %v47
    %v600 = vunpack.c.l.b16 %v48
    %v601 = vunpack.c.l.b16 %v49
    %v602 = vunpack.c.l.b16 %v50
    %v603 = vunpack.c.l.b16 %v51
    %v604 = vunpack.c.l.b16 %v52
    %v605 = vunpack.c.l.b16 %v53
    %v606 = vunpack.c.l.b16 %v54
    %v607 = vunpack.c.l.b16 %v55
    %v608 = vunpack.c.l.b16 %v56
    %v609 = vunpack.c.l.b16 %v57
    %v610 = vunpack.c.l.b16 %v58
    %v611 = vunpack.c.l.b16 %v59
    %v612 = vunpack.c.l.b16 %v60
    %v613 = vunpack.c.l.b16 %v61
    %v614 = vunpack.c.l.b16 %v62
    %v615 = vunpack.c.l.b16 %v63
    %v616 = vunpack.c.l.b16 %v64
    %v617 = vunpack.c.l.b16 %v65
    %v618 = vunpack.c.l.b16 %v66
    %v619 = vunpack.c.l.b16 %v67
    %v620 = vunpack.c.l.b16 %v68
    %v621 = vunpack.c.l.b16 %v69
    %v622 = vunpack.c.l.b16 %v70
    %v623 = vunpack.c.l.b16 %v71
    %v624 = vunpack.c.l.b16 %v72
    %v625 = vunpack.c.l.b16 %v73
    %v626 = vunpack.c.l.b16 %v74
    %v627 = vunpack.c.l.b16 %v75
    %v628 = vunpack.c.l.b16 %v76
    %v629 = vunpack.c.l.b16 %v77
    %v630 = vunpack.c.l.b16 %v78
    %v631 = vunpack.c.l.b16 %v79
    %v632 = vunpack.c.l.b16 %v80
    %v633 = vunpack.c.l.b16 %v81
    %v634 = vunpack.c.l.b16 %v82
    %v635 = vunpack.c.l.b16 %v83
    %v636 = vunpack.c.l.b16 %v84
    %v637 = vunpack.c.l.b16 %v85
    %v638 = vunpack.c.l.b16 %v86
    %v639 = vunpack.c.l.b16 %v87
    %v640 = vunpack.c.l.b16 %v88
    %v641 = vunpack.c.l.b16 %v89
    %v642 = vunpack.c.l.b16 %v90
    %v643 = vunpack.c.l.b16 %v91
    %v644 = vunpack.c.l.b16 %v92
    %v645 = vunpack.c.l.b16 %v93
    %v646 = vunpack.c.l.b16 %v94
    %v647 = vunpack.c.l.b16 %v95
    %v648 = vunpack.c.l.b16 %v96
    %v649 = vunpack.c.l.b16 %v97
    %v650 = vunpack.c.l.b16 %v98
    %v651 = vunpack.c.l.b16 %v99
    %v652 = vunpack.c.l.b16 %v100
    %v653 = vunpack.c.l.b16 %v101
    %v654 = vunpack.c.l.b16 %v102
    %v655 = vunpack.c.l.b16 %v103
    %v656 = vunpack.c.l.b16 %v104
    %v657 = vunpack.c.l.b16 %v105
    %v658 = vunpack.c.l.b16 %v106
    %v659 = vunpack.c.l.b16 %v107
    %v660 = vunpack.c.l.b16 %v108
    %v661 = vunpack.c.l.b16 %v109
    %v662 = vunpack.c.l.b16 %v110
    %v663 = vunpack.c.l.b16 %v111
    %v664 = vunpack.c.l.b16 %v112
    %v665 = vunpack.c.l.b16 %v113
    %v666 = vunpack.c.l.b16 %v114
    %v667 = vunpack.c.l.b16 %v115
    %v668 = vunpack.c.l.b16 %v116
    %v669 = vunpack.c.l.b16 %v117
    %v670 = vunpack.c.l.b16 %v118
    %v671 = vunpack.c.l.b16 %v119
    %v672 = vunpack.c.l.b16 %v120
    %v673 = vunpack.c.l.b16 %v121
    %v674 = vunpack.c.l.b16 %v122
    %v675 = vunpack.c.l.b16 %v123
    %v676 = vunpack.c.l.b16 %v124
    %v677 = vunpack.c.l.b16 %v125
    %v678 = vunpack.c.l.b16 %v126
    %v679 = vunpack.c.l.b16 %v127
    %v680 = vunpack.c.l.b16 %v128
    %v681 = vunpack.c.l.b16 %v129
    %v682 = vunpack.c.l.b16 %v130
    %v683 = vunpack.c.l.b16 %v131
    %v684 = vunpack.c.l.b16 %v132
    %v685 = vunpack.c.l.b16 %v133
    %v686 = vunpack.c.l.b16 %v134
    %v687 = vunpack.c.l.b16 %v135
    %v688 = vunpack.c.l.b16 %v136
    %v689 = vunpack.c.l.b16 %v137
    %v690 = vunpack.c.l.b16 %v138
    %v691 = vunpack.c.l.b16 %v139
    %v692 = vunpack.c.l.b16 %v140
    %v693 = vunpack.c.l.b16 %v141
    %v694 = vunpack.c.l.b16 %v142
    %v695 = vunpack.c.l.b16 %v143
    %v696 = vunpack.c.l.b16 %v144
    %v697 = vunpack.c.l.b16 %v145
    %v698 = vunpack.c.l.b16 %v146
    %v699 = vunpack.c.l.b16 %v147
    %v700 = vunpack.c.l.b16 %v148
    %v701 = vunpack.c.l.b16 %v149
    %v702 = vunpack.c.l.b16 %v150
    %v703 = vunpack.c.l.b16 %v151
    %v704 = vunpack.c.l.b16 %v152
    %v705 = vunpack.c.l.b16 %v153
    %v706 = vunpack.c.l.b16 %v154
    %v707 = vunpack.c.l.b16 %v155
    %v708 = vunpack.c.l.b16 %v156
    %v709 = vunpack.c.l.b16 %v157
    %v710 = vunpack.c.l.b16 %v158
    %v711 = vunpack.c.l.b16 %v159
    %v712 = vunpack.c.l.b16 %v160
    %v713 = vunpack.c.l.b16 %v161
    %v714 = vunpack.c.l.b16 %v162
    %v715 = vunpack.c.l.b16 %v163
    %v716 = vunpack.c.l.b16 %v164
    %v717 = vunpack.c.l.b16 %v165
    %v718 = vunpack.c.l.b16 %v166
    %v719 = vunpack.c.l.b16 %v167
    %v720 = vunpack.c.l.b16 %v168
    %v721 = vunpack.c.l.b16 %v169
    %v722 = vunpack.c.l.b16 %v170
    %v723 = vunpack.c.l.b16 %v171
    %v724 = vunpack.c.l.b16 %v172
    %v725 = vunpack.c.l.b16 %v173
    %v726 = vunpack.c.l.b16 %v174
    %v727 = vunpack.c.l.b16 %v175
    %v728 = vunpack.c.l.b16 %v176
    %v729 = vunpack.c.l.b16 %v177
    %v730 = vunpack.c.l.b16 %v178
    %v731 = vunpack.c.l.b16 %v179
    %v732 = vunpack.c.l.b16 %v180
    %v733 = vunpack.c.l.b16 %v181
    %v734 = vunpack.c.l.b16 %v182
    %v735 = vunpack.c.l.b16 %v183
    %v736 = vunpack.c.l.b16 %v184
    %v737 = vunpack.c.l.b16 %v185
    %v738 = vunpack.c.l.b16 %v186
    %v739 = vunpack.c.l.b16 %v187
    %v740 = vunpack.c.l.b16 %v188
    %v741 = vunpack.c.l.b16 %v189
    %v742 = vunpack.c.l.b16 %v190
    %v743 = vunpack.c.l.b16 %v191
    %v744 = vunpack.c.l.b16 %v192
    %v745 = vunpack.c.l.b16 %v193
    %v746 = vunpack.c.l.b16 %v194
    %v747 = vunpack.c.l.b16 %v195
    %v748 = vunpack.c.l.b16 %v196
    %v749 = vunpack.c.l.b16 %v197
    %v750 = vunpack.c.l.b16 %v198
    %v751 = vunpack.c.l.b16 %v199
    %v752 = vunpack.c.l.b16 %v200
    %v753 = vunpack.c.l.b16 %v201
    %v754 = vunpack.c.l.b16 %v202
    %v755 = vunpack.c.l.b16 %v203
    %v756 = vunpack.c.l.b16 %v204
    %v757 = vunpack.c.l.b16 %v205
    %v758 = vunpack.c.l.b16 %v206
    %v759 = vunpack.c.l.b16 %v207
    %v760 = vunpack.c.l.b16 %v208
    %v761 = vunpack.c.l.b16 %v209
    %v762 = vunpack.c.l.b16 %v210
    %v763 = vunpack.c.l.b16 %v211
    %v764 = vunpack.c.l.b16 %v212
    %v765 = vunpack.c.l.b16 %v213
    %v766 = vunpack.c.l.b16 %v214
    %v767 = vunpack.c.l.b16 %v215
    %v768 = vunpack.c.l.b16 %v216
    %v769 = vunpack.c.l.b16 %v217
    %v770 = vunpack.c.l.b16 %v218
    %v771 = vunpack.c.l.b16 %v219
    %v772 = vunpack.c.l.b16 %v220
    %v773 = vunpack.c.l.b16 %v221
    %v774 = vunpack.c.l.b16 %v222
    %v775 = vunpack.c.l.b16 %v223
    %v776 = vunpack.c.l.b16 %v224
    %v777 = vunpack.c.l.b16 %v225
    %v778 = vunpack.c.l.b16 %v226
    %v779 = vunpack.c.l.b16 %v227
    %v780 = vunpack.c.l.b16 %v228
    %v781 = vunpack.c.l.b16 %v229
    %v782 = vunpack.c.l.b16 %v230
    %v783 = vunpack.c.l.b16 %v231
    %v784 = vunpack.c.l.b16 %v232
    %v785 = vunpack.c.l.b16 %v233
    %v786 = vunpack.c.l.b16 %v234
    %v787 = vunpack.c.l.b16 %v235
    %v788 = vunpack.c.l.b16 %v236
    %v789 = vunpack.c.l.b16 %v237
    %v790 = vunpack.c.l.b16 %v238
    %v791 = vunpack.c.l.b16 %v239
    %v792 = vunpack.c.l.b16 %v240
    %v793 = vunpack.c.l.b16 %v241
    %v794 = vunpack.c.l.b16 %v242
    %v795 = vunpack.c.l.b16 %v243
    %v796 = vunpack.c.l.b16 %v244
    %v797 = vunpack.c.l.b16 %v245
    %v798 = vunpack.c.l.b16 %v246
    %v799 = vunpack.c.l.b16 %v247
    %v800 = vunpack.c.l.b16 %v248
    %v801 = vunpack.c.l.b16 %v249
    %v802 = vunpack.c.l.b16 %v250
    %v803 = vunpack.c.l.b16 %v251
    %v804 = vunpack.c.l.b16 %v252
    %v805 = vunpack.c.l.b16 %v253
    %v806 = vunpack.c.l.b16 %v254
    %v807 = vunpack.c.l.b16 %v255
    %v808 = vunpack.c.l.b16 %v256
    %v809 = vunpack.c.l.b16 %v257
    %v810 = vunpack.c.l.b16 %v258
    %v811 = vunpack.c.l.b16 %v259
    %v812 = vunpack.c.l.b16 %v260
    %v813 = vunpack.c.l.b16 %v261
    %v814 = vunpack.c.l.b16 %v262
    %v815 = vunpack.c.l.b16 %v263
    %v816 = vunpack.c.l.b16 %v264
    %v817 = vunpack.c.l.b16 %v265
    %v818 = vunpack.c.l.b16 %v266
    %v819 = vunpack.c.l.b16 %v267
    %v820 = vunpack.c.l.b16 %v268
    %v821 = vunpack.c.l.b16 %v269
    %v822 = vunpack.c.l.b16 %v270
    %v823 = vunpack.c.l.b16 %v271
    %v824 = vunpack.c.l.b16 %v272
    %v825 = vunpack.c.l.b16 %v273
    %v826 = vunpack.c.l.b16 %v274
    %v827 = vunpack.c.l.b16 %v275
    %v828 = vunpack.c.l.b16 %v276
    %v829 = vunpack.c.l.b16 %v277
    %v830 = vunpack.c.l.b16 %v278
    %v831 = vunpack.c.l.b16 %v279
    %v832 = vunpack.c.l.b16 %v280
    %v833 = vunpack.c.l.b16 %v281
    %v834 = vunpack.c.l.b16 %v282
    %v835 = vunpack.c.l.b16 %v283
    %v836 = vunpack.c.l.b16 %v284
    %v837 = vunpack.c.l.b16 %v285
    %v838 = vunpack.c.l.b16 %v286
    %v839 = vunpack.c.l.b16 %v287
    %v840 = vunpack.c.l.b16 %v288
    %v841 = vunpack.c.l.b16 %v289
    %v842 = vpack.c.b16 %v587, %v586
    %v843 = vpack.c.b16 %v589, %v588
    %v844 = vpack.c.b16 %v591, %v590
    %v845 = vpack.c.b16 %v593, %v592
    %v846 = vpack.c.b16 %v595, %v594
    %v847 = vpack.c.b16 %v597, %v596
    %v848 = vpack.c.b16 %v599, %v598
    %v849 = vpack.c.b16 %v601, %v600
    %v850 = vpack.c.b16 %v603, %v602
    %v851 = vpack.c.b16 %v605, %v604
    %v852 = vpack.c.b16 %v607, %v606
    %v853 = vpack.c.b16 %v609, %v608
    %v854 = vpack.c.b16 %v611, %v610
    %v855 = vpack.c.b16 %v613, %v612
    %v856 = vpack.c.b16 %v615, %v614
    %v857 = vpack.c.b16 %v617, %v616
    %v858 = vpack.c.b16 %v619, %v618
    %v859 = vpack.c.b16 %v621, %v620
    %v860 = vpack.c.b16 %v623, %v622
    %v861 = vpack.c.b16 %v625, %v624
    %v862 = vpack.c.b16 %v627, %v626
    %v863 = vpack.c.b16 %v629, %v628
    %v864 = vpack.c.b16 %v631, %v630
    %v865 = vpack.c.b16 %v633, %v632
    %v866 = vpack.c.b16 %v635, %v634
    %v867 = vpack.c.b16 %v637, %v636
    %v868 = vpack.c.b16 %v639, %v638
    %v869 = vpack.c.b16 %v641, %v640
    %v870 = vpack.c.b16 %v643, %v642
    %v871 = vpack.c.b16 %v645, %v644
    %v872 = vpack.c.b16 %v647, %v646
    %v873 = vpack.c.b16 %v649, %v648
    %v874 = vpack.c.b16 %v651, %v650
    %v875 = vpack.c.b16 %v653, %v652
    %v876 = vpack.c.b16 %v655, %v654
    %v877 = vpack.c.b16 %v657, %v656
    %v878 = vpack.c.b16 %v659, %v658
    %v879 = vpack.c.b16 %v661, %v660
    %v880 = vpack.c.b16 %v663, %v662
    %v881 = vpack.c.b16 %v665, %v664
    %v882 = vpack.c.b16 %v667, %v666
    %v883 = vpack.c.b16 %v669, %v668
    %v884 = vpack.c.b16 %v671, %v670
    %v885 = vpack.c.b16 %v673, %v672
    %v886 = vpack.c.b16 %v675, %v674
    %v887 = vpack.c.b16 %v677, %v676
    %v888 = vpack.c.b16 %v679, %v678
    %v889 = vpack.c.b16 %v681, %v680
    %v890 = vpack.c.b16 %v683, %v682
    %v891 = vpack.c.b16 %v685, %v684
    %v892 = vpack.c.b16 %v687, %v686
    %v893 = vpack.c.b16 %v689, %v688
    %v894 = vpack.c.b16 %v691, %v690
    %v895 = vpack.c.b16 %v693, %v692
    %v896 = vpack.c.b16 %v695, %v694
    %v897 = vpack.c.b16 %v697, %v696
    %v898 = vpack.c.b16 %v699, %v698
    %v899 = vpack.c.b16 %v701, %v700
    %v900 = vpack.c.b16 %v703, %v702
    %v901 = vpack.c.b16 %v705, %v704
    %v902 = vpack.c.b16 %v707, %v706
    %v903 = vpack.c.b16 %v709, %v708
    %v904 = vpack.c.b16 %v711, %v710
    %v905 = vpack.c.b16 %v713, %v712
    %v906 = vpack.c.b16 %v715, %v714
    %v907 = vpack.c.b16 %v717, %v716
    %v908 = vpack.c.b16 %v719, %v718
    %v909 = vpack.c.b16 %v721, %v720
    %v910 = vpack.c.b16 %v723, %v722
    %v911 = vpack.c.b16 %v725, %v724
    %v912 = vpack.c.b16 %v727, %v726
    %v913 = vpack.c.b16 %v729, %v728
    %v914 = vpack.c.b16 %v731, %v730
    %v915 = vpack.c.b16 %v733, %v732
    %v916 = vpack.c.b16 %v735, %v734
    %v917 = vpack.c.b16 %v737, %v736
    %v918 = vpack.c.b16 %v739, %v738
    %v919 = vpack.c.b16 %v741, %v740
    %v920 = vpack.c.b16 %v743, %v742
    %v921 = vpack.c.b16 %v745, %v744
    %v922 = vpack.c.b16 %v747, %v746
    %v923 = vpack.c.b16 %v749, %v748
    %v924 = vpack.c.b16 %v751, %v750
    %v925 = vpack.c.b16 %v753, %v752
    %v926 = vpack.c.b16 %v755, %v754
    %v927 = vpack.c.b16 %v757, %v756
    %v928 = vpack.c.b16 %v759, %v758
    %v929 = vpack.c.b16 %v761, %v760
    %v930 = vpack.c.b16 %v763, %v762
    %v931 = vpack.c.b16 %v765, %v764
    %v932 = vpack.c.b16 %v767, %v766
    %v933 = vpack.c.b16 %v769, %v768
    %v934 = vpack.c.b16 %v771, %v770
    %v935 = vpack.c.b16 %v773, %v772
    %v936 = vpack.c.b16 %v775, %v774
    %v937 = vpack.c.b16 %v777, %v776
    %v938 = vpack.c.b16 %v779, %v778
    %v939 = vpack.c.b16 %v781, %v780
    %v940 = vpack.c.b16 %v783, %v782
    %v941 = vpack.c.b16 %v785, %v784
    %v942 = vpack.c.b16 %v787, %v786
    %v943 = vpack.c.b16 %v789, %v788
    %v944 = vpack.c.b16 %v791, %v790
    %v945 = vpack.c.b16 %v793, %v792
    %v946 = vpack.c.b16 %v795, %v794
    %v947 = vpack.c.b16 %v797, %v796
    %v948 = vpack.c.b16 %v799, %v798
    %v949 = vpack.c.b16 %v801, %v800
    %v950 = vpack.c.b16 %v803, %v802
    %v951 = vpack.c.b16 %v805, %v804
    %v952 = vpack.c.b16 %v807, %v806
    %v953 = vpack.c.b16 %v809, %v808
    %v954 = vpack.c.b16 %v811, %v810
    %v955 = vpack.c.b16 %v813, %v812
    %v956 = vpack.c.b16 %v815, %v814
    %v957 = vpack.c.b16 %v817, %v816
    %v958 = vpack.c.b16 %v819, %v818
    %v959 = vpack.c.b16 %v821, %v820
    %v960 = vpack.c.b16 %v823, %v822
    %v961 = vpack.c.b16 %v825, %v824
    %v962 = vpack.c.b16 %v827, %v826
    %v963 = vpack.c.b16 %v829, %v828
    %v964 = vpack.c.b16 %v831, %v830
    %v965 = vpack.c.b16 %v833, %v832
    %v966 = vpack.c.b16 %v835, %v834
    %v967 = vpack.c.b16 %v837, %v836
    %v968 = vpack.c.b16 %v839, %v838
    %v969 = vpack.c.b16 %v841, %v840
    %1098 = vmatpush.bf16.msra.mxu0 %v849
    %1099 = vmatpush.bf16.msra.mxu0 %v848
    %1100 = vmatpush.bf16.msra.mxu0 %v847
    %1101 = vmatpush.bf16.msra.mxu0 %v846
    %1102 = vmatpush.bf16.msra.mxu0 %v845
    %1103 = vmatpush.bf16.msra.mxu0 %v844
    %1104 = vmatpush.bf16.msra.mxu0 %v843
    %1105 = vmatpush.bf16.msra.mxu0 %v842
    %1106 = vmatmul.bf16.gmra.mxu0 %v296
    %v1107 = vpop.f32.mrf.mxu0
    %v1108 = vadd.f32 %v292, %v1107
    %v1109 = vpop.f32.mrf.mxu0
    %1110 = vdwg.mxu0
    %1111 = vmatpush.bf16.msra.mxu0 %v857
    %1112 = vmatpush.bf16.msra.mxu0 %v856
    %1113 = vmatpush.bf16.msra.mxu0 %v855
    %1114 = vmatpush.bf16.msra.mxu0 %v854
    %1115 = vmatpush.bf16.msra.mxu0 %v853
    %1116 = vmatpush.bf16.msra.mxu0 %v852
    %1117 = vmatpush.bf16.msra.mxu0 %v851
    %1118 = vmatpush.bf16.msra.mxu0 %v850
    %1119 = vmatmul.bf16.gmra.mxu0 %v297
    %v1120 = vpop.f32.mrf.mxu0
    %v1121 = vadd.f32 %v1108, %v1120
    %v1122 = vpop.f32.mrf.mxu0
    %1123 = vdwg.mxu0
    %1124 = vmatpush.bf16.msra.mxu0 %v865
    %1125 = vmatpush.bf16.msra.mxu0 %v864
    %1126 = vmatpush.bf16.msra.mxu0 %v863
    %1127 = vmatpush.bf16.msra.mxu0 %v862
    %1128 = vmatpush.bf16.msra.mxu0 %v861
    %1129 = vmatpush.bf16.msra.mxu0 %v860
    %1130 = vmatpush.bf16.msra.mxu0 %v859
    %1131 = vmatpush.bf16.msra.mxu0 %v858
    %1132 = vmatmul.bf16.gmra.mxu0 %v298
    %v1133 = vpop.f32.mrf.mxu0
    %v1134 = vadd.f32 %v1121, %v1133
    %v1135 = vpop.f32.mrf.mxu0
    %1136 = vdwg.mxu0
    %1137 = vmatpush.bf16.msra.mxu0 %v873
    %1138 = vmatpush.bf16.msra.mxu0 %v872
    %1139 = vmatpush.bf16.msra.mxu0 %v871
    %1140 = vmatpush.bf16.msra.mxu0 %v870
    %1141 = vmatpush.bf16.msra.mxu0 %v869
    %1142 = vmatpush.bf16.msra.mxu0 %v868
    %1143 = vmatpush.bf16.msra.mxu0 %v867
    %1144 = vmatpush.bf16.msra.mxu0 %v866
    %1145 = vmatmul.bf16.gmra.mxu0 %v299
    %v1146 = vpop.f32.mrf.mxu0
    %v1147 = vadd.f32 %v1134, %v1146
    %v1148 = vpop.f32.mrf.mxu0
    %1149 = vdwg.mxu0
    %1150 = vmatpush.bf16.msra.mxu0 %v881
    %1151 = vmatpush.bf16.msra.mxu0 %v880
    %1152 = vmatpush.bf16.msra.mxu0 %v879
    %1153 = vmatpush.bf16.msra.mxu0 %v878
    %1154 = vmatpush.bf16.msra.mxu0 %v877
    %1155 = vmatpush.bf16.msra.mxu0 %v876
    %1156 = vmatpush.bf16.msra.mxu0 %v875
    %1157 = vmatpush.bf16.msra.mxu0 %v874
    %1158 = vmatmul.bf16.gmra.mxu0 %v300
    %v1159 = vpop.f32.mrf.mxu0
    %v1160 = vadd.f32 %v1147, %v1159
    %v1161 = vpop.f32.mrf.mxu0
    %1162 = vdwg.mxu0
    %1163 = vmatpush.bf16.msra.mxu0 %v889
    %1164 = vmatpush.bf16.msra.mxu0 %v888
    %1165 = vmatpush.bf16.msra.mxu0 %v887
    %1166 = vmatpush.bf16.msra.mxu0 %v886
    %1167 = vmatpush.bf16.msra.mxu0 %v885
    %1168 = vmatpush.bf16.msra.mxu0 %v884
    %1169 = vmatpush.bf16.msra.mxu0 %v883
    %1170 = vmatpush.bf16.msra.mxu0 %v882
    %1171 = vmatmul.bf16.gmra.mxu0 %v301
    %v1172 = vpop.f32.mrf.mxu0
    %v1173 = vadd.f32 %v1160, %v1172
    %v1174 = vpop.f32.mrf.mxu0
    %1175 = vdwg.mxu0
    %1176 = vmatpush.bf16.msra.mxu0 %v897
    %1177 = vmatpush.bf16.msra.mxu0 %v896
    %1178 = vmatpush.bf16.msra.mxu0 %v895
    %1179 = vmatpush.bf16.msra.mxu0 %v894
    %1180 = vmatpush.bf16.msra.mxu0 %v893
    %1181 = vmatpush.bf16.msra.mxu0 %v892
    %1182 = vmatpush.bf16.msra.mxu0 %v891
    %1183 = vmatpush.bf16.msra.mxu0 %v890
    %1184 = vmatmul.bf16.gmra.mxu0 %v302
    %v1185 = vpop.f32.mrf.mxu0
    %v1186 = vadd.f32 %v1173, %v1185
    %v1187 = vpop.f32.mrf.mxu0
    %1188 = vdwg.mxu0
    %1189 = vmatpush.bf16.msra.mxu0 %v905
    %1190 = vmatpush.bf16.msra.mxu0 %v904
    %1191 = vmatpush.bf16.msra.mxu0 %v903
    %1192 = vmatpush.bf16.msra.mxu0 %v902
    %1193 = vmatpush.bf16.msra.mxu0 %v901
    %1194 = vmatpush.bf16.msra.mxu0 %v900
    %1195 = vmatpush.bf16.msra.mxu0 %v899
    %1196 = vmatpush.bf16.msra.mxu0 %v898
    %1197 = vmatmul.bf16.gmra.mxu0 %v303
    %v1198 = vpop.f32.mrf.mxu0
    %v1199 = vadd.f32 %v1186, %v1198
    %v1200 = vpop.f32.mrf.mxu0
    %1201 = vdwg.mxu0
    %1202 = vmatpush.bf16.msra.mxu0 %v913
    %1203 = vmatpush.bf16.msra.mxu0 %v912
    %1204 = vmatpush.bf16.msra.mxu0 %v911
    %1205 = vmatpush.bf16.msra.mxu0 %v910
    %1206 = vmatpush.bf16.msra.mxu0 %v909
    %1207 = vmatpush.bf16.msra.mxu0 %v908
    %1208 = vmatpush.bf16.msra.mxu0 %v907
    %1209 = vmatpush.bf16.msra.mxu0 %v906
    %1210 = vmatmul.bf16.gmra.mxu0 %v306
    %v1211 = vpop.f32.mrf.mxu0
    %v1212 = vadd.f32 %v1199, %v1211
    %v1213 = vpop.f32.mrf.mxu0
    %1214 = vdwg.mxu0
    %1215 = vmatpush.bf16.msra.mxu0 %v921
    %1216 = vmatpush.bf16.msra.mxu0 %v920
    %1217 = vmatpush.bf16.msra.mxu0 %v919
    %1218 = vmatpush.bf16.msra.mxu0 %v918
    %1219 = vmatpush.bf16.msra.mxu0 %v917
    %1220 = vmatpush.bf16.msra.mxu0 %v916
    %1221 = vmatpush.bf16.msra.mxu0 %v915
    %1222 = vmatpush.bf16.msra.mxu0 %v914
    %1223 = vmatmul.bf16.gmra.mxu0 %v307
    %v1224 = vpop.f32.mrf.mxu0
    %v1225 = vadd.f32 %v1212, %v1224
    %v1226 = vpop.f32.mrf.mxu0
    %1227 = vdwg.mxu0
    %1228 = vmatpush.bf16.msra.mxu0 %v929
    %1229 = vmatpush.bf16.msra.mxu0 %v928
    %1230 = vmatpush.bf16.msra.mxu0 %v927
    %1231 = vmatpush.bf16.msra.mxu0 %v926
    %1232 = vmatpush.bf16.msra.mxu0 %v925
    %1233 = vmatpush.bf16.msra.mxu0 %v924
    %1234 = vmatpush.bf16.msra.mxu0 %v923
    %1235 = vmatpush.bf16.msra.mxu0 %v922
    %1236 = vmatmul.bf16.gmra.mxu0 %v308
    %v1237 = vpop.f32.mrf.mxu0
    %v1238 = vadd.f32 %v1225, %v1237
    %v1239 = vpop.f32.mrf.mxu0
    %1240 = vdwg.mxu0
    %1241 = vmatpush.bf16.msra.mxu0 %v937
    %1242 = vmatpush.bf16.msra.mxu0 %v936
    %1243 = vmatpush.bf16.msra.mxu0 %v935
    %1244 = vmatpush.bf16.msra.mxu0 %v934
    %1245 = vmatpush.bf16.msra.mxu0 %v933
    %1246 = vmatpush.bf16.msra.mxu0 %v932
    %1247 = vmatpush.bf16.msra.mxu0 %v931
    %1248 = vmatpush.bf16.msra.mxu0 %v930
    %1249 = vmatmul.bf16.gmra.mxu0 %v309
    %v1250 = vpop.f32.mrf.mxu0
    %v1251 = vadd.f32 %v1238, %v1250
    %v1252 = vpop.f32.mrf.mxu0
    %1253 = vdwg.mxu0
    %1254 = vmatpush.bf16.msra.mxu0 %v945
    %1255 = vmatpush.bf16.msra.mxu0 %v944
    %1256 = vmatpush.bf16.msra.mxu0 %v943
    %1257 = vmatpush.bf16.msra.mxu0 %v942
    %1258 = vmatpush.bf16.msra.mxu0 %v941
    %1259 = vmatpush.bf16.msra.mxu0 %v940
    %1260 = vmatpush.bf16.msra.mxu0 %v939
    %1261 = vmatpush.bf16.msra.mxu0 %v938
    %1262 = vmatmul.bf16.gmra.mxu0 %v310
    %v1263 = vpop.f32.mrf.mxu0
    %v1264 = vadd.f32 %v1251, %v1263
    %v1265 = vpop.f32.mrf.mxu0
    %1266 = vdwg.mxu0
    %1267 = vmatpush.bf16.msra.mxu0 %v953
    %1268 = vmatpush.bf16.msra.mxu0 %v952
    %1269 = vmatpush.bf16.msra.mxu0 %v951
    %1270 = vmatpush.bf16.msra.mxu0 %v950
    %1271 = vmatpush.bf16.msra.mxu0 %v949
    %1272 = vmatpush.bf16.msra.mxu0 %v948
    %1273 = vmatpush.bf16.msra.mxu0 %v947
    %1274 = vmatpush.bf16.msra.mxu0 %v946
    %1275 = vmatmul.bf16.gmra.mxu0 %v311
    %v1276 = vpop.f32.mrf.mxu0
    %v1277 = vadd.f32 %v1264, %v1276
    %v1278 = vpop.f32.mrf.mxu0
    %1279 = vdwg.mxu0
    %1280 = vmatpush.bf16.msra.mxu0 %v961
    %1281 = vmatpush.bf16.msra.mxu0 %v960
    %1282 = vmatpush.bf16.msra.mxu0 %v959
    %1283 = vmatpush.bf16.msra.mxu0 %v958
    %1284 = vmatpush.bf16.msra.mxu0 %v957
    %1285 = vmatpush.bf16.msra.mxu0 %v956
    %1286 = vmatpush.bf16.msra.mxu0 %v955
    %1287 = vmatpush.bf16.msra.mxu0 %v954
    %1288 = vmatmul.bf16.gmra.mxu0 %v312
    %v1289 = vpop.f32.mrf.mxu0
    %v1290 = vadd.f32 %v1277, %v1289
    %v1291 = vpop.f32.mrf.mxu0
    %1292 = vdwg.mxu0
    %1293 = vmatpush.bf16.msra.mxu0 %v969
    %1294 = vmatpush.bf16.msra.mxu0 %v968
    %1295 = vmatpush.bf16.msra.mxu0 %v967
    %1296 = vmatpush.bf16.msra.mxu0 %v966
    %1297 = vmatpush.bf16.msra.mxu0 %v965
    %1298 = vmatpush.bf16.msra.mxu0 %v964
    %1299 = vmatpush.bf16.msra.mxu0 %v963
    %1300 = vmatpush.bf16.msra.mxu0 %v962
    %1301 = vmatmul.bf16.gmra.mxu0 %v313
    %v1302 = vpop.f32.mrf.mxu0
    %v1303 = vadd.f32 %v1290, %v1302
    %v1304 = vpop.f32.mrf.mxu0
    %1305 = vdwg.mxu0
    %v1306 = vpack.c.bf16 %v1303, %v1303
    %v1307 = vld [vmem:[%s3] sm:$0xff]
    %v1308 = vld [vmem:[%s3 + $0x8] sm:$0xff]
    %v1309 = vld [vmem:[%s3 + $0x10] sm:$0xff]
    %v1310 = vld [vmem:[%s3 + $0x18] sm:$0xff]
    %v1311 = vld [vmem:[%s3 + $0x20] sm:$0xff]
    %v1312 = vld [vmem:[%s3 + $0x28] sm:$0xff]
    %v1313 = vld [vmem:[%s3 + $0x30] sm:$0xff]
    %v1314 = vld [vmem:[%s3 + $0x38] sm:$0xff]
    %v1315 = vld [vmem:[%s3 + $0x40] sm:$0xff]
    %v1316 = vld [vmem:[%s3 + $0x48] sm:$0xff]
    %v1317 = vld [vmem:[%s3 + $0x50] sm:$0xff]
    %v1318 = vld [vmem:[%s3 + $0x58] sm:$0xff]
    %v1319 = vld [vmem:[%s3 + $0x60] sm:$0xff]
    %v1320 = vld [vmem:[%s3 + $0x68] sm:$0xff]
    %v1321 = vld [vmem:[%s3 + $0x70] sm:$0xff]
    %v1322 = vld [vmem:[%s3 + $0x78] sm:$0xff]
    %v1323 = vld [vmem:[%s3 + $0x80] sm:$0xff]
    %v1324 = vld [vmem:[%s3 + $0x88] sm:$0xff]
    %v1325 = vld [vmem:[%s3 + $0x90] sm:$0xff]
    %v1326 = vld [vmem:[%s3 + $0x98] sm:$0xff]
    %v1327 = vld [vmem:[%s3 + $0xa0] sm:$0xff]
    %v1328 = vld [vmem:[%s3 + $0xa8] sm:$0xff]
    %v1329 = vld [vmem:[%s3 + $0xb0] sm:$0xff]
    %v1330 = vld [vmem:[%s3 + $0xb8] sm:$0xff]
    %v1331 = vld [vmem:[%s3 + $0xc0] sm:$0xff]
    %v1332 = vld [vmem:[%s3 + $0xc8] sm:$0xff]
    %v1333 = vld [vmem:[%s3 + $0xd0] sm:$0xff]
    %v1334 = vld [vmem:[%s3 + $0xd8] sm:$0xff]
    %v1335 = vld [vmem:[%s3 + $0xe0] sm:$0xff]
    %v1336 = vld [vmem:[%s3 + $0xe8] sm:$0xff]
    %v1337 = vld [vmem:[%s3 + $0xf0] sm:$0xff]
    %v1338 = vld [vmem:[%s3 + $0xf8] sm:$0xff]
    %v1339 = vld [vmem:[%s4] sm:$0xf]
    %v1341 = vperm.slane %v1339, 0
    %v1342 = vperm.slane %v1339, 1
    %v1343 = vperm.slane %v1339, 2
    %v1344 = vperm.slane %v1339, 3
    %v1381 = vunpack.c.l.b16 %v1307
    %v1382 = vunpack.c.h.b16 %v1307
    %v1383 = vunpack.c.l.b16 %v1308
    %v1384 = vunpack.c.h.b16 %v1308
    %v1385 = vunpack.c.l.b16 %v1309
    %v1386 = vunpack.c.h.b16 %v1309
    %v1387 = vunpack.c.l.b16 %v1310
    %v1388 = vunpack.c.h.b16 %v1310
    %v1389 = vunpack.c.l.b16 %v1311
    %v1390 = vunpack.c.h.b16 %v1311
    %v1391 = vunpack.c.l.b16 %v1312
    %v1392 = vunpack.c.h.b16 %v1312
    %v1393 = vunpack.c.l.b16 %v1313
    %v1394 = vunpack.c.h.b16 %v1313
    %v1395 = vunpack.c.l.b16 %v1314
    %v1396 = vunpack.c.h.b16 %v1314
    %v1397 = vunpack.c.l.b16 %v1315
    %v1398 = vunpack.c.h.b16 %v1315
    %v1399 = vunpack.c.l.b16 %v1316
    %v1400 = vunpack.c.h.b16 %v1316
    %v1401 = vunpack.c.l.b16 %v1317
    %v1402 = vunpack.c.h.b16 %v1317
    %v1403 = vunpack.c.l.b16 %v1318
    %v1404 = vunpack.c.h.b16 %v1318
    %v1405 = vunpack.c.l.b16 %v1319
    %v1406 = vunpack.c.h.b16 %v1319
    %v1407 = vunpack.c.l.b16 %v1320
    %v1408 = vunpack.c.h.b16 %v1320
    %v1409 = vunpack.c.l.b16 %v1321
    %v1410 = vunpack.c.h.b16 %v1321
    %v1411 = vunpack.c.l.b16 %v1322
    %v1412 = vunpack.c.h.b16 %v1322
    %v1413 = vunpack.c.l.b16 %v1323
    %v1414 = vunpack.c.h.b16 %v1323
    %v1415 = vunpack.c.l.b16 %v1324
    %v1416 = vunpack.c.h.b16 %v1324
    %v1417 = vunpack.c.l.b16 %v1325
    %v1418 = vunpack.c.h.b16 %v1325
    %v1419 = vunpack.c.l.b16 %v1326
    %v1420 = vunpack.c.h.b16 %v1326
    %v1421 = vunpack.c.l.b16 %v1327
    %v1422 = vunpack.c.h.b16 %v1327
    %v1423 = vunpack.c.l.b16 %v1328
    %v1424 = vunpack.c.h.b16 %v1328
    %v1425 = vunpack.c.l.b16 %v1329
    %v1426 = vunpack.c.h.b16 %v1329
    %v1427 = vunpack.c.l.b16 %v1330
    %v1428 = vunpack.c.h.b16 %v1330
    %v1429 = vunpack.c.l.b16 %v1331
    %v1430 = vunpack.c.h.b16 %v1331
    %v1431 = vunpack.c.l.b16 %v1332
    %v1432 = vunpack.c.h.b16 %v1332
    %v1433 = vunpack.c.l.b16 %v1333
    %v1434 = vunpack.c.h.b16 %v1333
    %v1435 = vunpack.c.l.b16 %v1334
    %v1436 = vunpack.c.h.b16 %v1334
    %v1437 = vunpack.c.l.b16 %v1335
    %v1438 = vunpack.c.h.b16 %v1335
    %v1439 = vunpack.c.l.b16 %v1336
    %v1440 = vunpack.c.h.b16 %v1336
    %v1441 = vunpack.c.l.b16 %v1337
    %v1442 = vunpack.c.h.b16 %v1337
    %v1443 = vunpack.c.l.b16 %v1338
    %v1444 = vunpack.c.h.b16 %v1338
    %v1445 = vpack.c.b16 %v1385, %v1381
    %v1446 = vpack.c.b16 %v1386, %v1382
    %v1447 = vpack.c.b16 %v1387, %v1383
    %v1448 = vpack.c.b16 %v1388, %v1384
    %v1449 = vpack.c.b16 %v1393, %v1389
    %v1450 = vpack.c.b16 %v1394, %v1390
    %v1451 = vpack.c.b16 %v1395, %v1391
    %v1452 = vpack.c.b16 %v1396, %v1392
    %v1453 = vpack.c.b16 %v1401, %v1397
    %v1454 = vpack.c.b16 %v1402, %v1398
    %v1455 = vpack.c.b16 %v1403, %v1399
    %v1456 = vpack.c.b16 %v1404, %v1400
    %v1457 = vpack.c.b16 %v1409, %v1405
    %v1458 = vpack.c.b16 %v1410, %v1406
    %v1459 = vpack.c.b16 %v1411, %v1407
    %v1460 = vpack.c.b16 %v1412, %v1408
    %v1461 = vpack.c.b16 %v1417, %v1413
    %v1462 = vpack.c.b16 %v1418, %v1414
    %v1463 = vpack.c.b16 %v1419, %v1415
    %v1464 = vpack.c.b16 %v1420, %v1416
    %v1465 = vpack.c.b16 %v1425, %v1421
    %v1466 = vpack.c.b16 %v1426, %v1422
    %v1467 = vpack.c.b16 %v1427, %v1423
    %v1468 = vpack.c.b16 %v1428, %v1424
    %v1469 = vpack.c.b16 %v1433, %v1429
    %v1470 = vpack.c.b16 %v1434, %v1430
    %v1471 = vpack.c.b16 %v1435, %v1431
    %v1472 = vpack.c.b16 %v1436, %v1432
    %v1473 = vpack.c.b16 %v1441, %v1437
    %v1474 = vpack.c.b16 %v1442, %v1438
    %v1475 = vpack.c.b16 %v1443, %v1439
    %v1476 = vpack.c.b16 %v1444, %v1440
    %1509 = vmatpush.bf16.msra.mxu0 %v1473
    %1510 = vmatpush.bf16.msra.mxu0 %v1469
    %1511 = vmatpush.bf16.msra.mxu0 %v1465
    %1512 = vmatpush.bf16.msra.mxu0 %v1461
    %1513 = vmatpush.bf16.msra.mxu0 %v1457
    %1514 = vmatpush.bf16.msra.mxu0 %v1453
    %1515 = vmatpush.bf16.msra.mxu0 %v1449
    %1516 = vmatpush.bf16.msra.mxu0 %v1445
    %1517 = vmatmul.bf16.gmra.mxu0 %v1306
    %v1518 = vpop.f32.mrf.mxu0
    %v1519 = vadd.f32 %v1341, %v1518
    %v1520 = vpop.f32.mrf.mxu0
    %1521 = vdwg.mxu0
    %1522 = vmatpush.bf16.msra.mxu0 %v1474
    %1523 = vmatpush.bf16.msra.mxu0 %v1470
    %1524 = vmatpush.bf16.msra.mxu0 %v1466
    %1525 = vmatpush.bf16.msra.mxu0 %v1462
    %1526 = vmatpush.bf16.msra.mxu0 %v1458
    %1527 = vmatpush.bf16.msra.mxu0 %v1454
    %1528 = vmatpush.bf16.msra.mxu0 %v1450
    %1529 = vmatpush.bf16.msra.mxu0 %v1446
    %1530 = vmatmul.bf16.gmra.mxu0 %v1306
    %v1531 = vpop.f32.mrf.mxu0
    %v1532 = vadd.f32 %v1342, %v1531
    %v1533 = vpop.f32.mrf.mxu0
    %1534 = vdwg.mxu0
    %1535 = vmatpush.bf16.msra.mxu0 %v1475
    %1536 = vmatpush.bf16.msra.mxu0 %v1471
    %1537 = vmatpush.bf16.msra.mxu0 %v1467
    %1538 = vmatpush.bf16.msra.mxu0 %v1463
    %1539 = vmatpush.bf16.msra.mxu0 %v1459
    %1540 = vmatpush.bf16.msra.mxu0 %v1455
    %1541 = vmatpush.bf16.msra.mxu0 %v1451
    %1542 = vmatpush.bf16.msra.mxu0 %v1447
    %1543 = vmatmul.bf16.gmra.mxu0 %v1306
    %v1544 = vpop.f32.mrf.mxu0
    %v1545 = vadd.f32 %v1343, %v1544
    %v1546 = vpop.f32.mrf.mxu0
    %1547 = vdwg.mxu0
    %1548 = vmatpush.bf16.msra.mxu0 %v1476
    %1549 = vmatpush.bf16.msra.mxu0 %v1472
    %1550 = vmatpush.bf16.msra.mxu0 %v1468
    %1551 = vmatpush.bf16.msra.mxu0 %v1464
    %1552 = vmatpush.bf16.msra.mxu0 %v1460
    %1553 = vmatpush.bf16.msra.mxu0 %v1456
    %1554 = vmatpush.bf16.msra.mxu0 %v1452
    %1555 = vmatpush.bf16.msra.mxu0 %v1448
    %1556 = vmatmul.bf16.gmra.mxu0 %v1306
    %v1557 = vpop.f32.mrf.mxu0
    %v1558 = vadd.f32 %v1344, %v1557
    %v1559 = vpop.f32.mrf.mxu0
    %1560 = vdwg.mxu0
    %v1561 = vmul.f32 %v1532, 1.442695
    %v1562 = vpow.pop %v1561
    %v1563 = vmul.f32 %v1558, 1.442695
    %v1564 = vpow.pop %v1563
    %v1565 = vld [vmem:[%s7] sm:$0xf]
    %v1566 = vmul.f32 %v1565, %v1562
    %v1567 = vadd.f32 %v1519, %v1566
    %v1569 = vrot.slane %v1565, 2
    %v1571 = vmul.f32 %v1569, %v1564
    %v1572 = vadd.f32 %v1545, %v1571
    %v1573 = vpack.c.bf16 %v1567, %v1567
    %v1574 = vpack.c.bf16 %v1572, %v1572
    %v1575 = vld [vmem:[%s5] sm:$0xff]
    %v1576 = vld [vmem:[%s5 + $0x8] sm:$0xff]
    %v1577 = vld [vmem:[%s5 + $0x10] sm:$0xff]
    %v1578 = vld [vmem:[%s5 + $0x18] sm:$0xff]
    %v1579 = vld [vmem:[%s5 + $0x20] sm:$0xff]
    %v1580 = vld [vmem:[%s5 + $0x28] sm:$0xff]
    %v1581 = vld [vmem:[%s5 + $0x30] sm:$0xff]
    %v1582 = vld [vmem:[%s5 + $0x38] sm:$0xff]
    %v1583 = vld [vmem:[%s5 + $0x40] sm:$0xff]
    %v1584 = vld [vmem:[%s5 + $0x48] sm:$0xff]
    %v1585 = vld [vmem:[%s5 + $0x50] sm:$0xff]
    %v1586 = vld [vmem:[%s5 + $0x58] sm:$0xff]
    %v1587 = vld [vmem:[%s5 + $0x60] sm:$0xff]
    %v1588 = vld [vmem:[%s5 + $0x68] sm:$0xff]
    %v1589 = vld [vmem:[%s5 + $0x70] sm:$0xff]
    %v1590 = vld [vmem:[%s5 + $0x78] sm:$0xff]
    %v1591 = vld [vmem:[%s5 + $0x80] sm:$0xff]
    %v1592 = vld [vmem:[%s5 + $0x88] sm:$0xff]
    %v1593 = vld [vmem:[%s5 + $0x90] sm:$0xff]
    %v1594 = vld [vmem:[%s5 + $0x98] sm:$0xff]
    %v1595 = vld [vmem:[%s5 + $0xa0] sm:$0xff]
    %v1596 = vld [vmem:[%s5 + $0xa8] sm:$0xff]
    %v1597 = vld [vmem:[%s5 + $0xb0] sm:$0xff]
    %v1598 = vld [vmem:[%s5 + $0xb8] sm:$0xff]
    %v1599 = vld [vmem:[%s5 + $0xc0] sm:$0xff]
    %v1600 = vld [vmem:[%s5 + $0xc8] sm:$0xff]
    %v1601 = vld [vmem:[%s5 + $0xd0] sm:$0xff]
    %v1602 = vld [vmem:[%s5 + $0xd8] sm:$0xff]
    %v1603 = vld [vmem:[%s5 + $0xe0] sm:$0xff]
    %v1604 = vld [vmem:[%s5 + $0xe8] sm:$0xff]
    %v1605 = vld [vmem:[%s5 + $0xf0] sm:$0xff]
    %v1606 = vld [vmem:[%s5 + $0xf8] sm:$0xff]
    %v1607 = vld [vmem:[%s5 + $0x100] sm:$0xff]
    %v1608 = vld [vmem:[%s5 + $0x108] sm:$0xff]
    %v1609 = vld [vmem:[%s5 + $0x110] sm:$0xff]
    %v1610 = vld [vmem:[%s5 + $0x118] sm:$0xff]
    %v1611 = vld [vmem:[%s5 + $0x120] sm:$0xff]
    %v1612 = vld [vmem:[%s5 + $0x128] sm:$0xff]
    %v1613 = vld [vmem:[%s5 + $0x130] sm:$0xff]
    %v1614 = vld [vmem:[%s5 + $0x138] sm:$0xff]
    %v1615 = vld [vmem:[%s5 + $0x140] sm:$0xff]
    %v1616 = vld [vmem:[%s5 + $0x148] sm:$0xff]
    %v1617 = vld [vmem:[%s5 + $0x150] sm:$0xff]
    %v1618 = vld [vmem:[%s5 + $0x158] sm:$0xff]
    %v1619 = vld [vmem:[%s5 + $0x160] sm:$0xff]
    %v1620 = vld [vmem:[%s5 + $0x168] sm:$0xff]
    %v1621 = vld [vmem:[%s5 + $0x170] sm:$0xff]
    %v1622 = vld [vmem:[%s5 + $0x178] sm:$0xff]
    %v1623 = vld [vmem:[%s5 + $0x180] sm:$0xff]
    %v1624 = vld [vmem:[%s5 + $0x188] sm:$0xff]
    %v1625 = vld [vmem:[%s5 + $0x190] sm:$0xff]
    %v1626 = vld [vmem:[%s5 + $0x198] sm:$0xff]
    %v1627 = vld [vmem:[%s5 + $0x1a0] sm:$0xff]
    %v1628 = vld [vmem:[%s5 + $0x1a8] sm:$0xff]
    %v1629 = vld [vmem:[%s5 + $0x1b0] sm:$0xff]
    %v1630 = vld [vmem:[%s5 + $0x1b8] sm:$0xff]
    %v1631 = vld [vmem:[%s5 + $0x1c0] sm:$0xff]
    %v1632 = vld [vmem:[%s5 + $0x1c8] sm:$0xff]
    %v1633 = vld [vmem:[%s5 + $0x1d0] sm:$0xff]
    %v1634 = vld [vmem:[%s5 + $0x1d8] sm:$0xff]
    %v1635 = vld [vmem:[%s5 + $0x1e0] sm:$0xff]
    %v1636 = vld [vmem:[%s5 + $0x1e8] sm:$0xff]
    %v1637 = vld [vmem:[%s5 + $0x1f0] sm:$0xff]
    %v1638 = vld [vmem:[%s5 + $0x1f8] sm:$0xff]
    %v1639 = vld [vmem:[%s5 + $0x200] sm:$0xff]
    %v1640 = vld [vmem:[%s5 + $0x208] sm:$0xff]
    %v1641 = vld [vmem:[%s5 + $0x210] sm:$0xff]
    %v1642 = vld [vmem:[%s5 + $0x218] sm:$0xff]
    %v1643 = vld [vmem:[%s5 + $0x220] sm:$0xff]
    %v1644 = vld [vmem:[%s5 + $0x228] sm:$0xff]
    %v1645 = vld [vmem:[%s5 + $0x230] sm:$0xff]
    %v1646 = vld [vmem:[%s5 + $0x238] sm:$0xff]
    %v1647 = vld [vmem:[%s5 + $0x240] sm:$0xff]
    %v1648 = vld [vmem:[%s5 + $0x248] sm:$0xff]
    %v1649 = vld [vmem:[%s5 + $0x250] sm:$0xff]
    %v1650 = vld [vmem:[%s5 + $0x258] sm:$0xff]
    %v1651 = vld [vmem:[%s5 + $0x260] sm:$0xff]
    %v1652 = vld [vmem:[%s5 + $0x268] sm:$0xff]
    %v1653 = vld [vmem:[%s5 + $0x270] sm:$0xff]
    %v1654 = vld [vmem:[%s5 + $0x278] sm:$0xff]
    %v1655 = vld [vmem:[%s5 + $0x280] sm:$0xff]
    %v1656 = vld [vmem:[%s5 + $0x288] sm:$0xff]
    %v1657 = vld [vmem:[%s5 + $0x290] sm:$0xff]
    %v1658 = vld [vmem:[%s5 + $0x298] sm:$0xff]
    %v1659 = vld [vmem:[%s5 + $0x2a0] sm:$0xff]
    %v1660 = vld [vmem:[%s5 + $0x2a8] sm:$0xff]
    %v1661 = vld [vmem:[%s5 + $0x2b0] sm:$0xff]
    %v1662 = vld [vmem:[%s5 + $0x2b8] sm:$0xff]
    %v1663 = vld [vmem:[%s5 + $0x2c0] sm:$0xff]
    %v1664 = vld [vmem:[%s5 + $0x2c8] sm:$0xff]
    %v1665 = vld [vmem:[%s5 + $0x2d0] sm:$0xff]
    %v1666 = vld [vmem:[%s5 + $0x2d8] sm:$0xff]
    %v1667 = vld [vmem:[%s5 + $0x2e0] sm:$0xff]
    %v1668 = vld [vmem:[%s5 + $0x2e8] sm:$0xff]
    %v1669 = vld [vmem:[%s5 + $0x2f0] sm:$0xff]
    %v1670 = vld [vmem:[%s5 + $0x2f8] sm:$0xff]
    %v1671 = vld [vmem:[%s5 + $0x300] sm:$0xff]
    %v1672 = vld [vmem:[%s5 + $0x308] sm:$0xff]
    %v1673 = vld [vmem:[%s5 + $0x310] sm:$0xff]
    %v1674 = vld [vmem:[%s5 + $0x318] sm:$0xff]
    %v1675 = vld [vmem:[%s5 + $0x320] sm:$0xff]
    %v1676 = vld [vmem:[%s5 + $0x328] sm:$0xff]
    %v1677 = vld [vmem:[%s5 + $0x330] sm:$0xff]
    %v1678 = vld [vmem:[%s5 + $0x338] sm:$0xff]
    %v1679 = vld [vmem:[%s5 + $0x340] sm:$0xff]
    %v1680 = vld [vmem:[%s5 + $0x348] sm:$0xff]
    %v1681 = vld [vmem:[%s5 + $0x350] sm:$0xff]
    %v1682 = vld [vmem:[%s5 + $0x358] sm:$0xff]
    %v1683 = vld [vmem:[%s5 + $0x360] sm:$0xff]
    %v1684 = vld [vmem:[%s5 + $0x368] sm:$0xff]
    %v1685 = vld [vmem:[%s5 + $0x370] sm:$0xff]
    %v1686 = vld [vmem:[%s5 + $0x378] sm:$0xff]
    %v1687 = vld [vmem:[%s5 + $0x380] sm:$0xff]
    %v1688 = vld [vmem:[%s5 + $0x388] sm:$0xff]
    %v1689 = vld [vmem:[%s5 + $0x390] sm:$0xff]
    %v1690 = vld [vmem:[%s5 + $0x398] sm:$0xff]
    %v1691 = vld [vmem:[%s5 + $0x3a0] sm:$0xff]
    %v1692 = vld [vmem:[%s5 + $0x3a8] sm:$0xff]
    %v1693 = vld [vmem:[%s5 + $0x3b0] sm:$0xff]
    %v1694 = vld [vmem:[%s5 + $0x3b8] sm:$0xff]
    %v1695 = vld [vmem:[%s5 + $0x3c0] sm:$0xff]
    %v1696 = vld [vmem:[%s5 + $0x3c8] sm:$0xff]
    %v1697 = vld [vmem:[%s5 + $0x3d0] sm:$0xff]
    %v1698 = vld [vmem:[%s5 + $0x3d8] sm:$0xff]
    %v1699 = vld [vmem:[%s5 + $0x3e0] sm:$0xff]
    %v1700 = vld [vmem:[%s5 + $0x3e8] sm:$0xff]
    %v1701 = vld [vmem:[%s5 + $0x3f0] sm:$0xff]
    %v1702 = vld [vmem:[%s5 + $0x3f8] sm:$0xff]
    %v1703 = vld [vmem:[%s5 + $0x400] sm:$0xff]
    %v1704 = vld [vmem:[%s5 + $0x408] sm:$0xff]
    %v1705 = vld [vmem:[%s5 + $0x410] sm:$0xff]
    %v1706 = vld [vmem:[%s5 + $0x418] sm:$0xff]
    %v1707 = vld [vmem:[%s5 + $0x420] sm:$0xff]
    %v1708 = vld [vmem:[%s5 + $0x428] sm:$0xff]
    %v1709 = vld [vmem:[%s5 + $0x430] sm:$0xff]
    %v1710 = vld [vmem:[%s5 + $0x438] sm:$0xff]
    %v1711 = vld [vmem:[%s5 + $0x440] sm:$0xff]
    %v1712 = vld [vmem:[%s5 + $0x448] sm:$0xff]
    %v1713 = vld [vmem:[%s5 + $0x450] sm:$0xff]
    %v1714 = vld [vmem:[%s5 + $0x458] sm:$0xff]
    %v1715 = vld [vmem:[%s5 + $0x460] sm:$0xff]
    %v1716 = vld [vmem:[%s5 + $0x468] sm:$0xff]
    %v1717 = vld [vmem:[%s5 + $0x470] sm:$0xff]
    %v1718 = vld [vmem:[%s5 + $0x478] sm:$0xff]
    %v1719 = vld [vmem:[%s5 + $0x480] sm:$0xff]
    %v1720 = vld [vmem:[%s5 + $0x488] sm:$0xff]
    %v1721 = vld [vmem:[%s5 + $0x490] sm:$0xff]
    %v1722 = vld [vmem:[%s5 + $0x498] sm:$0xff]
    %v1723 = vld [vmem:[%s5 + $0x4a0] sm:$0xff]
    %v1724 = vld [vmem:[%s5 + $0x4a8] sm:$0xff]
    %v1725 = vld [vmem:[%s5 + $0x4b0] sm:$0xff]
    %v1726 = vld [vmem:[%s5 + $0x4b8] sm:$0xff]
    %v1727 = vld [vmem:[%s5 + $0x4c0] sm:$0xff]
    %v1728 = vld [vmem:[%s5 + $0x4c8] sm:$0xff]
    %v1729 = vld [vmem:[%s5 + $0x4d0] sm:$0xff]
    %v1730 = vld [vmem:[%s5 + $0x4d8] sm:$0xff]
    %v1731 = vld [vmem:[%s5 + $0x4e0] sm:$0xff]
    %v1732 = vld [vmem:[%s5 + $0x4e8] sm:$0xff]
    %v1733 = vld [vmem:[%s5 + $0x4f0] sm:$0xff]
    %v1734 = vld [vmem:[%s5 + $0x4f8] sm:$0xff]
    %v1735 = vld [vmem:[%s5 + $0x500] sm:$0xff]
    %v1736 = vld [vmem:[%s5 + $0x508] sm:$0xff]
    %v1737 = vld [vmem:[%s5 + $0x510] sm:$0xff]
    %v1738 = vld [vmem:[%s5 + $0x518] sm:$0xff]
    %v1739 = vld [vmem:[%s5 + $0x520] sm:$0xff]
    %v1740 = vld [vmem:[%s5 + $0x528] sm:$0xff]
    %v1741 = vld [vmem:[%s5 + $0x530] sm:$0xff]
    %v1742 = vld [vmem:[%s5 + $0x538] sm:$0xff]
    %v1743 = vld [vmem:[%s5 + $0x540] sm:$0xff]
    %v1744 = vld [vmem:[%s5 + $0x548] sm:$0xff]
    %v1745 = vld [vmem:[%s5 + $0x550] sm:$0xff]
    %v1746 = vld [vmem:[%s5 + $0x558] sm:$0xff]
    %v1747 = vld [vmem:[%s5 + $0x560] sm:$0xff]
    %v1748 = vld [vmem:[%s5 + $0x568] sm:$0xff]
    %v1749 = vld [vmem:[%s5 + $0x570] sm:$0xff]
    %v1750 = vld [vmem:[%s5 + $0x578] sm:$0xff]
    %v1751 = vld [vmem:[%s5 + $0x580] sm:$0xff]
    %v1752 = vld [vmem:[%s5 + $0x588] sm:$0xff]
    %v1753 = vld [vmem:[%s5 + $0x590] sm:$0xff]
    %v1754 = vld [vmem:[%s5 + $0x598] sm:$0xff]
    %v1755 = vld [vmem:[%s5 + $0x5a0] sm:$0xff]
    %v1756 = vld [vmem:[%s5 + $0x5a8] sm:$0xff]
    %v1757 = vld [vmem:[%s5 + $0x5b0] sm:$0xff]
    %v1758 = vld [vmem:[%s5 + $0x5b8] sm:$0xff]
    %v1759 = vld [vmem:[%s5 + $0x5c0] sm:$0xff]
    %v1760 = vld [vmem:[%s5 + $0x5c8] sm:$0xff]
    %v1761 = vld [vmem:[%s5 + $0x5d0] sm:$0xff]
    %v1762 = vld [vmem:[%s5 + $0x5d8] sm:$0xff]
    %v1763 = vld [vmem:[%s5 + $0x5e0] sm:$0xff]
    %v1764 = vld [vmem:[%s5 + $0x5e8] sm:$0xff]
    %v1765 = vld [vmem:[%s5 + $0x5f0] sm:$0xff]
    %v1766 = vld [vmem:[%s5 + $0x5f8] sm:$0xff]
    %v1767 = vld [vmem:[%s5 + $0x600] sm:$0xff]
    %v1768 = vld [vmem:[%s5 + $0x608] sm:$0xff]
    %v1769 = vld [vmem:[%s5 + $0x610] sm:$0xff]
    %v1770 = vld [vmem:[%s5 + $0x618] sm:$0xff]
    %v1771 = vld [vmem:[%s5 + $0x620] sm:$0xff]
    %v1772 = vld [vmem:[%s5 + $0x628] sm:$0xff]
    %v1773 = vld [vmem:[%s5 + $0x630] sm:$0xff]
    %v1774 = vld [vmem:[%s5 + $0x638] sm:$0xff]
    %v1775 = vld [vmem:[%s5 + $0x640] sm:$0xff]
    %v1776 = vld [vmem:[%s5 + $0x648] sm:$0xff]
    %v1777 = vld [vmem:[%s5 + $0x650] sm:$0xff]
    %v1778 = vld [vmem:[%s5 + $0x658] sm:$0xff]
    %v1779 = vld [vmem:[%s5 + $0x660] sm:$0xff]
    %v1780 = vld [vmem:[%s5 + $0x668] sm:$0xff]
    %v1781 = vld [vmem:[%s5 + $0x670] sm:$0xff]
    %v1782 = vld [vmem:[%s5 + $0x678] sm:$0xff]
    %v1783 = vld [vmem:[%s5 + $0x680] sm:$0xff]
    %v1784 = vld [vmem:[%s5 + $0x688] sm:$0xff]
    %v1785 = vld [vmem:[%s5 + $0x690] sm:$0xff]
    %v1786 = vld [vmem:[%s5 + $0x698] sm:$0xff]
    %v1787 = vld [vmem:[%s5 + $0x6a0] sm:$0xff]
    %v1788 = vld [vmem:[%s5 + $0x6a8] sm:$0xff]
    %v1789 = vld [vmem:[%s5 + $0x6b0] sm:$0xff]
    %v1790 = vld [vmem:[%s5 + $0x6b8] sm:$0xff]
    %v1791 = vld [vmem:[%s5 + $0x6c0] sm:$0xff]
    %v1792 = vld [vmem:[%s5 + $0x6c8] sm:$0xff]
    %v1793 = vld [vmem:[%s5 + $0x6d0] sm:$0xff]
    %v1794 = vld [vmem:[%s5 + $0x6d8] sm:$0xff]
    %v1795 = vld [vmem:[%s5 + $0x6e0] sm:$0xff]
    %v1796 = vld [vmem:[%s5 + $0x6e8] sm:$0xff]
    %v1797 = vld [vmem:[%s5 + $0x6f0] sm:$0xff]
    %v1798 = vld [vmem:[%s5 + $0x6f8] sm:$0xff]
    %v1799 = vld [vmem:[%s5 + $0x700] sm:$0xff]
    %v1800 = vld [vmem:[%s5 + $0x708] sm:$0xff]
    %v1801 = vld [vmem:[%s5 + $0x710] sm:$0xff]
    %v1802 = vld [vmem:[%s5 + $0x718] sm:$0xff]
    %v1803 = vld [vmem:[%s5 + $0x720] sm:$0xff]
    %v1804 = vld [vmem:[%s5 + $0x728] sm:$0xff]
    %v1805 = vld [vmem:[%s5 + $0x730] sm:$0xff]
    %v1806 = vld [vmem:[%s5 + $0x738] sm:$0xff]
    %v1807 = vld [vmem:[%s5 + $0x740] sm:$0xff]
    %v1808 = vld [vmem:[%s5 + $0x748] sm:$0xff]
    %v1809 = vld [vmem:[%s5 + $0x750] sm:$0xff]
    %v1810 = vld [vmem:[%s5 + $0x758] sm:$0xff]
    %v1811 = vld [vmem:[%s5 + $0x760] sm:$0xff]
    %v1812 = vld [vmem:[%s5 + $0x768] sm:$0xff]
    %v1813 = vld [vmem:[%s5 + $0x770] sm:$0xff]
    %v1814 = vld [vmem:[%s5 + $0x778] sm:$0xff]
    %v1815 = vld [vmem:[%s5 + $0x780] sm:$0xff]
    %v1816 = vld [vmem:[%s5 + $0x788] sm:$0xff]
    %v1817 = vld [vmem:[%s5 + $0x790] sm:$0xff]
    %v1818 = vld [vmem:[%s5 + $0x798] sm:$0xff]
    %v1819 = vld [vmem:[%s5 + $0x7a0] sm:$0xff]
    %v1820 = vld [vmem:[%s5 + $0x7a8] sm:$0xff]
    %v1821 = vld [vmem:[%s5 + $0x7b0] sm:$0xff]
    %v1822 = vld [vmem:[%s5 + $0x7b8] sm:$0xff]
    %v1823 = vld [vmem:[%s5 + $0x7c0] sm:$0xff]
    %v1824 = vld [vmem:[%s5 + $0x7c8] sm:$0xff]
    %v1825 = vld [vmem:[%s5 + $0x7d0] sm:$0xff]
    %v1826 = vld [vmem:[%s5 + $0x7d8] sm:$0xff]
    %v1827 = vld [vmem:[%s5 + $0x7e0] sm:$0xff]
    %v1828 = vld [vmem:[%s5 + $0x7e8] sm:$0xff]
    %v1829 = vld [vmem:[%s5 + $0x7f0] sm:$0xff]
    %v1830 = vld [vmem:[%s5 + $0x7f8] sm:$0xff]
    %v1831 = vld [vmem:[%s5 + $0x800] sm:$0xff]
    %v1832 = vld [vmem:[%s5 + $0x808] sm:$0xff]
    %v1833 = vld [vmem:[%s5 + $0x810] sm:$0xff]
    %v1834 = vld [vmem:[%s5 + $0x818] sm:$0xff]
    %v1835 = vld [vmem:[%s5 + $0x820] sm:$0xff]
    %v1836 = vld [vmem:[%s5 + $0x828] sm:$0xff]
    %v1837 = vld [vmem:[%s5 + $0x830] sm:$0xff]
    %v1838 = vld [vmem:[%s5 + $0x838] sm:$0xff]
    %v1839 = vld [vmem:[%s5 + $0x840] sm:$0xff]
    %v1840 = vld [vmem:[%s5 + $0x848] sm:$0xff]
    %v1841 = vld [vmem:[%s5 + $0x850] sm:$0xff]
    %v1842 = vld [vmem:[%s5 + $0x858] sm:$0xff]
    %v1843 = vld [vmem:[%s5 + $0x860] sm:$0xff]
    %v1844 = vld [vmem:[%s5 + $0x868] sm:$0xff]
    %v1845 = vld [vmem:[%s5 + $0x870] sm:$0xff]
    %v1846 = vld [vmem:[%s5 + $0x878] sm:$0xff]
    %v1847 = vld [vmem:[%s5 + $0x880] sm:$0xff]
    %v1848 = vld [vmem:[%s5 + $0x888] sm:$0xff]
    %v1849 = vld [vmem:[%s5 + $0x890] sm:$0xff]
    %v1850 = vld [vmem:[%s5 + $0x898] sm:$0xff]
    %v1851 = vld [vmem:[%s5 + $0x8a0] sm:$0xff]
    %v1852 = vld [vmem:[%s5 + $0x8a8] sm:$0xff]
    %v1853 = vld [vmem:[%s5 + $0x8b0] sm:$0xff]
    %v1854 = vld [vmem:[%s5 + $0x8b8] sm:$0xff]
    %v1855 = vld [vmem:[%s5 + $0x8c0] sm:$0xff]
    %v1856 = vld [vmem:[%s5 + $0x8c8] sm:$0xff]
    %v1857 = vld [vmem:[%s5 + $0x8d0] sm:$0xff]
    %v1858 = vld [vmem:[%s5 + $0x8d8] sm:$0xff]
    %v1859 = vld [vmem:[%s5 + $0x8e0] sm:$0xff]
    %v1860 = vld [vmem:[%s5 + $0x8e8] sm:$0xff]
    %v1861 = vld [vmem:[%s5 + $0x8f0] sm:$0xff]
    %v1862 = vld [vmem:[%s5 + $0x8f8] sm:$0xff]
    %v1863 = vld [vmem:[%s5 + $0x900] sm:$0xff]
    %v1864 = vld [vmem:[%s5 + $0x908] sm:$0xff]
    %v1865 = vld [vmem:[%s5 + $0x910] sm:$0xff]
    %v1866 = vld [vmem:[%s5 + $0x918] sm:$0xff]
    %v1867 = vld [vmem:[%s5 + $0x920] sm:$0xff]
    %v1868 = vld [vmem:[%s5 + $0x928] sm:$0xff]
    %v1869 = vld [vmem:[%s5 + $0x930] sm:$0xff]
    %v1870 = vld [vmem:[%s5 + $0x938] sm:$0xff]
    %v1871 = vld [vmem:[%s5 + $0x940] sm:$0xff]
    %v1872 = vld [vmem:[%s5 + $0x948] sm:$0xff]
    %v1873 = vld [vmem:[%s5 + $0x950] sm:$0xff]
    %v1874 = vld [vmem:[%s5 + $0x958] sm:$0xff]
    %v1875 = vld [vmem:[%s5 + $0x960] sm:$0xff]
    %v1876 = vld [vmem:[%s5 + $0x968] sm:$0xff]
    %v1877 = vld [vmem:[%s5 + $0x970] sm:$0xff]
    %v1878 = vld [vmem:[%s5 + $0x978] sm:$0xff]
    %v1879 = vld [vmem:[%s5 + $0x980] sm:$0xff]
    %v1880 = vld [vmem:[%s5 + $0x988] sm:$0xff]
    %v1881 = vld [vmem:[%s5 + $0x990] sm:$0xff]
    %v1882 = vld [vmem:[%s5 + $0x998] sm:$0xff]
    %v1883 = vld [vmem:[%s5 + $0x9a0] sm:$0xff]
    %v1884 = vld [vmem:[%s5 + $0x9a8] sm:$0xff]
    %v1885 = vld [vmem:[%s5 + $0x9b0] sm:$0xff]
    %v1886 = vld [vmem:[%s5 + $0x9b8] sm:$0xff]
    %v1887 = vld [vmem:[%s5 + $0x9c0] sm:$0xff]
    %v1888 = vld [vmem:[%s5 + $0x9c8] sm:$0xff]
    %v1889 = vld [vmem:[%s5 + $0x9d0] sm:$0xff]
    %v1890 = vld [vmem:[%s5 + $0x9d8] sm:$0xff]
    %v1891 = vld [vmem:[%s5 + $0x9e0] sm:$0xff]
    %v1892 = vld [vmem:[%s5 + $0x9e8] sm:$0xff]
    %v1893 = vld [vmem:[%s5 + $0x9f0] sm:$0xff]
    %v1894 = vld [vmem:[%s5 + $0x9f8] sm:$0xff]
    %v1895 = vld [vmem:[%s5 + $0xa00] sm:$0xff]
    %v1896 = vld [vmem:[%s5 + $0xa08] sm:$0xff]
    %v1897 = vld [vmem:[%s5 + $0xa10] sm:$0xff]
    %v1898 = vld [vmem:[%s5 + $0xa18] sm:$0xff]
    %v1899 = vld [vmem:[%s5 + $0xa20] sm:$0xff]
    %v1900 = vld [vmem:[%s5 + $0xa28] sm:$0xff]
    %v1901 = vld [vmem:[%s5 + $0xa30] sm:$0xff]
    %v1902 = vld [vmem:[%s5 + $0xa38] sm:$0xff]
    %v1903 = vld [vmem:[%s5 + $0xa40] sm:$0xff]
    %v1904 = vld [vmem:[%s5 + $0xa48] sm:$0xff]
    %v1905 = vld [vmem:[%s5 + $0xa50] sm:$0xff]
    %v1906 = vld [vmem:[%s5 + $0xa58] sm:$0xff]
    %v1907 = vld [vmem:[%s5 + $0xa60] sm:$0xff]
    %v1908 = vld [vmem:[%s5 + $0xa68] sm:$0xff]
    %v1909 = vld [vmem:[%s5 + $0xa70] sm:$0xff]
    %v1910 = vld [vmem:[%s5 + $0xa78] sm:$0xff]
    %v1911 = vld [vmem:[%s5 + $0xa80] sm:$0xff]
    %v1912 = vld [vmem:[%s5 + $0xa88] sm:$0xff]
    %v1913 = vld [vmem:[%s5 + $0xa90] sm:$0xff]
    %v1914 = vld [vmem:[%s5 + $0xa98] sm:$0xff]
    %v1915 = vld [vmem:[%s5 + $0xaa0] sm:$0xff]
    %v1916 = vld [vmem:[%s5 + $0xaa8] sm:$0xff]
    %v1917 = vld [vmem:[%s5 + $0xab0] sm:$0xff]
    %v1918 = vld [vmem:[%s5 + $0xab8] sm:$0xff]
    %v1919 = vld [vmem:[%s5 + $0xac0] sm:$0xff]
    %v1920 = vld [vmem:[%s5 + $0xac8] sm:$0xff]
    %v1921 = vld [vmem:[%s5 + $0xad0] sm:$0xff]
    %v1922 = vld [vmem:[%s5 + $0xad8] sm:$0xff]
    %v1923 = vld [vmem:[%s5 + $0xae0] sm:$0xff]
    %v1924 = vld [vmem:[%s5 + $0xae8] sm:$0xff]
    %v1925 = vld [vmem:[%s5 + $0xaf0] sm:$0xff]
    %v1926 = vld [vmem:[%s5 + $0xaf8] sm:$0xff]
    %v1927 = vld [vmem:[%s5 + $0xb00] sm:$0xff]
    %v1928 = vld [vmem:[%s5 + $0xb08] sm:$0xff]
    %v1929 = vld [vmem:[%s5 + $0xb10] sm:$0xff]
    %v1930 = vld [vmem:[%s5 + $0xb18] sm:$0xff]
    %v1931 = vld [vmem:[%s5 + $0xb20] sm:$0xff]
    %v1932 = vld [vmem:[%s5 + $0xb28] sm:$0xff]
    %v1933 = vld [vmem:[%s5 + $0xb30] sm:$0xff]
    %v1934 = vld [vmem:[%s5 + $0xb38] sm:$0xff]
    %v1935 = vld [vmem:[%s5 + $0xb40] sm:$0xff]
    %v1936 = vld [vmem:[%s5 + $0xb48] sm:$0xff]
    %v1937 = vld [vmem:[%s5 + $0xb50] sm:$0xff]
    %v1938 = vld [vmem:[%s5 + $0xb58] sm:$0xff]
    %v1939 = vld [vmem:[%s5 + $0xb60] sm:$0xff]
    %v1940 = vld [vmem:[%s5 + $0xb68] sm:$0xff]
    %v1941 = vld [vmem:[%s5 + $0xb70] sm:$0xff]
    %v1942 = vld [vmem:[%s5 + $0xb78] sm:$0xff]
    %v1943 = vld [vmem:[%s5 + $0xb80] sm:$0xff]
    %v1944 = vld [vmem:[%s5 + $0xb88] sm:$0xff]
    %v1945 = vld [vmem:[%s5 + $0xb90] sm:$0xff]
    %v1946 = vld [vmem:[%s5 + $0xb98] sm:$0xff]
    %v1947 = vld [vmem:[%s5 + $0xba0] sm:$0xff]
    %v1948 = vld [vmem:[%s5 + $0xba8] sm:$0xff]
    %v1949 = vld [vmem:[%s5 + $0xbb0] sm:$0xff]
    %v1950 = vld [vmem:[%s5 + $0xbb8] sm:$0xff]
    %v1951 = vld [vmem:[%s5 + $0xbc0] sm:$0xff]
    %v1952 = vld [vmem:[%s5 + $0xbc8] sm:$0xff]
    %v1953 = vld [vmem:[%s5 + $0xbd0] sm:$0xff]
    %v1954 = vld [vmem:[%s5 + $0xbd8] sm:$0xff]
    %v1955 = vld [vmem:[%s5 + $0xbe0] sm:$0xff]
    %v1956 = vld [vmem:[%s5 + $0xbe8] sm:$0xff]
    %v1957 = vld [vmem:[%s5 + $0xbf0] sm:$0xff]
    %v1958 = vld [vmem:[%s5 + $0xbf8] sm:$0xff]
    %v1959 = vld [vmem:[%s6] sm:$0xff]
    %v1960 = vld [vmem:[%s6 + $0x8] sm:$0xff]
    %v1961 = vld [vmem:[%s6 + $0x10] sm:$0xff]
    %v1965 = vperm.slane %v1959, 0
    %v1966 = vperm.slane %v1959, 1
    %v1967 = vperm.slane %v1959, 2
    %v1968 = vperm.slane %v1959, 3
    %v1969 = vperm.slane %v1959, 4
    %v1970 = vperm.slane %v1959, 5
    %v1971 = vperm.slane %v1959, 6
    %v1972 = vperm.slane %v1959, 7
    %v1973 = vperm.slane %v1960, 0
    %v1974 = vperm.slane %v1960, 1
    %v1975 = vperm.slane %v1960, 2
    %v1976 = vperm.slane %v1960, 3
    %v1977 = vperm.slane %v1960, 4
    %v1978 = vperm.slane %v1960, 5
    %v1979 = vperm.slane %v1960, 6
    %v1980 = vperm.slane %v1960, 7
    %v1981 = vperm.slane %v1961, 0
    %v1982 = vperm.slane %v1961, 1
    %v1983 = vperm.slane %v1961, 2
    %v1984 = vperm.slane %v1961, 3
    %v1985 = vperm.slane %v1961, 4
    %v1986 = vperm.slane %v1961, 5
    %v1987 = vperm.slane %v1961, 6
    %v1988 = vperm.slane %v1961, 7
    %v2397 = vunpack.c.l.b16 %v1575
    %v2398 = vunpack.c.h.b16 %v1575
    %v2399 = vunpack.c.l.b16 %v1576
    %v2400 = vunpack.c.h.b16 %v1576
    %v2401 = vunpack.c.l.b16 %v1577
    %v2402 = vunpack.c.h.b16 %v1577
    %v2403 = vunpack.c.l.b16 %v1578
    %v2404 = vunpack.c.h.b16 %v1578
    %v2405 = vunpack.c.l.b16 %v1579
    %v2406 = vunpack.c.h.b16 %v1579
    %v2407 = vunpack.c.l.b16 %v1580
    %v2408 = vunpack.c.h.b16 %v1580
    %v2409 = vunpack.c.l.b16 %v1581
    %v2410 = vunpack.c.h.b16 %v1581
    %v2411 = vunpack.c.l.b16 %v1582
    %v2412 = vunpack.c.h.b16 %v1582
    %v2413 = vunpack.c.l.b16 %v1583
    %v2414 = vunpack.c.h.b16 %v1583
    %v2415 = vunpack.c.l.b16 %v1584
    %v2416 = vunpack.c.h.b16 %v1584
    %v2417 = vunpack.c.l.b16 %v1585
    %v2418 = vunpack.c.h.b16 %v1585
    %v2419 = vunpack.c.l.b16 %v1586
    %v2420 = vunpack.c.h.b16 %v1586
    %v2421 = vunpack.c.l.b16 %v1587
    %v2422 = vunpack.c.h.b16 %v1587
    %v2423 = vunpack.c.l.b16 %v1588
    %v2424 = vunpack.c.h.b16 %v1588
    %v2425 = vunpack.c.l.b16 %v1589
    %v2426 = vunpack.c.h.b16 %v1589
    %v2427 = vunpack.c.l.b16 %v1590
    %v2428 = vunpack.c.h.b16 %v1590
    %v2429 = vunpack.c.l.b16 %v1591
    %v2430 = vunpack.c.h.b16 %v1591
    %v2431 = vunpack.c.l.b16 %v1592
    %v2432 = vunpack.c.h.b16 %v1592
    %v2433 = vunpack.c.l.b16 %v1593
    %v2434 = vunpack.c.h.b16 %v1593
    %v2435 = vunpack.c.l.b16 %v1594
    %v2436 = vunpack.c.h.b16 %v1594
    %v2437 = vunpack.c.l.b16 %v1595
    %v2438 = vunpack.c.h.b16 %v1595
    %v2439 = vunpack.c.l.b16 %v1596
    %v2440 = vunpack.c.h.b16 %v1596
    %v2441 = vunpack.c.l.b16 %v1597
    %v2442 = vunpack.c.h.b16 %v1597
    %v2443 = vunpack.c.l.b16 %v1598
    %v2444 = vunpack.c.h.b16 %v1598
    %v2445 = vunpack.c.l.b16 %v1599
    %v2446 = vunpack.c.h.b16 %v1599
    %v2447 = vunpack.c.l.b16 %v1600
    %v2448 = vunpack.c.h.b16 %v1600
    %v2449 = vunpack.c.l.b16 %v1601
    %v2450 = vunpack.c.h.b16 %v1601
    %v2451 = vunpack.c.l.b16 %v1602
    %v2452 = vunpack.c.h.b16 %v1602
    %v2453 = vunpack.c.l.b16 %v1603
    %v2454 = vunpack.c.h.b16 %v1603
    %v2455 = vunpack.c.l.b16 %v1604
    %v2456 = vunpack.c.h.b16 %v1604
    %v2457 = vunpack.c.l.b16 %v1605
    %v2458 = vunpack.c.h.b16 %v1605
    %v2459 = vunpack.c.l.b16 %v1606
    %v2460 = vunpack.c.h.b16 %v1606
    %v2461 = vunpack.c.l.b16 %v1607
    %v2462 = vunpack.c.h.b16 %v1607
    %v2463 = vunpack.c.l.b16 %v1608
    %v2464 = vunpack.c.h.b16 %v1608
    %v2465 = vunpack.c.l.b16 %v1609
    %v2466 = vunpack.c.h.b16 %v1609
    %v2467 = vunpack.c.l.b16 %v1610
    %v2468 = vunpack.c.h.b16 %v1610
    %v2469 = vunpack.c.l.b16 %v1611
    %v2470 = vunpack.c.h.b16 %v1611
    %v2471 = vunpack.c.l.b16 %v1612
    %v2472 = vunpack.c.h.b16 %v1612
    %v2473 = vunpack.c.l.b16 %v1613
    %v2474 = vunpack.c.h.b16 %v1613
    %v2475 = vunpack.c.l.b16 %v1614
    %v2476 = vunpack.c.h.b16 %v1614
    %v2477 = vunpack.c.l.b16 %v1615
    %v2478 = vunpack.c.h.b16 %v1615
    %v2479 = vunpack.c.l.b16 %v1616
    %v2480 = vunpack.c.h.b16 %v1616
    %v2481 = vunpack.c.l.b16 %v1617
    %v2482 = vunpack.c.h.b16 %v1617
    %v2483 = vunpack.c.l.b16 %v1618
    %v2484 = vunpack.c.h.b16 %v1618
    %v2485 = vunpack.c.l.b16 %v1619
    %v2486 = vunpack.c.h.b16 %v1619
    %v2487 = vunpack.c.l.b16 %v1620
    %v2488 = vunpack.c.h.b16 %v1620
    %v2489 = vunpack.c.l.b16 %v1621
    %v2490 = vunpack.c.h.b16 %v1621
    %v2491 = vunpack.c.l.b16 %v1622
    %v2492 = vunpack.c.h.b16 %v1622
    %v2493 = vunpack.c.l.b16 %v1623
    %v2494 = vunpack.c.h.b16 %v1623
    %v2495 = vunpack.c.l.b16 %v1624
    %v2496 = vunpack.c.h.b16 %v1624
    %v2497 = vunpack.c.l.b16 %v1625
    %v2498 = vunpack.c.h.b16 %v1625
    %v2499 = vunpack.c.l.b16 %v1626
    %v2500 = vunpack.c.h.b16 %v1626
    %v2501 = vunpack.c.l.b16 %v1627
    %v2502 = vunpack.c.h.b16 %v1627
    %v2503 = vunpack.c.l.b16 %v1628
    %v2504 = vunpack.c.h.b16 %v1628
    %v2505 = vunpack.c.l.b16 %v1629
    %v2506 = vunpack.c.h.b16 %v1629
    %v2507 = vunpack.c.l.b16 %v1630
    %v2508 = vunpack.c.h.b16 %v1630
    %v2509 = vunpack.c.l.b16 %v1631
    %v2510 = vunpack.c.h.b16 %v1631
    %v2511 = vunpack.c.l.b16 %v1632
    %v2512 = vunpack.c.h.b16 %v1632
    %v2513 = vunpack.c.l.b16 %v1633
    %v2514 = vunpack.c.h.b16 %v1633
    %v2515 = vunpack.c.l.b16 %v1634
    %v2516 = vunpack.c.h.b16 %v1634
    %v2517 = vunpack.c.l.b16 %v1635
    %v2518 = vunpack.c.h.b16 %v1635
    %v2519 = vunpack.c.l.b16 %v1636
    %v2520 = vunpack.c.h.b16 %v1636
    %v2521 = vunpack.c.l.b16 %v1637
    %v2522 = vunpack.c.h.b16 %v1637
    %v2523 = vunpack.c.l.b16 %v1638
    %v2524 = vunpack.c.h.b16 %v1638
    %v2525 = vunpack.c.l.b16 %v1639
    %v2526 = vunpack.c.h.b16 %v1639
    %v2527 = vunpack.c.l.b16 %v1640
    %v2528 = vunpack.c.h.b16 %v1640
    %v2529 = vunpack.c.l.b16 %v1641
    %v2530 = vunpack.c.h.b16 %v1641
    %v2531 = vunpack.c.l.b16 %v1642
    %v2532 = vunpack.c.h.b16 %v1642
    %v2533 = vunpack.c.l.b16 %v1643
    %v2534 = vunpack.c.h.b16 %v1643
    %v2535 = vunpack.c.l.b16 %v1644
    %v2536 = vunpack.c.h.b16 %v1644
    %v2537 = vunpack.c.l.b16 %v1645
    %v2538 = vunpack.c.h.b16 %v1645
    %v2539 = vunpack.c.l.b16 %v1646
    %v2540 = vunpack.c.h.b16 %v1646
    %v2541 = vunpack.c.l.b16 %v1647
    %v2542 = vunpack.c.h.b16 %v1647
    %v2543 = vunpack.c.l.b16 %v1648
    %v2544 = vunpack.c.h.b16 %v1648
    %v2545 = vunpack.c.l.b16 %v1649
    %v2546 = vunpack.c.h.b16 %v1649
    %v2547 = vunpack.c.l.b16 %v1650
    %v2548 = vunpack.c.h.b16 %v1650
    %v2549 = vunpack.c.l.b16 %v1651
    %v2550 = vunpack.c.h.b16 %v1651
    %v2551 = vunpack.c.l.b16 %v1652
    %v2552 = vunpack.c.h.b16 %v1652
    %v2553 = vunpack.c.l.b16 %v1653
    %v2554 = vunpack.c.h.b16 %v1653
    %v2555 = vunpack.c.l.b16 %v1654
    %v2556 = vunpack.c.h.b16 %v1654
    %v2557 = vunpack.c.l.b16 %v1655
    %v2558 = vunpack.c.h.b16 %v1655
    %v2559 = vunpack.c.l.b16 %v1656
    %v2560 = vunpack.c.h.b16 %v1656
    %v2561 = vunpack.c.l.b16 %v1657
    %v2562 = vunpack.c.h.b16 %v1657
    %v2563 = vunpack.c.l.b16 %v1658
    %v2564 = vunpack.c.h.b16 %v1658
    %v2565 = vunpack.c.l.b16 %v1659
    %v2566 = vunpack.c.h.b16 %v1659
    %v2567 = vunpack.c.l.b16 %v1660
    %v2568 = vunpack.c.h.b16 %v1660
    %v2569 = vunpack.c.l.b16 %v1661
    %v2570 = vunpack.c.h.b16 %v1661
    %v2571 = vunpack.c.l.b16 %v1662
    %v2572 = vunpack.c.h.b16 %v1662
    %v2573 = vunpack.c.l.b16 %v1663
    %v2574 = vunpack.c.h.b16 %v1663
    %v2575 = vunpack.c.l.b16 %v1664
    %v2576 = vunpack.c.h.b16 %v1664
    %v2577 = vunpack.c.l.b16 %v1665
    %v2578 = vunpack.c.h.b16 %v1665
    %v2579 = vunpack.c.l.b16 %v1666
    %v2580 = vunpack.c.h.b16 %v1666
    %v2581 = vunpack.c.l.b16 %v1667
    %v2582 = vunpack.c.h.b16 %v1667
    %v2583 = vunpack.c.l.b16 %v1668
    %v2584 = vunpack.c.h.b16 %v1668
    %v2585 = vunpack.c.l.b16 %v1669
    %v2586 = vunpack.c.h.b16 %v1669
    %v2587 = vunpack.c.l.b16 %v1670
    %v2588 = vunpack.c.h.b16 %v1670
    %v2589 = vunpack.c.l.b16 %v1671
    %v2590 = vunpack.c.h.b16 %v1671
    %v2591 = vunpack.c.l.b16 %v1672
    %v2592 = vunpack.c.h.b16 %v1672
    %v2593 = vunpack.c.l.b16 %v1673
    %v2594 = vunpack.c.h.b16 %v1673
    %v2595 = vunpack.c.l.b16 %v1674
    %v2596 = vunpack.c.h.b16 %v1674
    %v2597 = vunpack.c.l.b16 %v1675
    %v2598 = vunpack.c.h.b16 %v1675
    %v2599 = vunpack.c.l.b16 %v1676
    %v2600 = vunpack.c.h.b16 %v1676
    %v2601 = vunpack.c.l.b16 %v1677
    %v2602 = vunpack.c.h.b16 %v1677
    %v2603 = vunpack.c.l.b16 %v1678
    %v2604 = vunpack.c.h.b16 %v1678
    %v2605 = vunpack.c.l.b16 %v1679
    %v2606 = vunpack.c.h.b16 %v1679
    %v2607 = vunpack.c.l.b16 %v1680
    %v2608 = vunpack.c.h.b16 %v1680
    %v2609 = vunpack.c.l.b16 %v1681
    %v2610 = vunpack.c.h.b16 %v1681
    %v2611 = vunpack.c.l.b16 %v1682
    %v2612 = vunpack.c.h.b16 %v1682
    %v2613 = vunpack.c.l.b16 %v1683
    %v2614 = vunpack.c.h.b16 %v1683
    %v2615 = vunpack.c.l.b16 %v1684
    %v2616 = vunpack.c.h.b16 %v1684
    %v2617 = vunpack.c.l.b16 %v1685
    %v2618 = vunpack.c.h.b16 %v1685
    %v2619 = vunpack.c.l.b16 %v1686
    %v2620 = vunpack.c.h.b16 %v1686
    %v2621 = vunpack.c.l.b16 %v1687
    %v2622 = vunpack.c.h.b16 %v1687
    %v2623 = vunpack.c.l.b16 %v1688
    %v2624 = vunpack.c.h.b16 %v1688
    %v2625 = vunpack.c.l.b16 %v1689
    %v2626 = vunpack.c.h.b16 %v1689
    %v2627 = vunpack.c.l.b16 %v1690
    %v2628 = vunpack.c.h.b16 %v1690
    %v2629 = vunpack.c.l.b16 %v1691
    %v2630 = vunpack.c.h.b16 %v1691
    %v2631 = vunpack.c.l.b16 %v1692
    %v2632 = vunpack.c.h.b16 %v1692
    %v2633 = vunpack.c.l.b16 %v1693
    %v2634 = vunpack.c.h.b16 %v1693
    %v2635 = vunpack.c.l.b16 %v1694
    %v2636 = vunpack.c.h.b16 %v1694
    %v2637 = vunpack.c.l.b16 %v1695
    %v2638 = vunpack.c.h.b16 %v1695
    %v2639 = vunpack.c.l.b16 %v1696
    %v2640 = vunpack.c.h.b16 %v1696
    %v2641 = vunpack.c.l.b16 %v1697
    %v2642 = vunpack.c.h.b16 %v1697
    %v2643 = vunpack.c.l.b16 %v1698
    %v2644 = vunpack.c.h.b16 %v1698
    %v2645 = vunpack.c.l.b16 %v1699
    %v2646 = vunpack.c.h.b16 %v1699
    %v2647 = vunpack.c.l.b16 %v1700
    %v2648 = vunpack.c.h.b16 %v1700
    %v2649 = vunpack.c.l.b16 %v1701
    %v2650 = vunpack.c.h.b16 %v1701
    %v2651 = vunpack.c.l.b16 %v1702
    %v2652 = vunpack.c.h.b16 %v1702
    %v2653 = vunpack.c.l.b16 %v1703
    %v2654 = vunpack.c.h.b16 %v1703
    %v2655 = vunpack.c.l.b16 %v1704
    %v2656 = vunpack.c.h.b16 %v1704
    %v2657 = vunpack.c.l.b16 %v1705
    %v2658 = vunpack.c.h.b16 %v1705
    %v2659 = vunpack.c.l.b16 %v1706
    %v2660 = vunpack.c.h.b16 %v1706
    %v2661 = vunpack.c.l.b16 %v1707
    %v2662 = vunpack.c.h.b16 %v1707
    %v2663 = vunpack.c.l.b16 %v1708
    %v2664 = vunpack.c.h.b16 %v1708
    %v2665 = vunpack.c.l.b16 %v1709
    %v2666 = vunpack.c.h.b16 %v1709
    %v2667 = vunpack.c.l.b16 %v1710
    %v2668 = vunpack.c.h.b16 %v1710
    %v2669 = vunpack.c.l.b16 %v1711
    %v2670 = vunpack.c.h.b16 %v1711
    %v2671 = vunpack.c.l.b16 %v1712
    %v2672 = vunpack.c.h.b16 %v1712
    %v2673 = vunpack.c.l.b16 %v1713
    %v2674 = vunpack.c.h.b16 %v1713
    %v2675 = vunpack.c.l.b16 %v1714
    %v2676 = vunpack.c.h.b16 %v1714
    %v2677 = vunpack.c.l.b16 %v1715
    %v2678 = vunpack.c.h.b16 %v1715
    %v2679 = vunpack.c.l.b16 %v1716
    %v2680 = vunpack.c.h.b16 %v1716
    %v2681 = vunpack.c.l.b16 %v1717
    %v2682 = vunpack.c.h.b16 %v1717
    %v2683 = vunpack.c.l.b16 %v1718
    %v2684 = vunpack.c.h.b16 %v1718
    %v2685 = vunpack.c.l.b16 %v1719
    %v2686 = vunpack.c.h.b16 %v1719
    %v2687 = vunpack.c.l.b16 %v1720
    %v2688 = vunpack.c.h.b16 %v1720
    %v2689 = vunpack.c.l.b16 %v1721
    %v2690 = vunpack.c.h.b16 %v1721
    %v2691 = vunpack.c.l.b16 %v1722
    %v2692 = vunpack.c.h.b16 %v1722
    %v2693 = vunpack.c.l.b16 %v1723
    %v2694 = vunpack.c.h.b16 %v1723
    %v2695 = vunpack.c.l.b16 %v1724
    %v2696 = vunpack.c.h.b16 %v1724
    %v2697 = vunpack.c.l.b16 %v1725
    %v2698 = vunpack.c.h.b16 %v1725
    %v2699 = vunpack.c.l.b16 %v1726
    %v2700 = vunpack.c.h.b16 %v1726
    %v2701 = vunpack.c.l.b16 %v1727
    %v2702 = vunpack.c.h.b16 %v1727
    %v2703 = vunpack.c.l.b16 %v1728
    %v2704 = vunpack.c.h.b16 %v1728
    %v2705 = vunpack.c.l.b16 %v1729
    %v2706 = vunpack.c.h.b16 %v1729
    %v2707 = vunpack.c.l.b16 %v1730
    %v2708 = vunpack.c.h.b16 %v1730
    %v2709 = vunpack.c.l.b16 %v1731
    %v2710 = vunpack.c.h.b16 %v1731
    %v2711 = vunpack.c.l.b16 %v1732
    %v2712 = vunpack.c.h.b16 %v1732
    %v2713 = vunpack.c.l.b16 %v1733
    %v2714 = vunpack.c.h.b16 %v1733
    %v2715 = vunpack.c.l.b16 %v1734
    %v2716 = vunpack.c.h.b16 %v1734
    %v2717 = vunpack.c.l.b16 %v1735
    %v2718 = vunpack.c.h.b16 %v1735
    %v2719 = vunpack.c.l.b16 %v1736
    %v2720 = vunpack.c.h.b16 %v1736
    %v2721 = vunpack.c.l.b16 %v1737
    %v2722 = vunpack.c.h.b16 %v1737
    %v2723 = vunpack.c.l.b16 %v1738
    %v2724 = vunpack.c.h.b16 %v1738
    %v2725 = vunpack.c.l.b16 %v1739
    %v2726 = vunpack.c.h.b16 %v1739
    %v2727 = vunpack.c.l.b16 %v1740
    %v2728 = vunpack.c.h.b16 %v1740
    %v2729 = vunpack.c.l.b16 %v1741
    %v2730 = vunpack.c.h.b16 %v1741
    %v2731 = vunpack.c.l.b16 %v1742
    %v2732 = vunpack.c.h.b16 %v1742
    %v2733 = vunpack.c.l.b16 %v1743
    %v2734 = vunpack.c.h.b16 %v1743
    %v2735 = vunpack.c.l.b16 %v1744
    %v2736 = vunpack.c.h.b16 %v1744
    %v2737 = vunpack.c.l.b16 %v1745
    %v2738 = vunpack.c.h.b16 %v1745
    %v2739 = vunpack.c.l.b16 %v1746
    %v2740 = vunpack.c.h.b16 %v1746
    %v2741 = vunpack.c.l.b16 %v1747
    %v2742 = vunpack.c.h.b16 %v1747
    %v2743 = vunpack.c.l.b16 %v1748
    %v2744 = vunpack.c.h.b16 %v1748
    %v2745 = vunpack.c.l.b16 %v1749
    %v2746 = vunpack.c.h.b16 %v1749
    %v2747 = vunpack.c.l.b16 %v1750
    %v2748 = vunpack.c.h.b16 %v1750
    %v2749 = vunpack.c.l.b16 %v1751
    %v2750 = vunpack.c.h.b16 %v1751
    %v2751 = vunpack.c.l.b16 %v1752
    %v2752 = vunpack.c.h.b16 %v1752
    %v2753 = vunpack.c.l.b16 %v1753
    %v2754 = vunpack.c.h.b16 %v1753
    %v2755 = vunpack.c.l.b16 %v1754
    %v2756 = vunpack.c.h.b16 %v1754
    %v2757 = vunpack.c.l.b16 %v1755
    %v2758 = vunpack.c.h.b16 %v1755
    %v2759 = vunpack.c.l.b16 %v1756
    %v2760 = vunpack.c.h.b16 %v1756
    %v2761 = vunpack.c.l.b16 %v1757
    %v2762 = vunpack.c.h.b16 %v1757
    %v2763 = vunpack.c.l.b16 %v1758
    %v2764 = vunpack.c.h.b16 %v1758
    %v2765 = vunpack.c.l.b16 %v1759
    %v2766 = vunpack.c.h.b16 %v1759
    %v2767 = vunpack.c.l.b16 %v1760
    %v2768 = vunpack.c.h.b16 %v1760
    %v2769 = vunpack.c.l.b16 %v1761
    %v2770 = vunpack.c.h.b16 %v1761
    %v2771 = vunpack.c.l.b16 %v1762
    %v2772 = vunpack.c.h.b16 %v1762
    %v2773 = vunpack.c.l.b16 %v1763
    %v2774 = vunpack.c.h.b16 %v1763
    %v2775 = vunpack.c.l.b16 %v1764
    %v2776 = vunpack.c.h.b16 %v1764
    %v2777 = vunpack.c.l.b16 %v1765
    %v2778 = vunpack.c.h.b16 %v1765
    %v2779 = vunpack.c.l.b16 %v1766
    %v2780 = vunpack.c.h.b16 %v1766
    %v2781 = vunpack.c.l.b16 %v1767
    %v2782 = vunpack.c.h.b16 %v1767
    %v2783 = vunpack.c.l.b16 %v1768
    %v2784 = vunpack.c.h.b16 %v1768
    %v2785 = vunpack.c.l.b16 %v1769
    %v2786 = vunpack.c.h.b16 %v1769
    %v2787 = vunpack.c.l.b16 %v1770
    %v2788 = vunpack.c.h.b16 %v1770
    %v2789 = vunpack.c.l.b16 %v1771
    %v2790 = vunpack.c.h.b16 %v1771
    %v2791 = vunpack.c.l.b16 %v1772
    %v2792 = vunpack.c.h.b16 %v1772
    %v2793 = vunpack.c.l.b16 %v1773
    %v2794 = vunpack.c.h.b16 %v1773
    %v2795 = vunpack.c.l.b16 %v1774
    %v2796 = vunpack.c.h.b16 %v1774
    %v2797 = vunpack.c.l.b16 %v1775
    %v2798 = vunpack.c.h.b16 %v1775
    %v2799 = vunpack.c.l.b16 %v1776
    %v2800 = vunpack.c.h.b16 %v1776
    %v2801 = vunpack.c.l.b16 %v1777
    %v2802 = vunpack.c.h.b16 %v1777
    %v2803 = vunpack.c.l.b16 %v1778
    %v2804 = vunpack.c.h.b16 %v1778
    %v2805 = vunpack.c.l.b16 %v1779
    %v2806 = vunpack.c.h.b16 %v1779
    %v2807 = vunpack.c.l.b16 %v1780
    %v2808 = vunpack.c.h.b16 %v1780
    %v2809 = vunpack.c.l.b16 %v1781
    %v2810 = vunpack.c.h.b16 %v1781
    %v2811 = vunpack.c.l.b16 %v1782
    %v2812 = vunpack.c.h.b16 %v1782
    %v2813 = vunpack.c.l.b16 %v1783
    %v2814 = vunpack.c.h.b16 %v1783
    %v2815 = vunpack.c.l.b16 %v1784
    %v2816 = vunpack.c.h.b16 %v1784
    %v2817 = vunpack.c.l.b16 %v1785
    %v2818 = vunpack.c.h.b16 %v1785
    %v2819 = vunpack.c.l.b16 %v1786
    %v2820 = vunpack.c.h.b16 %v1786
    %v2821 = vunpack.c.l.b16 %v1787
    %v2822 = vunpack.c.h.b16 %v1787
    %v2823 = vunpack.c.l.b16 %v1788
    %v2824 = vunpack.c.h.b16 %v1788
    %v2825 = vunpack.c.l.b16 %v1789
    %v2826 = vunpack.c.h.b16 %v1789
    %v2827 = vunpack.c.l.b16 %v1790
    %v2828 = vunpack.c.h.b16 %v1790
    %v2829 = vunpack.c.l.b16 %v1791
    %v2830 = vunpack.c.h.b16 %v1791
    %v2831 = vunpack.c.l.b16 %v1792
    %v2832 = vunpack.c.h.b16 %v1792
    %v2833 = vunpack.c.l.b16 %v1793
    %v2834 = vunpack.c.h.b16 %v1793
    %v2835 = vunpack.c.l.b16 %v1794
    %v2836 = vunpack.c.h.b16 %v1794
    %v2837 = vunpack.c.l.b16 %v1795
    %v2838 = vunpack.c.h.b16 %v1795
    %v2839 = vunpack.c.l.b16 %v1796
    %v2840 = vunpack.c.h.b16 %v1796
    %v2841 = vunpack.c.l.b16 %v1797
    %v2842 = vunpack.c.h.b16 %v1797
    %v2843 = vunpack.c.l.b16 %v1798
    %v2844 = vunpack.c.h.b16 %v1798
    %v2845 = vunpack.c.l.b16 %v1799
    %v2846 = vunpack.c.h.b16 %v1799
    %v2847 = vunpack.c.l.b16 %v1800
    %v2848 = vunpack.c.h.b16 %v1800
    %v2849 = vunpack.c.l.b16 %v1801
    %v2850 = vunpack.c.h.b16 %v1801
    %v2851 = vunpack.c.l.b16 %v1802
    %v2852 = vunpack.c.h.b16 %v1802
    %v2853 = vunpack.c.l.b16 %v1803
    %v2854 = vunpack.c.h.b16 %v1803
    %v2855 = vunpack.c.l.b16 %v1804
    %v2856 = vunpack.c.h.b16 %v1804
    %v2857 = vunpack.c.l.b16 %v1805
    %v2858 = vunpack.c.h.b16 %v1805
    %v2859 = vunpack.c.l.b16 %v1806
    %v2860 = vunpack.c.h.b16 %v1806
    %v2861 = vunpack.c.l.b16 %v1807
    %v2862 = vunpack.c.h.b16 %v1807
    %v2863 = vunpack.c.l.b16 %v1808
    %v2864 = vunpack.c.h.b16 %v1808
    %v2865 = vunpack.c.l.b16 %v1809
    %v2866 = vunpack.c.h.b16 %v1809
    %v2867 = vunpack.c.l.b16 %v1810
    %v2868 = vunpack.c.h.b16 %v1810
    %v2869 = vunpack.c.l.b16 %v1811
    %v2870 = vunpack.c.h.b16 %v1811
    %v2871 = vunpack.c.l.b16 %v1812
    %v2872 = vunpack.c.h.b16 %v1812
    %v2873 = vunpack.c.l.b16 %v1813
    %v2874 = vunpack.c.h.b16 %v1813
    %v2875 = vunpack.c.l.b16 %v1814
    %v2876 = vunpack.c.h.b16 %v1814
    %v2877 = vunpack.c.l.b16 %v1815
    %v2878 = vunpack.c.h.b16 %v1815
    %v2879 = vunpack.c.l.b16 %v1816
    %v2880 = vunpack.c.h.b16 %v1816
    %v2881 = vunpack.c.l.b16 %v1817
    %v2882 = vunpack.c.h.b16 %v1817
    %v2883 = vunpack.c.l.b16 %v1818
    %v2884 = vunpack.c.h.b16 %v1818
    %v2885 = vunpack.c.l.b16 %v1819
    %v2886 = vunpack.c.h.b16 %v1819
    %v2887 = vunpack.c.l.b16 %v1820
    %v2888 = vunpack.c.h.b16 %v1820
    %v2889 = vunpack.c.l.b16 %v1821
    %v2890 = vunpack.c.h.b16 %v1821
    %v2891 = vunpack.c.l.b16 %v1822
    %v2892 = vunpack.c.h.b16 %v1822
    %v2893 = vunpack.c.l.b16 %v1823
    %v2894 = vunpack.c.h.b16 %v1823
    %v2895 = vunpack.c.l.b16 %v1824
    %v2896 = vunpack.c.h.b16 %v1824
    %v2897 = vunpack.c.l.b16 %v1825
    %v2898 = vunpack.c.h.b16 %v1825
    %v2899 = vunpack.c.l.b16 %v1826
    %v2900 = vunpack.c.h.b16 %v1826
    %v2901 = vunpack.c.l.b16 %v1827
    %v2902 = vunpack.c.h.b16 %v1827
    %v2903 = vunpack.c.l.b16 %v1828
    %v2904 = vunpack.c.h.b16 %v1828
    %v2905 = vunpack.c.l.b16 %v1829
    %v2906 = vunpack.c.h.b16 %v1829
    %v2907 = vunpack.c.l.b16 %v1830
    %v2908 = vunpack.c.h.b16 %v1830
    %v2909 = vunpack.c.l.b16 %v1831
    %v2910 = vunpack.c.h.b16 %v1831
    %v2911 = vunpack.c.l.b16 %v1832
    %v2912 = vunpack.c.h.b16 %v1832
    %v2913 = vunpack.c.l.b16 %v1833
    %v2914 = vunpack.c.h.b16 %v1833
    %v2915 = vunpack.c.l.b16 %v1834
    %v2916 = vunpack.c.h.b16 %v1834
    %v2917 = vunpack.c.l.b16 %v1835
    %v2918 = vunpack.c.h.b16 %v1835
    %v2919 = vunpack.c.l.b16 %v1836
    %v2920 = vunpack.c.h.b16 %v1836
    %v2921 = vunpack.c.l.b16 %v1837
    %v2922 = vunpack.c.h.b16 %v1837
    %v2923 = vunpack.c.l.b16 %v1838
    %v2924 = vunpack.c.h.b16 %v1838
    %v2925 = vunpack.c.l.b16 %v1839
    %v2926 = vunpack.c.h.b16 %v1839
    %v2927 = vunpack.c.l.b16 %v1840
    %v2928 = vunpack.c.h.b16 %v1840
    %v2929 = vunpack.c.l.b16 %v1841
    %v2930 = vunpack.c.h.b16 %v1841
    %v2931 = vunpack.c.l.b16 %v1842
    %v2932 = vunpack.c.h.b16 %v1842
    %v2933 = vunpack.c.l.b16 %v1843
    %v2934 = vunpack.c.h.b16 %v1843
    %v2935 = vunpack.c.l.b16 %v1844
    %v2936 = vunpack.c.h.b16 %v1844
    %v2937 = vunpack.c.l.b16 %v1845
    %v2938 = vunpack.c.h.b16 %v1845
    %v2939 = vunpack.c.l.b16 %v1846
    %v2940 = vunpack.c.h.b16 %v1846
    %v2941 = vunpack.c.l.b16 %v1847
    %v2942 = vunpack.c.h.b16 %v1847
    %v2943 = vunpack.c.l.b16 %v1848
    %v2944 = vunpack.c.h.b16 %v1848
    %v2945 = vunpack.c.l.b16 %v1849
    %v2946 = vunpack.c.h.b16 %v1849
    %v2947 = vunpack.c.l.b16 %v1850
    %v2948 = vunpack.c.h.b16 %v1850
    %v2949 = vunpack.c.l.b16 %v1851
    %v2950 = vunpack.c.h.b16 %v1851
    %v2951 = vunpack.c.l.b16 %v1852
    %v2952 = vunpack.c.h.b16 %v1852
    %v2953 = vunpack.c.l.b16 %v1853
    %v2954 = vunpack.c.h.b16 %v1853
    %v2955 = vunpack.c.l.b16 %v1854
    %v2956 = vunpack.c.h.b16 %v1854
    %v2957 = vunpack.c.l.b16 %v1855
    %v2958 = vunpack.c.h.b16 %v1855
    %v2959 = vunpack.c.l.b16 %v1856
    %v2960 = vunpack.c.h.b16 %v1856
    %v2961 = vunpack.c.l.b16 %v1857
    %v2962 = vunpack.c.h.b16 %v1857
    %v2963 = vunpack.c.l.b16 %v1858
    %v2964 = vunpack.c.h.b16 %v1858
    %v2965 = vunpack.c.l.b16 %v1859
    %v2966 = vunpack.c.h.b16 %v1859
    %v2967 = vunpack.c.l.b16 %v1860
    %v2968 = vunpack.c.h.b16 %v1860
    %v2969 = vunpack.c.l.b16 %v1861
    %v2970 = vunpack.c.h.b16 %v1861
    %v2971 = vunpack.c.l.b16 %v1862
    %v2972 = vunpack.c.h.b16 %v1862
    %v2973 = vunpack.c.l.b16 %v1863
    %v2974 = vunpack.c.h.b16 %v1863
    %v2975 = vunpack.c.l.b16 %v1864
    %v2976 = vunpack.c.h.b16 %v1864
    %v2977 = vunpack.c.l.b16 %v1865
    %v2978 = vunpack.c.h.b16 %v1865
    %v2979 = vunpack.c.l.b16 %v1866
    %v2980 = vunpack.c.h.b16 %v1866
    %v2981 = vunpack.c.l.b16 %v1867
    %v2982 = vunpack.c.h.b16 %v1867
    %v2983 = vunpack.c.l.b16 %v1868
    %v2984 = vunpack.c.h.b16 %v1868
    %v2985 = vunpack.c.l.b16 %v1869
    %v2986 = vunpack.c.h.b16 %v1869
    %v2987 = vunpack.c.l.b16 %v1870
    %v2988 = vunpack.c.h.b16 %v1870
    %v2989 = vunpack.c.l.b16 %v1871
    %v2990 = vunpack.c.h.b16 %v1871
    %v2991 = vunpack.c.l.b16 %v1872
    %v2992 = vunpack.c.h.b16 %v1872
    %v2993 = vunpack.c.l.b16 %v1873
    %v2994 = vunpack.c.h.b16 %v1873
    %v2995 = vunpack.c.l.b16 %v1874
    %v2996 = vunpack.c.h.b16 %v1874
    %v2997 = vunpack.c.l.b16 %v1875
    %v2998 = vunpack.c.h.b16 %v1875
    %v2999 = vunpack.c.l.b16 %v1876
    %v3000 = vunpack.c.h.b16 %v1876
    %v3001 = vunpack.c.l.b16 %v1877
    %v3002 = vunpack.c.h.b16 %v1877
    %v3003 = vunpack.c.l.b16 %v1878
    %v3004 = vunpack.c.h.b16 %v1878
    %v3005 = vunpack.c.l.b16 %v1879
    %v3006 = vunpack.c.h.b16 %v1879
    %v3007 = vunpack.c.l.b16 %v1880
    %v3008 = vunpack.c.h.b16 %v1880
    %v3009 = vunpack.c.l.b16 %v1881
    %v3010 = vunpack.c.h.b16 %v1881
    %v3011 = vunpack.c.l.b16 %v1882
    %v3012 = vunpack.c.h.b16 %v1882
    %v3013 = vunpack.c.l.b16 %v1883
    %v3014 = vunpack.c.h.b16 %v1883
    %v3015 = vunpack.c.l.b16 %v1884
    %v3016 = vunpack.c.h.b16 %v1884
    %v3017 = vunpack.c.l.b16 %v1885
    %v3018 = vunpack.c.h.b16 %v1885
    %v3019 = vunpack.c.l.b16 %v1886
    %v3020 = vunpack.c.h.b16 %v1886
    %v3021 = vunpack.c.l.b16 %v1887
    %v3022 = vunpack.c.h.b16 %v1887
    %v3023 = vunpack.c.l.b16 %v1888
    %v3024 = vunpack.c.h.b16 %v1888
    %v3025 = vunpack.c.l.b16 %v1889
    %v3026 = vunpack.c.h.b16 %v1889
    %v3027 = vunpack.c.l.b16 %v1890
    %v3028 = vunpack.c.h.b16 %v1890
    %v3029 = vunpack.c.l.b16 %v1891
    %v3030 = vunpack.c.h.b16 %v1891
    %v3031 = vunpack.c.l.b16 %v1892
    %v3032 = vunpack.c.h.b16 %v1892
    %v3033 = vunpack.c.l.b16 %v1893
    %v3034 = vunpack.c.h.b16 %v1893
    %v3035 = vunpack.c.l.b16 %v1894
    %v3036 = vunpack.c.h.b16 %v1894
    %v3037 = vunpack.c.l.b16 %v1895
    %v3038 = vunpack.c.h.b16 %v1895
    %v3039 = vunpack.c.l.b16 %v1896
    %v3040 = vunpack.c.h.b16 %v1896
    %v3041 = vunpack.c.l.b16 %v1897
    %v3042 = vunpack.c.h.b16 %v1897
    %v3043 = vunpack.c.l.b16 %v1898
    %v3044 = vunpack.c.h.b16 %v1898
    %v3045 = vunpack.c.l.b16 %v1899
    %v3046 = vunpack.c.h.b16 %v1899
    %v3047 = vunpack.c.l.b16 %v1900
    %v3048 = vunpack.c.h.b16 %v1900
    %v3049 = vunpack.c.l.b16 %v1901
    %v3050 = vunpack.c.h.b16 %v1901
    %v3051 = vunpack.c.l.b16 %v1902
    %v3052 = vunpack.c.h.b16 %v1902
    %v3053 = vunpack.c.l.b16 %v1903
    %v3054 = vunpack.c.h.b16 %v1903
    %v3055 = vunpack.c.l.b16 %v1904
    %v3056 = vunpack.c.h.b16 %v1904
    %v3057 = vunpack.c.l.b16 %v1905
    %v3058 = vunpack.c.h.b16 %v1905
    %v3059 = vunpack.c.l.b16 %v1906
    %v3060 = vunpack.c.h.b16 %v1906
    %v3061 = vunpack.c.l.b16 %v1907
    %v3062 = vunpack.c.h.b16 %v1907
    %v3063 = vunpack.c.l.b16 %v1908
    %v3064 = vunpack.c.h.b16 %v1908
    %v3065 = vunpack.c.l.b16 %v1909
    %v3066 = vunpack.c.h.b16 %v1909
    %v3067 = vunpack.c.l.b16 %v1910
    %v3068 = vunpack.c.h.b16 %v1910
    %v3069 = vunpack.c.l.b16 %v1911
    %v3070 = vunpack.c.h.b16 %v1911
    %v3071 = vunpack.c.l.b16 %v1912
    %v3072 = vunpack.c.h.b16 %v1912
    %v3073 = vunpack.c.l.b16 %v1913
    %v3074 = vunpack.c.h.b16 %v1913
    %v3075 = vunpack.c.l.b16 %v1914
    %v3076 = vunpack.c.h.b16 %v1914
    %v3077 = vunpack.c.l.b16 %v1915
    %v3078 = vunpack.c.h.b16 %v1915
    %v3079 = vunpack.c.l.b16 %v1916
    %v3080 = vunpack.c.h.b16 %v1916
    %v3081 = vunpack.c.l.b16 %v1917
    %v3082 = vunpack.c.h.b16 %v1917
    %v3083 = vunpack.c.l.b16 %v1918
    %v3084 = vunpack.c.h.b16 %v1918
    %v3085 = vunpack.c.l.b16 %v1919
    %v3086 = vunpack.c.h.b16 %v1919
    %v3087 = vunpack.c.l.b16 %v1920
    %v3088 = vunpack.c.h.b16 %v1920
    %v3089 = vunpack.c.l.b16 %v1921
    %v3090 = vunpack.c.h.b16 %v1921
    %v3091 = vunpack.c.l.b16 %v1922
    %v3092 = vunpack.c.h.b16 %v1922
    %v3093 = vunpack.c.l.b16 %v1923
    %v3094 = vunpack.c.h.b16 %v1923
    %v3095 = vunpack.c.l.b16 %v1924
    %v3096 = vunpack.c.h.b16 %v1924
    %v3097 = vunpack.c.l.b16 %v1925
    %v3098 = vunpack.c.h.b16 %v1925
    %v3099 = vunpack.c.l.b16 %v1926
    %v3100 = vunpack.c.h.b16 %v1926
    %v3101 = vunpack.c.l.b16 %v1927
    %v3102 = vunpack.c.h.b16 %v1927
    %v3103 = vunpack.c.l.b16 %v1928
    %v3104 = vunpack.c.h.b16 %v1928
    %v3105 = vunpack.c.l.b16 %v1929
    %v3106 = vunpack.c.h.b16 %v1929
    %v3107 = vunpack.c.l.b16 %v1930
    %v3108 = vunpack.c.h.b16 %v1930
    %v3109 = vunpack.c.l.b16 %v1931
    %v3110 = vunpack.c.h.b16 %v1931
    %v3111 = vunpack.c.l.b16 %v1932
    %v3112 = vunpack.c.h.b16 %v1932
    %v3113 = vunpack.c.l.b16 %v1933
    %v3114 = vunpack.c.h.b16 %v1933
    %v3115 = vunpack.c.l.b16 %v1934
    %v3116 = vunpack.c.h.b16 %v1934
    %v3117 = vunpack.c.l.b16 %v1935
    %v3118 = vunpack.c.h.b16 %v1935
    %v3119 = vunpack.c.l.b16 %v1936
    %v3120 = vunpack.c.h.b16 %v1936
    %v3121 = vunpack.c.l.b16 %v1937
    %v3122 = vunpack.c.h.b16 %v1937
    %v3123 = vunpack.c.l.b16 %v1938
    %v3124 = vunpack.c.h.b16 %v1938
    %v3125 = vunpack.c.l.b16 %v1939
    %v3126 = vunpack.c.h.b16 %v1939
    %v3127 = vunpack.c.l.b16 %v1940
    %v3128 = vunpack.c.h.b16 %v1940
    %v3129 = vunpack.c.l.b16 %v1941
    %v3130 = vunpack.c.h.b16 %v1941
    %v3131 = vunpack.c.l.b16 %v1942
    %v3132 = vunpack.c.h.b16 %v1942
    %v3133 = vunpack.c.l.b16 %v1943
    %v3134 = vunpack.c.h.b16 %v1943
    %v3135 = vunpack.c.l.b16 %v1944
    %v3136 = vunpack.c.h.b16 %v1944
    %v3137 = vunpack.c.l.b16 %v1945
    %v3138 = vunpack.c.h.b16 %v1945
    %v3139 = vunpack.c.l.b16 %v1946
    %v3140 = vunpack.c.h.b16 %v1946
    %v3141 = vunpack.c.l.b16 %v1947
    %v3142 = vunpack.c.h.b16 %v1947
    %v3143 = vunpack.c.l.b16 %v1948
    %v3144 = vunpack.c.h.b16 %v1948
    %v3145 = vunpack.c.l.b16 %v1949
    %v3146 = vunpack.c.h.b16 %v1949
    %v3147 = vunpack.c.l.b16 %v1950
    %v3148 = vunpack.c.h.b16 %v1950
    %v3149 = vunpack.c.l.b16 %v1951
    %v3150 = vunpack.c.h.b16 %v1951
    %v3151 = vunpack.c.l.b16 %v1952
    %v3152 = vunpack.c.h.b16 %v1952
    %v3153 = vunpack.c.l.b16 %v1953
    %v3154 = vunpack.c.h.b16 %v1953
    %v3155 = vunpack.c.l.b16 %v1954
    %v3156 = vunpack.c.h.b16 %v1954
    %v3157 = vunpack.c.l.b16 %v1955
    %v3158 = vunpack.c.h.b16 %v1955
    %v3159 = vunpack.c.l.b16 %v1956
    %v3160 = vunpack.c.h.b16 %v1956
    %v3161 = vunpack.c.l.b16 %v1957
    %v3162 = vunpack.c.h.b16 %v1957
    %v3163 = vunpack.c.l.b16 %v1958
    %v3164 = vunpack.c.h.b16 %v1958
    %v3165 = vpack.c.b16 %v2421, %v2397
    %v3166 = vpack.c.b16 %v2422, %v2398
    %v3167 = vpack.c.b16 %v2423, %v2399
    %v3168 = vpack.c.b16 %v2424, %v2400
    %v3169 = vpack.c.b16 %v2425, %v2401
    %v3170 = vpack.c.b16 %v2426, %v2402
    %v3171 = vpack.c.b16 %v2427, %v2403
    %v3172 = vpack.c.b16 %v2428, %v2404
    %v3173 = vpack.c.b16 %v2429, %v2405
    %v3174 = vpack.c.b16 %v2430, %v2406
    %v3175 = vpack.c.b16 %v2431, %v2407
    %v3176 = vpack.c.b16 %v2432, %v2408
    %v3177 = vpack.c.b16 %v2433, %v2409
    %v3178 = vpack.c.b16 %v2434, %v2410
    %v3179 = vpack.c.b16 %v2435, %v2411
    %v3180 = vpack.c.b16 %v2436, %v2412
    %v3181 = vpack.c.b16 %v2437, %v2413
    %v3182 = vpack.c.b16 %v2438, %v2414
    %v3183 = vpack.c.b16 %v2439, %v2415
    %v3184 = vpack.c.b16 %v2440, %v2416
    %v3185 = vpack.c.b16 %v2441, %v2417
    %v3186 = vpack.c.b16 %v2442, %v2418
    %v3187 = vpack.c.b16 %v2443, %v2419
    %v3188 = vpack.c.b16 %v2444, %v2420
    %v3189 = vpack.c.b16 %v2469, %v2445
    %v3190 = vpack.c.b16 %v2470, %v2446
    %v3191 = vpack.c.b16 %v2471, %v2447
    %v3192 = vpack.c.b16 %v2472, %v2448
    %v3193 = vpack.c.b16 %v2473, %v2449
    %v3194 = vpack.c.b16 %v2474, %v2450
    %v3195 = vpack.c.b16 %v2475, %v2451
    %v3196 = vpack.c.b16 %v2476, %v2452
    %v3197 = vpack.c.b16 %v2477, %v2453
    %v3198 = vpack.c.b16 %v2478, %v2454
    %v3199 = vpack.c.b16 %v2479, %v2455
    %v3200 = vpack.c.b16 %v2480, %v2456
    %v3201 = vpack.c.b16 %v2481, %v2457
    %v3202 = vpack.c.b16 %v2482, %v2458
    %v3203 = vpack.c.b16 %v2483, %v2459
    %v3204 = vpack.c.b16 %v2484, %v2460
    %v3205 = vpack.c.b16 %v2485, %v2461
    %v3206 = vpack.c.b16 %v2486, %v2462
    %v3207 = vpack.c.b16 %v2487, %v2463
    %v3208 = vpack.c.b16 %v2488, %v2464
    %v3209 = vpack.c.b16 %v2489, %v2465
    %v3210 = vpack.c.b16 %v2490, %v2466
    %v3211 = vpack.c.b16 %v2491, %v2467
    %v3212 = vpack.c.b16 %v2492, %v2468
    %v3213 = vpack.c.b16 %v2517, %v2493
    %v3214 = vpack.c.b16 %v2518, %v2494
    %v3215 = vpack.c.b16 %v2519, %v2495
    %v3216 = vpack.c.b16 %v2520, %v2496
    %v3217 = vpack.c.b16 %v2521, %v2497
    %v3218 = vpack.c.b16 %v2522, %v2498
    %v3219 = vpack.c.b16 %v2523, %v2499
    %v3220 = vpack.c.b16 %v2524, %v2500
    %v3221 = vpack.c.b16 %v2525, %v2501
    %v3222 = vpack.c.b16 %v2526, %v2502
    %v3223 = vpack.c.b16 %v2527, %v2503
    %v3224 = vpack.c.b16 %v2528, %v2504
    %v3225 = vpack.c.b16 %v2529, %v2505
    %v3226 = vpack.c.b16 %v2530, %v2506
    %v3227 = vpack.c.b16 %v2531, %v2507
    %v3228 = vpack.c.b16 %v2532, %v2508
    %v3229 = vpack.c.b16 %v2533, %v2509
    %v3230 = vpack.c.b16 %v2534, %v2510
    %v3231 = vpack.c.b16 %v2535, %v2511
    %v3232 = vpack.c.b16 %v2536, %v2512
    %v3233 = vpack.c.b16 %v2537, %v2513
    %v3234 = vpack.c.b16 %v2538, %v2514
    %v3235 = vpack.c.b16 %v2539, %v2515
    %v3236 = vpack.c.b16 %v2540, %v2516
    %v3237 = vpack.c.b16 %v2565, %v2541
    %v3238 = vpack.c.b16 %v2566, %v2542
    %v3239 = vpack.c.b16 %v2567, %v2543
    %v3240 = vpack.c.b16 %v2568, %v2544
    %v3241 = vpack.c.b16 %v2569, %v2545
    %v3242 = vpack.c.b16 %v2570, %v2546
    %v3243 = vpack.c.b16 %v2571, %v2547
    %v3244 = vpack.c.b16 %v2572, %v2548
    %v3245 = vpack.c.b16 %v2573, %v2549
    %v3246 = vpack.c.b16 %v2574, %v2550
    %v3247 = vpack.c.b16 %v2575, %v2551
    %v3248 = vpack.c.b16 %v2576, %v2552
    %v3249 = vpack.c.b16 %v2577, %v2553
    %v3250 = vpack.c.b16 %v2578, %v2554
    %v3251 = vpack.c.b16 %v2579, %v2555
    %v3252 = vpack.c.b16 %v2580, %v2556
    %v3253 = vpack.c.b16 %v2581, %v2557
    %v3254 = vpack.c.b16 %v2582, %v2558
    %v3255 = vpack.c.b16 %v2583, %v2559
    %v3256 = vpack.c.b16 %v2584, %v2560
    %v3257 = vpack.c.b16 %v2585, %v2561
    %v3258 = vpack.c.b16 %v2586, %v2562
    %v3259 = vpack.c.b16 %v2587, %v2563
    %v3260 = vpack.c.b16 %v2588, %v2564
    %v3261 = vpack.c.b16 %v2613, %v2589
    %v3262 = vpack.c.b16 %v2614, %v2590
    %v3263 = vpack.c.b16 %v2615, %v2591
    %v3264 = vpack.c.b16 %v2616, %v2592
    %v3265 = vpack.c.b16 %v2617, %v2593
    %v3266 = vpack.c.b16 %v2618, %v2594
    %v3267 = vpack.c.b16 %v2619, %v2595
    %v3268 = vpack.c.b16 %v2620, %v2596
    %v3269 = vpack.c.b16 %v2621, %v2597
    %v3270 = vpack.c.b16 %v2622, %v2598
    %v3271 = vpack.c.b16 %v2623, %v2599
    %v3272 = vpack.c.b16 %v2624, %v2600
    %v3273 = vpack.c.b16 %v2625, %v2601
    %v3274 = vpack.c.b16 %v2626, %v2602
    %v3275 = vpack.c.b16 %v2627, %v2603
    %v3276 = vpack.c.b16 %v2628, %v2604
    %v3277 = vpack.c.b16 %v2629, %v2605
    %v3278 = vpack.c.b16 %v2630, %v2606
    %v3279 = vpack.c.b16 %v2631, %v2607
    %v3280 = vpack.c.b16 %v2632, %v2608
    %v3281 = vpack.c.b16 %v2633, %v2609
    %v3282 = vpack.c.b16 %v2634, %v2610
    %v3283 = vpack.c.b16 %v2635, %v2611
    %v3284 = vpack.c.b16 %v2636, %v2612
    %v3285 = vpack.c.b16 %v2661, %v2637
    %v3286 = vpack.c.b16 %v2662, %v2638
    %v3287 = vpack.c.b16 %v2663, %v2639
    %v3288 = vpack.c.b16 %v2664, %v2640
    %v3289 = vpack.c.b16 %v2665, %v2641
    %v3290 = vpack.c.b16 %v2666, %v2642
    %v3291 = vpack.c.b16 %v2667, %v2643
    %v3292 = vpack.c.b16 %v2668, %v2644
    %v3293 = vpack.c.b16 %v2669, %v2645
    %v3294 = vpack.c.b16 %v2670, %v2646
    %v3295 = vpack.c.b16 %v2671, %v2647
    %v3296 = vpack.c.b16 %v2672, %v2648
    %v3297 = vpack.c.b16 %v2673, %v2649
    %v3298 = vpack.c.b16 %v2674, %v2650
    %v3299 = vpack.c.b16 %v2675, %v2651
    %v3300 = vpack.c.b16 %v2676, %v2652
    %v3301 = vpack.c.b16 %v2677, %v2653
    %v3302 = vpack.c.b16 %v2678, %v2654
    %v3303 = vpack.c.b16 %v2679, %v2655
    %v3304 = vpack.c.b16 %v2680, %v2656
    %v3305 = vpack.c.b16 %v2681, %v2657
    %v3306 = vpack.c.b16 %v2682, %v2658
    %v3307 = vpack.c.b16 %v2683, %v2659
    %v3308 = vpack.c.b16 %v2684, %v2660
    %v3309 = vpack.c.b16 %v2709, %v2685
    %v3310 = vpack.c.b16 %v2710, %v2686
    %v3311 = vpack.c.b16 %v2711, %v2687
    %v3312 = vpack.c.b16 %v2712, %v2688
    %v3313 = vpack.c.b16 %v2713, %v2689
    %v3314 = vpack.c.b16 %v2714, %v2690
    %v3315 = vpack.c.b16 %v2715, %v2691
    %v3316 = vpack.c.b16 %v2716, %v2692
    %v3317 = vpack.c.b16 %v2717, %v2693
    %v3318 = vpack.c.b16 %v2718, %v2694
    %v3319 = vpack.c.b16 %v2719, %v2695
    %v3320 = vpack.c.b16 %v2720, %v2696
    %v3321 = vpack.c.b16 %v2721, %v2697
    %v3322 = vpack.c.b16 %v2722, %v2698
    %v3323 = vpack.c.b16 %v2723, %v2699
    %v3324 = vpack.c.b16 %v2724, %v2700
    %v3325 = vpack.c.b16 %v2725, %v2701
    %v3326 = vpack.c.b16 %v2726, %v2702
    %v3327 = vpack.c.b16 %v2727, %v2703
    %v3328 = vpack.c.b16 %v2728, %v2704
    %v3329 = vpack.c.b16 %v2729, %v2705
    %v3330 = vpack.c.b16 %v2730, %v2706
    %v3331 = vpack.c.b16 %v2731, %v2707
    %v3332 = vpack.c.b16 %v2732, %v2708
    %v3333 = vpack.c.b16 %v2757, %v2733
    %v3334 = vpack.c.b16 %v2758, %v2734
    %v3335 = vpack.c.b16 %v2759, %v2735
    %v3336 = vpack.c.b16 %v2760, %v2736
    %v3337 = vpack.c.b16 %v2761, %v2737
    %v3338 = vpack.c.b16 %v2762, %v2738
    %v3339 = vpack.c.b16 %v2763, %v2739
    %v3340 = vpack.c.b16 %v2764, %v2740
    %v3341 = vpack.c.b16 %v2765, %v2741
    %v3342 = vpack.c.b16 %v2766, %v2742
    %v3343 = vpack.c.b16 %v2767, %v2743
    %v3344 = vpack.c.b16 %v2768, %v2744
    %v3345 = vpack.c.b16 %v2769, %v2745
    %v3346 = vpack.c.b16 %v2770, %v2746
    %v3347 = vpack.c.b16 %v2771, %v2747
    %v3348 = vpack.c.b16 %v2772, %v2748
    %v3349 = vpack.c.b16 %v2773, %v2749
    %v3350 = vpack.c.b16 %v2774, %v2750
    %v3351 = vpack.c.b16 %v2775, %v2751
    %v3352 = vpack.c.b16 %v2776, %v2752
    %v3353 = vpack.c.b16 %v2777, %v2753
    %v3354 = vpack.c.b16 %v2778, %v2754
    %v3355 = vpack.c.b16 %v2779, %v2755
    %v3356 = vpack.c.b16 %v2780, %v2756
    %v3357 = vpack.c.b16 %v2805, %v2781
    %v3358 = vpack.c.b16 %v2806, %v2782
    %v3359 = vpack.c.b16 %v2807, %v2783
    %v3360 = vpack.c.b16 %v2808, %v2784
    %v3361 = vpack.c.b16 %v2809, %v2785
    %v3362 = vpack.c.b16 %v2810, %v2786
    %v3363 = vpack.c.b16 %v2811, %v2787
    %v3364 = vpack.c.b16 %v2812, %v2788
    %v3365 = vpack.c.b16 %v2813, %v2789
    %v3366 = vpack.c.b16 %v2814, %v2790
    %v3367 = vpack.c.b16 %v2815, %v2791
    %v3368 = vpack.c.b16 %v2816, %v2792
    %v3369 = vpack.c.b16 %v2817, %v2793
    %v3370 = vpack.c.b16 %v2818, %v2794
    %v3371 = vpack.c.b16 %v2819, %v2795
    %v3372 = vpack.c.b16 %v2820, %v2796
    %v3373 = vpack.c.b16 %v2821, %v2797
    %v3374 = vpack.c.b16 %v2822, %v2798
    %v3375 = vpack.c.b16 %v2823, %v2799
    %v3376 = vpack.c.b16 %v2824, %v2800
    %v3377 = vpack.c.b16 %v2825, %v2801
    %v3378 = vpack.c.b16 %v2826, %v2802
    %v3379 = vpack.c.b16 %v2827, %v2803
    %v3380 = vpack.c.b16 %v2828, %v2804
    %v3381 = vpack.c.b16 %v2853, %v2829
    %v3382 = vpack.c.b16 %v2854, %v2830
    %v3383 = vpack.c.b16 %v2855, %v2831
    %v3384 = vpack.c.b16 %v2856, %v2832
    %v3385 = vpack.c.b16 %v2857, %v2833
    %v3386 = vpack.c.b16 %v2858, %v2834
    %v3387 = vpack.c.b16 %v2859, %v2835
    %v3388 = vpack.c.b16 %v2860, %v2836
    %v3389 = vpack.c.b16 %v2861, %v2837
    %v3390 = vpack.c.b16 %v2862, %v2838
    %v3391 = vpack.c.b16 %v2863, %v2839
    %v3392 = vpack.c.b16 %v2864, %v2840
    %v3393 = vpack.c.b16 %v2865, %v2841
    %v3394 = vpack.c.b16 %v2866, %v2842
    %v3395 = vpack.c.b16 %v2867, %v2843
    %v3396 = vpack.c.b16 %v2868, %v2844
    %v3397 = vpack.c.b16 %v2869, %v2845
    %v3398 = vpack.c.b16 %v2870, %v2846
    %v3399 = vpack.c.b16 %v2871, %v2847
    %v3400 = vpack.c.b16 %v2872, %v2848
    %v3401 = vpack.c.b16 %v2873, %v2849
    %v3402 = vpack.c.b16 %v2874, %v2850
    %v3403 = vpack.c.b16 %v2875, %v2851
    %v3404 = vpack.c.b16 %v2876, %v2852
    %v3405 = vpack.c.b16 %v2901, %v2877
    %v3406 = vpack.c.b16 %v2902, %v2878
    %v3407 = vpack.c.b16 %v2903, %v2879
    %v3408 = vpack.c.b16 %v2904, %v2880
    %v3409 = vpack.c.b16 %v2905, %v2881
    %v3410 = vpack.c.b16 %v2906, %v2882
    %v3411 = vpack.c.b16 %v2907, %v2883
    %v3412 = vpack.c.b16 %v2908, %v2884
    %v3413 = vpack.c.b16 %v2909, %v2885
    %v3414 = vpack.c.b16 %v2910, %v2886
    %v3415 = vpack.c.b16 %v2911, %v2887
    %v3416 = vpack.c.b16 %v2912, %v2888
    %v3417 = vpack.c.b16 %v2913, %v2889
    %v3418 = vpack.c.b16 %v2914, %v2890
    %v3419 = vpack.c.b16 %v2915, %v2891
    %v3420 = vpack.c.b16 %v2916, %v2892
    %v3421 = vpack.c.b16 %v2917, %v2893
    %v3422 = vpack.c.b16 %v2918, %v2894
    %v3423 = vpack.c.b16 %v2919, %v2895
    %v3424 = vpack.c.b16 %v2920, %v2896
    %v3425 = vpack.c.b16 %v2921, %v2897
    %v3426 = vpack.c.b16 %v2922, %v2898
    %v3427 = vpack.c.b16 %v2923, %v2899
    %v3428 = vpack.c.b16 %v2924, %v2900
    %v3429 = vpack.c.b16 %v2949, %v2925
    %v3430 = vpack.c.b16 %v2950, %v2926
    %v3431 = vpack.c.b16 %v2951, %v2927
    %v3432 = vpack.c.b16 %v2952, %v2928
    %v3433 = vpack.c.b16 %v2953, %v2929
    %v3434 = vpack.c.b16 %v2954, %v2930
    %v3435 = vpack.c.b16 %v2955, %v2931
    %v3436 = vpack.c.b16 %v2956, %v2932
    %v3437 = vpack.c.b16 %v2957, %v2933
    %v3438 = vpack.c.b16 %v2958, %v2934
    %v3439 = vpack.c.b16 %v2959, %v2935
    %v3440 = vpack.c.b16 %v2960, %v2936
    %v3441 = vpack.c.b16 %v2961, %v2937
    %v3442 = vpack.c.b16 %v2962, %v2938
    %v3443 = vpack.c.b16 %v2963, %v2939
    %v3444 = vpack.c.b16 %v2964, %v2940
    %v3445 = vpack.c.b16 %v2965, %v2941
    %v3446 = vpack.c.b16 %v2966, %v2942
    %v3447 = vpack.c.b16 %v2967, %v2943
    %v3448 = vpack.c.b16 %v2968, %v2944
    %v3449 = vpack.c.b16 %v2969, %v2945
    %v3450 = vpack.c.b16 %v2970, %v2946
    %v3451 = vpack.c.b16 %v2971, %v2947
    %v3452 = vpack.c.b16 %v2972, %v2948
    %v3453 = vpack.c.b16 %v2997, %v2973
    %v3454 = vpack.c.b16 %v2998, %v2974
    %v3455 = vpack.c.b16 %v2999, %v2975
    %v3456 = vpack.c.b16 %v3000, %v2976
    %v3457 = vpack.c.b16 %v3001, %v2977
    %v3458 = vpack.c.b16 %v3002, %v2978
    %v3459 = vpack.c.b16 %v3003, %v2979
    %v3460 = vpack.c.b16 %v3004, %v2980
    %v3461 = vpack.c.b16 %v3005, %v2981
    %v3462 = vpack.c.b16 %v3006, %v2982
    %v3463 = vpack.c.b16 %v3007, %v2983
    %v3464 = vpack.c.b16 %v3008, %v2984
    %v3465 = vpack.c.b16 %v3009, %v2985
    %v3466 = vpack.c.b16 %v3010, %v2986
    %v3467 = vpack.c.b16 %v3011, %v2987
    %v3468 = vpack.c.b16 %v3012, %v2988
    %v3469 = vpack.c.b16 %v3013, %v2989
    %v3470 = vpack.c.b16 %v3014, %v2990
    %v3471 = vpack.c.b16 %v3015, %v2991
    %v3472 = vpack.c.b16 %v3016, %v2992
    %v3473 = vpack.c.b16 %v3017, %v2993
    %v3474 = vpack.c.b16 %v3018, %v2994
    %v3475 = vpack.c.b16 %v3019, %v2995
    %v3476 = vpack.c.b16 %v3020, %v2996
    %v3477 = vpack.c.b16 %v3045, %v3021
    %v3478 = vpack.c.b16 %v3046, %v3022
    %v3479 = vpack.c.b16 %v3047, %v3023
    %v3480 = vpack.c.b16 %v3048, %v3024
    %v3481 = vpack.c.b16 %v3049, %v3025
    %v3482 = vpack.c.b16 %v3050, %v3026
    %v3483 = vpack.c.b16 %v3051, %v3027
    %v3484 = vpack.c.b16 %v3052, %v3028
    %v3485 = vpack.c.b16 %v3053, %v3029
    %v3486 = vpack.c.b16 %v3054, %v3030
    %v3487 = vpack.c.b16 %v3055, %v3031
    %v3488 = vpack.c.b16 %v3056, %v3032
    %v3489 = vpack.c.b16 %v3057, %v3033
    %v3490 = vpack.c.b16 %v3058, %v3034
    %v3491 = vpack.c.b16 %v3059, %v3035
    %v3492 = vpack.c.b16 %v3060, %v3036
    %v3493 = vpack.c.b16 %v3061, %v3037
    %v3494 = vpack.c.b16 %v3062, %v3038
    %v3495 = vpack.c.b16 %v3063, %v3039
    %v3496 = vpack.c.b16 %v3064, %v3040
    %v3497 = vpack.c.b16 %v3065, %v3041
    %v3498 = vpack.c.b16 %v3066, %v3042
    %v3499 = vpack.c.b16 %v3067, %v3043
    %v3500 = vpack.c.b16 %v3068, %v3044
    %v3501 = vpack.c.b16 %v3093, %v3069
    %v3502 = vpack.c.b16 %v3094, %v3070
    %v3503 = vpack.c.b16 %v3095, %v3071
    %v3504 = vpack.c.b16 %v3096, %v3072
    %v3505 = vpack.c.b16 %v3097, %v3073
    %v3506 = vpack.c.b16 %v3098, %v3074
    %v3507 = vpack.c.b16 %v3099, %v3075
    %v3508 = vpack.c.b16 %v3100, %v3076
    %v3509 = vpack.c.b16 %v3101, %v3077
    %v3510 = vpack.c.b16 %v3102, %v3078
    %v3511 = vpack.c.b16 %v3103, %v3079
    %v3512 = vpack.c.b16 %v3104, %v3080
    %v3513 = vpack.c.b16 %v3105, %v3081
    %v3514 = vpack.c.b16 %v3106, %v3082
    %v3515 = vpack.c.b16 %v3107, %v3083
    %v3516 = vpack.c.b16 %v3108, %v3084
    %v3517 = vpack.c.b16 %v3109, %v3085
    %v3518 = vpack.c.b16 %v3110, %v3086
    %v3519 = vpack.c.b16 %v3111, %v3087
    %v3520 = vpack.c.b16 %v3112, %v3088
    %v3521 = vpack.c.b16 %v3113, %v3089
    %v3522 = vpack.c.b16 %v3114, %v3090
    %v3523 = vpack.c.b16 %v3115, %v3091
    %v3524 = vpack.c.b16 %v3116, %v3092
    %v3525 = vpack.c.b16 %v3141, %v3117
    %v3526 = vpack.c.b16 %v3142, %v3118
    %v3527 = vpack.c.b16 %v3143, %v3119
    %v3528 = vpack.c.b16 %v3144, %v3120
    %v3529 = vpack.c.b16 %v3145, %v3121
    %v3530 = vpack.c.b16 %v3146, %v3122
    %v3531 = vpack.c.b16 %v3147, %v3123
    %v3532 = vpack.c.b16 %v3148, %v3124
    %v3533 = vpack.c.b16 %v3149, %v3125
    %v3534 = vpack.c.b16 %v3150, %v3126
    %v3535 = vpack.c.b16 %v3151, %v3127
    %v3536 = vpack.c.b16 %v3152, %v3128
    %v3537 = vpack.c.b16 %v3153, %v3129
    %v3538 = vpack.c.b16 %v3154, %v3130
    %v3539 = vpack.c.b16 %v3155, %v3131
    %v3540 = vpack.c.b16 %v3156, %v3132
    %v3541 = vpack.c.b16 %v3157, %v3133
    %v3542 = vpack.c.b16 %v3158, %v3134
    %v3543 = vpack.c.b16 %v3159, %v3135
    %v3544 = vpack.c.b16 %v3160, %v3136
    %v3545 = vpack.c.b16 %v3161, %v3137
    %v3546 = vpack.c.b16 %v3162, %v3138
    %v3547 = vpack.c.b16 %v3163, %v3139
    %v3548 = vpack.c.b16 %v3164, %v3140
    %3933 = vmatpush.bf16.msra.mxu0 %v3333
    %3934 = vmatpush.bf16.msra.mxu0 %v3309
    %3935 = vmatpush.bf16.msra.mxu0 %v3285
    %3936 = vmatpush.bf16.msra.mxu0 %v3261
    %3937 = vmatpush.bf16.msra.mxu0 %v3237
    %3938 = vmatpush.bf16.msra.mxu0 %v3213
    %3939 = vmatpush.bf16.msra.mxu0 %v3189
    %3940 = vmatpush.bf16.msra.mxu0 %v3165
    %3941 = vmatmul.bf16.gmra.mxu0 %v1573
    %v3942 = vpop.f32.mrf.mxu0
    %v3943 = vadd.f32 %v1965, %v3942
    %v3944 = vpop.f32.mrf.mxu0
    %3945 = vdwg.mxu0
    %3946 = vmatpush.bf16.msra.mxu0 %v3525
    %3947 = vmatpush.bf16.msra.mxu0 %v3501
    %3948 = vmatpush.bf16.msra.mxu0 %v3477
    %3949 = vmatpush.bf16.msra.mxu0 %v3453
    %3950 = vmatpush.bf16.msra.mxu0 %v3429
    %3951 = vmatpush.bf16.msra.mxu0 %v3405
    %3952 = vmatpush.bf16.msra.mxu0 %v3381
    %3953 = vmatpush.bf16.msra.mxu0 %v3357
    %3954 = vmatmul.bf16.gmra.mxu0 %v1574
    %v3955 = vpop.f32.mrf.mxu0
    %v3956 = vadd.f32 %v3943, %v3955
    %v3957 = vpop.f32.mrf.mxu0
    %3958 = vdwg.mxu0
    %3959 = vmatpush.bf16.msra.mxu0 %v3334
    %3960 = vmatpush.bf16.msra.mxu0 %v3310
    %3961 = vmatpush.bf16.msra.mxu0 %v3286
    %3962 = vmatpush.bf16.msra.mxu0 %v3262
    %3963 = vmatpush.bf16.msra.mxu0 %v3238
    %3964 = vmatpush.bf16.msra.mxu0 %v3214
    %3965 = vmatpush.bf16.msra.mxu0 %v3190
    %3966 = vmatpush.bf16.msra.mxu0 %v3166
    %3967 = vmatmul.bf16.gmra.mxu0 %v1573
    %v3968 = vpop.f32.mrf.mxu0
    %v3969 = vadd.f32 %v1966, %v3968
    %v3970 = vpop.f32.mrf.mxu0
    %3971 = vdwg.mxu0
    %3972 = vmatpush.bf16.msra.mxu0 %v3526
    %3973 = vmatpush.bf16.msra.mxu0 %v3502
    %3974 = vmatpush.bf16.msra.mxu0 %v3478
    %3975 = vmatpush.bf16.msra.mxu0 %v3454
    %3976 = vmatpush.bf16.msra.mxu0 %v3430
    %3977 = vmatpush.bf16.msra.mxu0 %v3406
    %3978 = vmatpush.bf16.msra.mxu0 %v3382
    %3979 = vmatpush.bf16.msra.mxu0 %v3358
    %3980 = vmatmul.bf16.gmra.mxu0 %v1574
    %v3981 = vpop.f32.mrf.mxu0
    %v3982 = vadd.f32 %v3969, %v3981
    %v3983 = vpop.f32.mrf.mxu0
    %3984 = vdwg.mxu0
    %3985 = vmatpush.bf16.msra.mxu0 %v3335
    %3986 = vmatpush.bf16.msra.mxu0 %v3311
    %3987 = vmatpush.bf16.msra.mxu0 %v3287
    %3988 = vmatpush.bf16.msra.mxu0 %v3263
    %3989 = vmatpush.bf16.msra.mxu0 %v3239
    %3990 = vmatpush.bf16.msra.mxu0 %v3215
    %3991 = vmatpush.bf16.msra.mxu0 %v3191
    %3992 = vmatpush.bf16.msra.mxu0 %v3167
    %3993 = vmatmul.bf16.gmra.mxu0 %v1573
    %v3994 = vpop.f32.mrf.mxu0
    %v3995 = vadd.f32 %v1967, %v3994
    %v3996 = vpop.f32.mrf.mxu0
    %3997 = vdwg.mxu0
    %3998 = vmatpush.bf16.msra.mxu0 %v3527
    %3999 = vmatpush.bf16.msra.mxu0 %v3503
    %4000 = vmatpush.bf16.msra.mxu0 %v3479
    %4001 = vmatpush.bf16.msra.mxu0 %v3455
    %4002 = vmatpush.bf16.msra.mxu0 %v3431
    %4003 = vmatpush.bf16.msra.mxu0 %v3407
    %4004 = vmatpush.bf16.msra.mxu0 %v3383
    %4005 = vmatpush.bf16.msra.mxu0 %v3359
    %4006 = vmatmul.bf16.gmra.mxu0 %v1574
    %v4007 = vpop.f32.mrf.mxu0
    %v4008 = vadd.f32 %v3995, %v4007
    %v4009 = vpop.f32.mrf.mxu0
    %4010 = vdwg.mxu0
    %4011 = vmatpush.bf16.msra.mxu0 %v3336
    %4012 = vmatpush.bf16.msra.mxu0 %v3312
    %4013 = vmatpush.bf16.msra.mxu0 %v3288
    %4014 = vmatpush.bf16.msra.mxu0 %v3264
    %4015 = vmatpush.bf16.msra.mxu0 %v3240
    %4016 = vmatpush.bf16.msra.mxu0 %v3216
    %4017 = vmatpush.bf16.msra.mxu0 %v3192
    %4018 = vmatpush.bf16.msra.mxu0 %v3168
    %4019 = vmatmul.bf16.gmra.mxu0 %v1573
    %v4020 = vpop.f32.mrf.mxu0
    %v4021 = vadd.f32 %v1968, %v4020
    %v4022 = vpop.f32.mrf.mxu0
    %4023 = vdwg.mxu0
    %4024 = vmatpush.bf16.msra.mxu0 %v3528
    %4025 = vmatpush.bf16.msra.mxu0 %v3504
    %4026 = vmatpush.bf16.msra.mxu0 %v3480
    %4027 = vmatpush.bf16.msra.mxu0 %v3456
    %4028 = vmatpush.bf16.msra.mxu0 %v3432
    %4029 = vmatpush.bf16.msra.mxu0 %v3408
    %4030 = vmatpush.bf16.msra.mxu0 %v3384
    %4031 = vmatpush.bf16.msra.mxu0 %v3360
    %4032 = vmatmul.bf16.gmra.mxu0 %v1574
    %v4033 = vpop.f32.mrf.mxu0
    %v4034 = vadd.f32 %v4021, %v4033
    %v4035 = vpop.f32.mrf.mxu0
    %4036 = vdwg.mxu0
    %4037 = vmatpush.bf16.msra.mxu0 %v3337
    %4038 = vmatpush.bf16.msra.mxu0 %v3313
    %4039 = vmatpush.bf16.msra.mxu0 %v3289
    %4040 = vmatpush.bf16.msra.mxu0 %v3265
    %4041 = vmatpush.bf16.msra.mxu0 %v3241
    %4042 = vmatpush.bf16.msra.mxu0 %v3217
    %4043 = vmatpush.bf16.msra.mxu0 %v3193
    %4044 = vmatpush.bf16.msra.mxu0 %v3169
    %4045 = vmatmul.bf16.gmra.mxu0 %v1573
    %v4046 = vpop.f32.mrf.mxu0
    %v4047 = vadd.f32 %v1969, %v4046
    %v4048 = vpop.f32.mrf.mxu0
    %4049 = vdwg.mxu0
    %4050 = vmatpush.bf16.msra.mxu0 %v3529
    %4051 = vmatpush.bf16.msra.mxu0 %v3505
    %4052 = vmatpush.bf16.msra.mxu0 %v3481
    %4053 = vmatpush.bf16.msra.mxu0 %v3457
    %4054 = vmatpush.bf16.msra.mxu0 %v3433
    %4055 = vmatpush.bf16.msra.mxu0 %v3409
    %4056 = vmatpush.bf16.msra.mxu0 %v3385
    %4057 = vmatpush.bf16.msra.mxu0 %v3361
    %4058 = vmatmul.bf16.gmra.mxu0 %v1574
    %v4059 = vpop.f32.mrf.mxu0
    %v4060 = vadd.f32 %v4047, %v4059
    %v4061 = vpop.f32.mrf.mxu0
    %4062 = vdwg.mxu0
    %4063 = vmatpush.bf16.msra.mxu0 %v3338
    %4064 = vmatpush.bf16.msra.mxu0 %v3314
    %4065 = vmatpush.bf16.msra.mxu0 %v3290
    %4066 = vmatpush.bf16.msra.mxu0 %v3266
    %4067 = vmatpush.bf16.msra.mxu0 %v3242
    %4068 = vmatpush.bf16.msra.mxu0 %v3218
    %4069 = vmatpush.bf16.msra.mxu0 %v3194
    %4070 = vmatpush.bf16.msra.mxu0 %v3170
    %4071 = vmatmul.bf16.gmra.mxu0 %v1573
    %v4072 = vpop.f32.mrf.mxu0
    %v4073 = vadd.f32 %v1970, %v4072
    %v4074 = vpop.f32.mrf.mxu0
    %4075 = vdwg.mxu0
    %4076 = vmatpush.bf16.msra.mxu0 %v3530
    %4077 = vmatpush.bf16.msra.mxu0 %v3506
    %4078 = vmatpush.bf16.msra.mxu0 %v3482
    %4079 = vmatpush.bf16.msra.mxu0 %v3458
    %4080 = vmatpush.bf16.msra.mxu0 %v3434
    %4081 = vmatpush.bf16.msra.mxu0 %v3410
    %4082 = vmatpush.bf16.msra.mxu0 %v3386
    %4083 = vmatpush.bf16.msra.mxu0 %v3362
    %4084 = vmatmul.bf16.gmra.mxu0 %v1574
    %v4085 = vpop.f32.mrf.mxu0
    %v4086 = vadd.f32 %v4073, %v4085
    %v4087 = vpop.f32.mrf.mxu0
    %4088 = vdwg.mxu0
    %4089 = vmatpush.bf16.msra.mxu0 %v3339
    %4090 = vmatpush.bf16.msra.mxu0 %v3315
    %4091 = vmatpush.bf16.msra.mxu0 %v3291
    %4092 = vmatpush.bf16.msra.mxu0 %v3267
    %4093 = vmatpush.bf16.msra.mxu0 %v3243
    %4094 = vmatpush.bf16.msra.mxu0 %v3219
    %4095 = vmatpush.bf16.msra.mxu0 %v3195
    %4096 = vmatpush.bf16.msra.mxu0 %v3171
    %4097 = vmatmul.bf16.gmra.mxu0 %v1573
    %v4098 = vpop.f32.mrf.mxu0
    %v4099 = vadd.f32 %v1971, %v4098
    %v4100 = vpop.f32.mrf.mxu0
    %4101 = vdwg.mxu0
    %4102 = vmatpush.bf16.msra.mxu0 %v3531
    %4103 = vmatpush.bf16.msra.mxu0 %v3507
    %4104 = vmatpush.bf16.msra.mxu0 %v3483
    %4105 = vmatpush.bf16.msra.mxu0 %v3459
    %4106 = vmatpush.bf16.msra.mxu0 %v3435
    %4107 = vmatpush.bf16.msra.mxu0 %v3411
    %4108 = vmatpush.bf16.msra.mxu0 %v3387
    %4109 = vmatpush.bf16.msra.mxu0 %v3363
    %4110 = vmatmul.bf16.gmra.mxu0 %v1574
    %v4111 = vpop.f32.mrf.mxu0
    %v4112 = vadd.f32 %v4099, %v4111
    %v4113 = vpop.f32.mrf.mxu0
    %4114 = vdwg.mxu0
    %4115 = vmatpush.bf16.msra.mxu0 %v3340
    %4116 = vmatpush.bf16.msra.mxu0 %v3316
    %4117 = vmatpush.bf16.msra.mxu0 %v3292
    %4118 = vmatpush.bf16.msra.mxu0 %v3268
    %4119 = vmatpush.bf16.msra.mxu0 %v3244
    %4120 = vmatpush.bf16.msra.mxu0 %v3220
    %4121 = vmatpush.bf16.msra.mxu0 %v3196
    %4122 = vmatpush.bf16.msra.mxu0 %v3172
    %4123 = vmatmul.bf16.gmra.mxu0 %v1573
    %v4124 = vpop.f32.mrf.mxu0
    %v4125 = vadd.f32 %v1972, %v4124
    %v4126 = vpop.f32.mrf.mxu0
    %4127 = vdwg.mxu0
    %4128 = vmatpush.bf16.msra.mxu0 %v3532
    %4129 = vmatpush.bf16.msra.mxu0 %v3508
    %4130 = vmatpush.bf16.msra.mxu0 %v3484
    %4131 = vmatpush.bf16.msra.mxu0 %v3460
    %4132 = vmatpush.bf16.msra.mxu0 %v3436
    %4133 = vmatpush.bf16.msra.mxu0 %v3412
    %4134 = vmatpush.bf16.msra.mxu0 %v3388
    %4135 = vmatpush.bf16.msra.mxu0 %v3364
    %4136 = vmatmul.bf16.gmra.mxu0 %v1574
    %v4137 = vpop.f32.mrf.mxu0
    %v4138 = vadd.f32 %v4125, %v4137
    %v4139 = vpop.f32.mrf.mxu0
    %4140 = vdwg.mxu0
    %4141 = vmatpush.bf16.msra.mxu0 %v3341
    %4142 = vmatpush.bf16.msra.mxu0 %v3317
    %4143 = vmatpush.bf16.msra.mxu0 %v3293
    %4144 = vmatpush.bf16.msra.mxu0 %v3269
    %4145 = vmatpush.bf16.msra.mxu0 %v3245
    %4146 = vmatpush.bf16.msra.mxu0 %v3221
    %4147 = vmatpush.bf16.msra.mxu0 %v3197
    %4148 = vmatpush.bf16.msra.mxu0 %v3173
    %4149 = vmatmul.bf16.gmra.mxu0 %v1573
    %v4150 = vpop.f32.mrf.mxu0
    %v4151 = vadd.f32 %v1973, %v4150
    %v4152 = vpop.f32.mrf.mxu0
    %4153 = vdwg.mxu0
    %4154 = vmatpush.bf16.msra.mxu0 %v3533
    %4155 = vmatpush.bf16.msra.mxu0 %v3509
    %4156 = vmatpush.bf16.msra.mxu0 %v3485
    %4157 = vmatpush.bf16.msra.mxu0 %v3461
    %4158 = vmatpush.bf16.msra.mxu0 %v3437
    %4159 = vmatpush.bf16.msra.mxu0 %v3413
    %4160 = vmatpush.bf16.msra.mxu0 %v3389
    %4161 = vmatpush.bf16.msra.mxu0 %v3365
    %4162 = vmatmul.bf16.gmra.mxu0 %v1574
    %v4163 = vpop.f32.mrf.mxu0
    %v4164 = vadd.f32 %v4151, %v4163
    %v4165 = vpop.f32.mrf.mxu0
    %4166 = vdwg.mxu0
    %4167 = vmatpush.bf16.msra.mxu0 %v3342
    %4168 = vmatpush.bf16.msra.mxu0 %v3318
    %4169 = vmatpush.bf16.msra.mxu0 %v3294
    %4170 = vmatpush.bf16.msra.mxu0 %v3270
    %4171 = vmatpush.bf16.msra.mxu0 %v3246
    %4172 = vmatpush.bf16.msra.mxu0 %v3222
    %4173 = vmatpush.bf16.msra.mxu0 %v3198
    %4174 = vmatpush.bf16.msra.mxu0 %v3174
    %4175 = vmatmul.bf16.gmra.mxu0 %v1573
    %v4176 = vpop.f32.mrf.mxu0
    %v4177 = vadd.f32 %v1974, %v4176
    %v4178 = vpop.f32.mrf.mxu0
    %4179 = vdwg.mxu0
    %4180 = vmatpush.bf16.msra.mxu0 %v3534
    %4181 = vmatpush.bf16.msra.mxu0 %v3510
    %4182 = vmatpush.bf16.msra.mxu0 %v3486
    %4183 = vmatpush.bf16.msra.mxu0 %v3462
    %4184 = vmatpush.bf16.msra.mxu0 %v3438
    %4185 = vmatpush.bf16.msra.mxu0 %v3414
    %4186 = vmatpush.bf16.msra.mxu0 %v3390
    %4187 = vmatpush.bf16.msra.mxu0 %v3366
    %4188 = vmatmul.bf16.gmra.mxu0 %v1574
    %v4189 = vpop.f32.mrf.mxu0
    %v4190 = vadd.f32 %v4177, %v4189
    %v4191 = vpop.f32.mrf.mxu0
    %4192 = vdwg.mxu0
    %4193 = vmatpush.bf16.msra.mxu0 %v3343
    %4194 = vmatpush.bf16.msra.mxu0 %v3319
    %4195 = vmatpush.bf16.msra.mxu0 %v3295
    %4196 = vmatpush.bf16.msra.mxu0 %v3271
    %4197 = vmatpush.bf16.msra.mxu0 %v3247
    %4198 = vmatpush.bf16.msra.mxu0 %v3223
    %4199 = vmatpush.bf16.msra.mxu0 %v3199
    %4200 = vmatpush.bf16.msra.mxu0 %v3175
    %4201 = vmatmul.bf16.gmra.mxu0 %v1573
    %v4202 = vpop.f32.mrf.mxu0
    %v4203 = vadd.f32 %v1975, %v4202
    %v4204 = vpop.f32.mrf.mxu0
    %4205 = vdwg.mxu0
    %4206 = vmatpush.bf16.msra.mxu0 %v3535
    %4207 = vmatpush.bf16.msra.mxu0 %v3511
    %4208 = vmatpush.bf16.msra.mxu0 %v3487
    %4209 = vmatpush.bf16.msra.mxu0 %v3463
    %4210 = vmatpush.bf16.msra.mxu0 %v3439
    %4211 = vmatpush.bf16.msra.mxu0 %v3415
    %4212 = vmatpush.bf16.msra.mxu0 %v3391
    %4213 = vmatpush.bf16.msra.mxu0 %v3367
    %4214 = vmatmul.bf16.gmra.mxu0 %v1574
    %v4215 = vpop.f32.mrf.mxu0
    %v4216 = vadd.f32 %v4203, %v4215
    %v4217 = vpop.f32.mrf.mxu0
    %4218 = vdwg.mxu0
    %4219 = vmatpush.bf16.msra.mxu0 %v3344
    %4220 = vmatpush.bf16.msra.mxu0 %v3320
    %4221 = vmatpush.bf16.msra.mxu0 %v3296
    %4222 = vmatpush.bf16.msra.mxu0 %v3272
    %4223 = vmatpush.bf16.msra.mxu0 %v3248
    %4224 = vmatpush.bf16.msra.mxu0 %v3224
    %4225 = vmatpush.bf16.msra.mxu0 %v3200
    %4226 = vmatpush.bf16.msra.mxu0 %v3176
    %4227 = vmatmul.bf16.gmra.mxu0 %v1573
    %v4228 = vpop.f32.mrf.mxu0
    %v4229 = vadd.f32 %v1976, %v4228
    %v4230 = vpop.f32.mrf.mxu0
    %4231 = vdwg.mxu0
    %4232 = vmatpush.bf16.msra.mxu0 %v3536
    %4233 = vmatpush.bf16.msra.mxu0 %v3512
    %4234 = vmatpush.bf16.msra.mxu0 %v3488
    %4235 = vmatpush.bf16.msra.mxu0 %v3464
    %4236 = vmatpush.bf16.msra.mxu0 %v3440
    %4237 = vmatpush.bf16.msra.mxu0 %v3416
    %4238 = vmatpush.bf16.msra.mxu0 %v3392
    %4239 = vmatpush.bf16.msra.mxu0 %v3368
    %4240 = vmatmul.bf16.gmra.mxu0 %v1574
    %v4241 = vpop.f32.mrf.mxu0
    %v4242 = vadd.f32 %v4229, %v4241
    %v4243 = vpop.f32.mrf.mxu0
    %4244 = vdwg.mxu0
    %4245 = vmatpush.bf16.msra.mxu0 %v3345
    %4246 = vmatpush.bf16.msra.mxu0 %v3321
    %4247 = vmatpush.bf16.msra.mxu0 %v3297
    %4248 = vmatpush.bf16.msra.mxu0 %v3273
    %4249 = vmatpush.bf16.msra.mxu0 %v3249
    %4250 = vmatpush.bf16.msra.mxu0 %v3225
    %4251 = vmatpush.bf16.msra.mxu0 %v3201
    %4252 = vmatpush.bf16.msra.mxu0 %v3177
    %4253 = vmatmul.bf16.gmra.mxu0 %v1573
    %v4254 = vpop.f32.mrf.mxu0
    %v4255 = vadd.f32 %v1977, %v4254
    %v4256 = vpop.f32.mrf.mxu0
    %4257 = vdwg.mxu0
    %4258 = vmatpush.bf16.msra.mxu0 %v3537
    %4259 = vmatpush.bf16.msra.mxu0 %v3513
    %4260 = vmatpush.bf16.msra.mxu0 %v3489
    %4261 = vmatpush.bf16.msra.mxu0 %v3465
    %4262 = vmatpush.bf16.msra.mxu0 %v3441
    %4263 = vmatpush.bf16.msra.mxu0 %v3417
    %4264 = vmatpush.bf16.msra.mxu0 %v3393
    %4265 = vmatpush.bf16.msra.mxu0 %v3369
    %4266 = vmatmul.bf16.gmra.mxu0 %v1574
    %v4267 = vpop.f32.mrf.mxu0
    %v4268 = vadd.f32 %v4255, %v4267
    %v4269 = vpop.f32.mrf.mxu0
    %4270 = vdwg.mxu0
    %4271 = vmatpush.bf16.msra.mxu0 %v3346
    %4272 = vmatpush.bf16.msra.mxu0 %v3322
    %4273 = vmatpush.bf16.msra.mxu0 %v3298
    %4274 = vmatpush.bf16.msra.mxu0 %v3274
    %4275 = vmatpush.bf16.msra.mxu0 %v3250
    %4276 = vmatpush.bf16.msra.mxu0 %v3226
    %4277 = vmatpush.bf16.msra.mxu0 %v3202
    %4278 = vmatpush.bf16.msra.mxu0 %v3178
    %4279 = vmatmul.bf16.gmra.mxu0 %v1573
    %v4280 = vpop.f32.mrf.mxu0
    %v4281 = vadd.f32 %v1978, %v4280
    %v4282 = vpop.f32.mrf.mxu0
    %4283 = vdwg.mxu0
    %4284 = vmatpush.bf16.msra.mxu0 %v3538
    %4285 = vmatpush.bf16.msra.mxu0 %v3514
    %4286 = vmatpush.bf16.msra.mxu0 %v3490
    %4287 = vmatpush.bf16.msra.mxu0 %v3466
    %4288 = vmatpush.bf16.msra.mxu0 %v3442
    %4289 = vmatpush.bf16.msra.mxu0 %v3418
    %4290 = vmatpush.bf16.msra.mxu0 %v3394
    %4291 = vmatpush.bf16.msra.mxu0 %v3370
    %4292 = vmatmul.bf16.gmra.mxu0 %v1574
    %v4293 = vpop.f32.mrf.mxu0
    %v4294 = vadd.f32 %v4281, %v4293
    %v4295 = vpop.f32.mrf.mxu0
    %4296 = vdwg.mxu0
    %4297 = vmatpush.bf16.msra.mxu0 %v3347
    %4298 = vmatpush.bf16.msra.mxu0 %v3323
    %4299 = vmatpush.bf16.msra.mxu0 %v3299
    %4300 = vmatpush.bf16.msra.mxu0 %v3275
    %4301 = vmatpush.bf16.msra.mxu0 %v3251
    %4302 = vmatpush.bf16.msra.mxu0 %v3227
    %4303 = vmatpush.bf16.msra.mxu0 %v3203
    %4304 = vmatpush.bf16.msra.mxu0 %v3179
    %4305 = vmatmul.bf16.gmra.mxu0 %v1573
    %v4306 = vpop.f32.mrf.mxu0
    %v4307 = vadd.f32 %v1979, %v4306
    %v4308 = vpop.f32.mrf.mxu0
    %4309 = vdwg.mxu0
    %4310 = vmatpush.bf16.msra.mxu0 %v3539
    %4311 = vmatpush.bf16.msra.mxu0 %v3515
    %4312 = vmatpush.bf16.msra.mxu0 %v3491
    %4313 = vmatpush.bf16.msra.mxu0 %v3467
    %4314 = vmatpush.bf16.msra.mxu0 %v3443
    %4315 = vmatpush.bf16.msra.mxu0 %v3419
    %4316 = vmatpush.bf16.msra.mxu0 %v3395
    %4317 = vmatpush.bf16.msra.mxu0 %v3371
    %4318 = vmatmul.bf16.gmra.mxu0 %v1574
    %v4319 = vpop.f32.mrf.mxu0
    %v4320 = vadd.f32 %v4307, %v4319
    %v4321 = vpop.f32.mrf.mxu0
    %4322 = vdwg.mxu0
    %4323 = vmatpush.bf16.msra.mxu0 %v3348
    %4324 = vmatpush.bf16.msra.mxu0 %v3324
    %4325 = vmatpush.bf16.msra.mxu0 %v3300
    %4326 = vmatpush.bf16.msra.mxu0 %v3276
    %4327 = vmatpush.bf16.msra.mxu0 %v3252
    %4328 = vmatpush.bf16.msra.mxu0 %v3228
    %4329 = vmatpush.bf16.msra.mxu0 %v3204
    %4330 = vmatpush.bf16.msra.mxu0 %v3180
    %4331 = vmatmul.bf16.gmra.mxu0 %v1573
    %v4332 = vpop.f32.mrf.mxu0
    %v4333 = vadd.f32 %v1980, %v4332
    %v4334 = vpop.f32.mrf.mxu0
    %4335 = vdwg.mxu0
    %4336 = vmatpush.bf16.msra.mxu0 %v3540
    %4337 = vmatpush.bf16.msra.mxu0 %v3516
    %4338 = vmatpush.bf16.msra.mxu0 %v3492
    %4339 = vmatpush.bf16.msra.mxu0 %v3468
    %4340 = vmatpush.bf16.msra.mxu0 %v3444
    %4341 = vmatpush.bf16.msra.mxu0 %v3420
    %4342 = vmatpush.bf16.msra.mxu0 %v3396
    %4343 = vmatpush.bf16.msra.mxu0 %v3372
    %4344 = vmatmul.bf16.gmra.mxu0 %v1574
    %v4345 = vpop.f32.mrf.mxu0
    %v4346 = vadd.f32 %v4333, %v4345
    %v4347 = vpop.f32.mrf.mxu0
    %4348 = vdwg.mxu0
    %4349 = vmatpush.bf16.msra.mxu0 %v3349
    %4350 = vmatpush.bf16.msra.mxu0 %v3325
    %4351 = vmatpush.bf16.msra.mxu0 %v3301
    %4352 = vmatpush.bf16.msra.mxu0 %v3277
    %4353 = vmatpush.bf16.msra.mxu0 %v3253
    %4354 = vmatpush.bf16.msra.mxu0 %v3229
    %4355 = vmatpush.bf16.msra.mxu0 %v3205
    %4356 = vmatpush.bf16.msra.mxu0 %v3181
    %4357 = vmatmul.bf16.gmra.mxu0 %v1573
    %v4358 = vpop.f32.mrf.mxu0
    %v4359 = vadd.f32 %v1981, %v4358
    %v4360 = vpop.f32.mrf.mxu0
    %4361 = vdwg.mxu0
    %4362 = vmatpush.bf16.msra.mxu0 %v3541
    %4363 = vmatpush.bf16.msra.mxu0 %v3517
    %4364 = vmatpush.bf16.msra.mxu0 %v3493
    %4365 = vmatpush.bf16.msra.mxu0 %v3469
    %4366 = vmatpush.bf16.msra.mxu0 %v3445
    %4367 = vmatpush.bf16.msra.mxu0 %v3421
    %4368 = vmatpush.bf16.msra.mxu0 %v3397
    %4369 = vmatpush.bf16.msra.mxu0 %v3373
    %4370 = vmatmul.bf16.gmra.mxu0 %v1574
    %v4371 = vpop.f32.mrf.mxu0
    %v4372 = vadd.f32 %v4359, %v4371
    %v4373 = vpop.f32.mrf.mxu0
    %4374 = vdwg.mxu0
    %4375 = vmatpush.bf16.msra.mxu0 %v3350
    %4376 = vmatpush.bf16.msra.mxu0 %v3326
    %4377 = vmatpush.bf16.msra.mxu0 %v3302
    %4378 = vmatpush.bf16.msra.mxu0 %v3278
    %4379 = vmatpush.bf16.msra.mxu0 %v3254
    %4380 = vmatpush.bf16.msra.mxu0 %v3230
    %4381 = vmatpush.bf16.msra.mxu0 %v3206
    %4382 = vmatpush.bf16.msra.mxu0 %v3182
    %4383 = vmatmul.bf16.gmra.mxu0 %v1573
    %v4384 = vpop.f32.mrf.mxu0
    %v4385 = vadd.f32 %v1982, %v4384
    %v4386 = vpop.f32.mrf.mxu0
    %4387 = vdwg.mxu0
    %4388 = vmatpush.bf16.msra.mxu0 %v3542
    %4389 = vmatpush.bf16.msra.mxu0 %v3518
    %4390 = vmatpush.bf16.msra.mxu0 %v3494
    %4391 = vmatpush.bf16.msra.mxu0 %v3470
    %4392 = vmatpush.bf16.msra.mxu0 %v3446
    %4393 = vmatpush.bf16.msra.mxu0 %v3422
    %4394 = vmatpush.bf16.msra.mxu0 %v3398
    %4395 = vmatpush.bf16.msra.mxu0 %v3374
    %4396 = vmatmul.bf16.gmra.mxu0 %v1574
    %v4397 = vpop.f32.mrf.mxu0
    %v4398 = vadd.f32 %v4385, %v4397
    %v4399 = vpop.f32.mrf.mxu0
    %4400 = vdwg.mxu0
    %4401 = vmatpush.bf16.msra.mxu0 %v3351
    %4402 = vmatpush.bf16.msra.mxu0 %v3327
    %4403 = vmatpush.bf16.msra.mxu0 %v3303
    %4404 = vmatpush.bf16.msra.mxu0 %v3279
    %4405 = vmatpush.bf16.msra.mxu0 %v3255
    %4406 = vmatpush.bf16.msra.mxu0 %v3231
    %4407 = vmatpush.bf16.msra.mxu0 %v3207
    %4408 = vmatpush.bf16.msra.mxu0 %v3183
    %4409 = vmatmul.bf16.gmra.mxu0 %v1573
    %v4410 = vpop.f32.mrf.mxu0
    %v4411 = vadd.f32 %v1983, %v4410
    %v4412 = vpop.f32.mrf.mxu0
    %4413 = vdwg.mxu0
    %4414 = vmatpush.bf16.msra.mxu0 %v3543
    %4415 = vmatpush.bf16.msra.mxu0 %v3519
    %4416 = vmatpush.bf16.msra.mxu0 %v3495
    %4417 = vmatpush.bf16.msra.mxu0 %v3471
    %4418 = vmatpush.bf16.msra.mxu0 %v3447
    %4419 = vmatpush.bf16.msra.mxu0 %v3423
    %4420 = vmatpush.bf16.msra.mxu0 %v3399
    %4421 = vmatpush.bf16.msra.mxu0 %v3375
    %4422 = vmatmul.bf16.gmra.mxu0 %v1574
    %v4423 = vpop.f32.mrf.mxu0
    %v4424 = vadd.f32 %v4411, %v4423
    %v4425 = vpop.f32.mrf.mxu0
    %4426 = vdwg.mxu0
    %4427 = vmatpush.bf16.msra.mxu0 %v3352
    %4428 = vmatpush.bf16.msra.mxu0 %v3328
    %4429 = vmatpush.bf16.msra.mxu0 %v3304
    %4430 = vmatpush.bf16.msra.mxu0 %v3280
    %4431 = vmatpush.bf16.msra.mxu0 %v3256
    %4432 = vmatpush.bf16.msra.mxu0 %v3232
    %4433 = vmatpush.bf16.msra.mxu0 %v3208
    %4434 = vmatpush.bf16.msra.mxu0 %v3184
    %4435 = vmatmul.bf16.gmra.mxu0 %v1573
    %v4436 = vpop.f32.mrf.mxu0
    %v4437 = vadd.f32 %v1984, %v4436
    %v4438 = vpop.f32.mrf.mxu0
    %4439 = vdwg.mxu0
    %4440 = vmatpush.bf16.msra.mxu0 %v3544
    %4441 = vmatpush.bf16.msra.mxu0 %v3520
    %4442 = vmatpush.bf16.msra.mxu0 %v3496
    %4443 = vmatpush.bf16.msra.mxu0 %v3472
    %4444 = vmatpush.bf16.msra.mxu0 %v3448
    %4445 = vmatpush.bf16.msra.mxu0 %v3424
    %4446 = vmatpush.bf16.msra.mxu0 %v3400
    %4447 = vmatpush.bf16.msra.mxu0 %v3376
    %4448 = vmatmul.bf16.gmra.mxu0 %v1574
    %v4449 = vpop.f32.mrf.mxu0
    %v4450 = vadd.f32 %v4437, %v4449
    %v4451 = vpop.f32.mrf.mxu0
    %4452 = vdwg.mxu0
    %4453 = vmatpush.bf16.msra.mxu0 %v3353
    %4454 = vmatpush.bf16.msra.mxu0 %v3329
    %4455 = vmatpush.bf16.msra.mxu0 %v3305
    %4456 = vmatpush.bf16.msra.mxu0 %v3281
    %4457 = vmatpush.bf16.msra.mxu0 %v3257
    %4458 = vmatpush.bf16.msra.mxu0 %v3233
    %4459 = vmatpush.bf16.msra.mxu0 %v3209
    %4460 = vmatpush.bf16.msra.mxu0 %v3185
    %4461 = vmatmul.bf16.gmra.mxu0 %v1573
    %v4462 = vpop.f32.mrf.mxu0
    %v4463 = vadd.f32 %v1985, %v4462
    %v4464 = vpop.f32.mrf.mxu0
    %4465 = vdwg.mxu0
    %4466 = vmatpush.bf16.msra.mxu0 %v3545
    %4467 = vmatpush.bf16.msra.mxu0 %v3521
    %4468 = vmatpush.bf16.msra.mxu0 %v3497
    %4469 = vmatpush.bf16.msra.mxu0 %v3473
    %4470 = vmatpush.bf16.msra.mxu0 %v3449
    %4471 = vmatpush.bf16.msra.mxu0 %v3425
    %4472 = vmatpush.bf16.msra.mxu0 %v3401
    %4473 = vmatpush.bf16.msra.mxu0 %v3377
    %4474 = vmatmul.bf16.gmra.mxu0 %v1574
    %v4475 = vpop.f32.mrf.mxu0
    %v4476 = vadd.f32 %v4463, %v4475
    %v4477 = vpop.f32.mrf.mxu0
    %4478 = vdwg.mxu0
    %4479 = vmatpush.bf16.msra.mxu0 %v3354
    %4480 = vmatpush.bf16.msra.mxu0 %v3330
    %4481 = vmatpush.bf16.msra.mxu0 %v3306
    %4482 = vmatpush.bf16.msra.mxu0 %v3282
    %4483 = vmatpush.bf16.msra.mxu0 %v3258
    %4484 = vmatpush.bf16.msra.mxu0 %v3234
    %4485 = vmatpush.bf16.msra.mxu0 %v3210
    %4486 = vmatpush.bf16.msra.mxu0 %v3186
    %4487 = vmatmul.bf16.gmra.mxu0 %v1573
    %v4488 = vpop.f32.mrf.mxu0
    %v4489 = vadd.f32 %v1986, %v4488
    %v4490 = vpop.f32.mrf.mxu0
    %4491 = vdwg.mxu0
    %4492 = vmatpush.bf16.msra.mxu0 %v3546
    %4493 = vmatpush.bf16.msra.mxu0 %v3522
    %4494 = vmatpush.bf16.msra.mxu0 %v3498
    %4495 = vmatpush.bf16.msra.mxu0 %v3474
    %4496 = vmatpush.bf16.msra.mxu0 %v3450
    %4497 = vmatpush.bf16.msra.mxu0 %v3426
    %4498 = vmatpush.bf16.msra.mxu0 %v3402
    %4499 = vmatpush.bf16.msra.mxu0 %v3378
    %4500 = vmatmul.bf16.gmra.mxu0 %v1574
    %v4501 = vpop.f32.mrf.mxu0
    %v4502 = vadd.f32 %v4489, %v4501
    %v4503 = vpop.f32.mrf.mxu0
    %4504 = vdwg.mxu0
    %4505 = vmatpush.bf16.msra.mxu0 %v3355
    %4506 = vmatpush.bf16.msra.mxu0 %v3331
    %4507 = vmatpush.bf16.msra.mxu0 %v3307
    %4508 = vmatpush.bf16.msra.mxu0 %v3283
    %4509 = vmatpush.bf16.msra.mxu0 %v3259
    %4510 = vmatpush.bf16.msra.mxu0 %v3235
    %4511 = vmatpush.bf16.msra.mxu0 %v3211
    %4512 = vmatpush.bf16.msra.mxu0 %v3187
    %4513 = vmatmul.bf16.gmra.mxu0 %v1573
    %v4514 = vpop.f32.mrf.mxu0
    %v4515 = vadd.f32 %v1987, %v4514
    %v4516 = vpop.f32.mrf.mxu0
    %4517 = vdwg.mxu0
    %4518 = vmatpush.bf16.msra.mxu0 %v3547
    %4519 = vmatpush.bf16.msra.mxu0 %v3523
    %4520 = vmatpush.bf16.msra.mxu0 %v3499
    %4521 = vmatpush.bf16.msra.mxu0 %v3475
    %4522 = vmatpush.bf16.msra.mxu0 %v3451
    %4523 = vmatpush.bf16.msra.mxu0 %v3427
    %4524 = vmatpush.bf16.msra.mxu0 %v3403
    %4525 = vmatpush.bf16.msra.mxu0 %v3379
    %4526 = vmatmul.bf16.gmra.mxu0 %v1574
    %v4527 = vpop.f32.mrf.mxu0
    %v4528 = vadd.f32 %v4515, %v4527
    %v4529 = vpop.f32.mrf.mxu0
    %4530 = vdwg.mxu0
    %4531 = vmatpush.bf16.msra.mxu0 %v3356
    %4532 = vmatpush.bf16.msra.mxu0 %v3332
    %4533 = vmatpush.bf16.msra.mxu0 %v3308
    %4534 = vmatpush.bf16.msra.mxu0 %v3284
    %4535 = vmatpush.bf16.msra.mxu0 %v3260
    %4536 = vmatpush.bf16.msra.mxu0 %v3236
    %4537 = vmatpush.bf16.msra.mxu0 %v3212
    %4538 = vmatpush.bf16.msra.mxu0 %v3188
    %4539 = vmatmul.bf16.gmra.mxu0 %v1573
    %v4540 = vpop.f32.mrf.mxu0
    %v4541 = vadd.f32 %v1988, %v4540
    %v4542 = vpop.f32.mrf.mxu0
    %4543 = vdwg.mxu0
    %4544 = vmatpush.bf16.msra.mxu0 %v3548
    %4545 = vmatpush.bf16.msra.mxu0 %v3524
    %4546 = vmatpush.bf16.msra.mxu0 %v3500
    %4547 = vmatpush.bf16.msra.mxu0 %v3476
    %4548 = vmatpush.bf16.msra.mxu0 %v3452
    %4549 = vmatpush.bf16.msra.mxu0 %v3428
    %4550 = vmatpush.bf16.msra.mxu0 %v3404
    %4551 = vmatpush.bf16.msra.mxu0 %v3380
    %4552 = vmatmul.bf16.gmra.mxu0 %v1574
    %v4553 = vpop.f32.mrf.mxu0
    %v4554 = vadd.f32 %v4541, %v4553
    %v4555 = vpop.f32.mrf.mxu0
    %4556 = vdwg.mxu0
    %v4581 = vrot.slane %v3982, 6
    %v4582 = vrot.slane %v4008, 4
    %v4583 = vrot.slane %v4034, 2
    %v4584 = vrot.slane %v4086, 6
    %v4585 = vrot.slane %v4112, 4
    %v4586 = vrot.slane %v4138, 2
    %v4587 = vrot.slane %v4190, 6
    %v4588 = vrot.slane %v4216, 4
    %v4589 = vrot.slane %v4242, 2
    %v4590 = vrot.slane %v4294, 6
    %v4591 = vrot.slane %v4320, 4
    %v4592 = vrot.slane %v4346, 2
    %v4593 = vrot.slane %v4398, 6
    %v4594 = vrot.slane %v4424, 4
    %v4595 = vrot.slane %v4450, 2
    %v4596 = vrot.slane %v4502, 6
    %v4597 = vrot.slane %v4528, 4
    %v4598 = vrot.slane %v4554, 2
    %vm4599 = vcmask 1041408
    %v4600 = vsel %vm4599, %v3956, %v4581
    %vm4601 = vcmask 1045508
    %v4602 = vsel %vm4601, %v4582, %v4583
    %vm4603 = vcmask 1043456
    %v4604 = vsel %vm4603, %v4600, %v4602
    %v4605 = vsel %vm4599, %v4060, %v4584
    %v4606 = vsel %vm4601, %v4585, %v4586
    %v4607 = vsel %vm4603, %v4605, %v4606
    %v4608 = vsel %vm4599, %v4164, %v4587
    %v4609 = vsel %vm4601, %v4588, %v4589
    %v4610 = vsel %vm4603, %v4608, %v4609
    %v4611 = vsel %vm4599, %v4268, %v4590
    %v4612 = vsel %vm4601, %v4591, %v4592
    %v4613 = vsel %vm4603, %v4611, %v4612
    %v4614 = vsel %vm4599, %v4372, %v4593
    %v4615 = vsel %vm4601, %v4594, %v4595
    %v4616 = vsel %vm4603, %v4614, %v4615
    %v4617 = vsel %vm4599, %v4476, %v4596
    %v4618 = vsel %vm4601, %v4597, %v4598
    %v4619 = vsel %vm4603, %v4617, %v4618
    %4626 = vst [vmem:[#allocation2] sm:$0xff] %v4604
    %4627 = vst [vmem:[#allocation2 + $0x8] sm:$0xff] %v4607
    %4628 = vst [vmem:[#allocation2 + $0x10] sm:$0xff] %v4610
    %4629 = vst [vmem:[#allocation2 + $0x18] sm:$0xff] %v4613
    %4630 = vst [vmem:[#allocation2 + $0x20] sm:$0xff] %v4616
    %4631 = vst [vmem:[#allocation2 + $0x28] sm:$0xff] %v4619
    %v4636 = vrot.slane %v1562, 6
    %v4637 = vrot.slane %v1545, 4
    %v4638 = vrot.slane %v1564, 2
    %v4639 = vsel %vm4599, %v1519, %v4636
    %v4640 = vsel %vm4601, %v4637, %v4638
    %v4641 = vsel %vm4603, %v4639, %v4640
    %4643 = vst [vmem:[%s9] sm:$0xff] %v4641
    // Predicated region
    $region34: #{vae_forward.7} parent=1 // pred_check
      _
    $region35: #{vae_forward.7} parent=1 // pred_check_branch
      %4645 = sbr.rel (0) target = $region37
    $region36: #{vae_forward.7} parent=1 // pred_region
      %4647 = vsyncadd [#allocation3], 0
      %s4649 = sshll.u32 [#allocation2], 4
      %s4650 = int_to_ptr.vmem [resolvable:$true] %s4649
      %s4651 = sshll.u32 %s8, 4
      %s4652 = int_to_ptr.hbm [resolvable:$true] %s4651
      %4654 = dma.vmem_to_hbm [thread:$0]  %s4650, 768, %s4652, [#allocation3]
    $region37: #{vae_forward.7} parent=1 // pred_fallthru
      _
    // Predicated region
    $region38: #{vae_forward.7} parent=1 // pred_check
      _
    $region39: #{vae_forward.7} parent=1 // pred_check_branch
      %4656 = sbr.rel (0) target = $region41
    $region40: #{vae_forward.7} parent=1 // pred_region
      _
    $region41: #{vae_forward.7} parent=1 // pred_fallthru
      _
    // Predicated region
    $region42: #{vae_forward.7} parent=1 // pred_check
      _
    $region43: #{vae_forward.7} parent=1 // pred_check_branch
      %4658 = sbr.rel (0) target = $region45
    $region44: #{vae_forward.7} parent=1 // pred_region
      %4660 = dma.done [#allocation3], 768
    $region45: #{vae_forward.7} parent=1 // pred_fallthru
      _
    // Predicated region
    $region46: #{vae_forward.7} parent=1 // pred_check
      _
    $region47: #{vae_forward.7} parent=1 // pred_check_branch
      %4662 = sbr.rel (0) target = $region49
    $region48: #{vae_forward.7} parent=1 // pred_region
      _
    $region49: #{vae_forward.7} parent=1 // pred_fallthru
      _
    %4663 = vsyncpa [#allocation3], 1

</llo_original>
